<compile_context>
chip_gen: v5e
topology: v5e:2x2
jax: 0.10.0
libtpu: 0.0.40
codegen_flags: <defaults>
</compile_context>

<pallas_src>
import math

import jax
import jax.numpy as jnp
from jax import lax
from jax.experimental import pallas as pl
from jax.experimental.pallas import tpu as pltpu


# ----------------------------------------------------------------------------
# helpers
# ----------------------------------------------------------------------------

def _largest_divisor_multiple(dim, cap, quantum):
    """Largest multiple of `quantum` that divides `dim` and is <= cap (0 if none)."""
    t = (cap // quantum) * quantum
    while t >= quantum:
        if dim % t == 0:
            return t
        t -= quantum
    return 0


def _vmem_limit(num_bytes):
    """Explicit VMEM budget: actual footprint + headroom, capped for v7x (64 MiB)."""
    return int(max(16 << 20, min(int(num_bytes * 1.5) + (4 << 20), 64 << 20)))


# ----------------------------------------------------------------------------
# fused 1x1-conv GEMM:  out = act(A @ B + bias [+ residual])
# ----------------------------------------------------------------------------

def _gemm_kernel_single_k(apply_relu, has_residual):
    """Single K step: no scratch accumulator, write straight to the output tile."""
    def kernel(a_ref, b_ref, bias_ref, *rest):
        if has_residual:
            res_ref, o_ref = rest
        else:
            (o_ref,) = rest
        y = jnp.dot(a_ref[...], b_ref[...], preferred_element_type=jnp.float32)
        y = y + bias_ref[...]
        if has_residual:
            y = y + res_ref[...].astype(jnp.float32)
        if apply_relu:
            y = jnp.maximum(y, 0.0)
        o_ref[...] = y.astype(o_ref.dtype)
    return kernel


def _gemm_kernel_multi_k(apply_relu, has_residual):
    """K-tiled reduction with an f32 VMEM accumulator; k==0 writes (no zero+add)."""
    def kernel(a_ref, b_ref, bias_ref, *rest):
        if has_residual:
            res_ref, o_ref, acc_ref = rest
        else:
            o_ref, acc_ref = rest
        k = pl.program_id(2)
        d = jnp.dot(a_ref[...], b_ref[...], preferred_element_type=jnp.float32)

        @pl.when(k == 0)
        def _():
            acc_ref[...] = d

        @pl.when(k > 0)
        def _():
            acc_ref[...] += d

        @pl.when(k == pl.num_programs(2) - 1)
        def _():
            y = acc_ref[...] + bias_ref[...]
            if has_residual:
                y = y + res_ref[...].astype(jnp.float32)
            if apply_relu:
                y = jnp.maximum(y, 0.0)
            o_ref[...] = y.astype(o_ref.dtype)
    return kernel


def fused_gemm_bn_act(a, b, bias, residual=None, *, apply_relu=True,
                      out_dtype=jnp.bfloat16, tm=512, tn=512, max_tk=2048,
                      min_parallel_tiles=2):
    """out = act(a @ b + bias [+ residual]) on the MXU with f32 accumulation.

    a:        (M, K)  bf16 activations
    b:        (K, C)  bf16 weights with the BN scale folded in
    bias:     (1, C)  f32 folded BN bias
    residual: (M, C)  optional bf16, added before the activation (Bottleneck skip).
    """
    M, K = a.shape
    _, C = b.shape

    # output-channel tile: full when small / not lane-aligned, else a 128-multiple divisor
    if C <= tn or C % 128 != 0:
        tn = C
    else:
        tn = _largest_divisor_multiple(C, tn, 128) or C
    n_co = max(C // tn, 1)

    # M tile; guarantee >= min_parallel_tiles tiles on the parallel axes
    # so both v7x TensorCores (and megacore) get work.
    tm = min(tm, M)
    while (pl.cdiv(M, tm) * n_co < min_parallel_tiles
           and tm > 128 and (tm // 2) % 8 == 0):
        tm //= 2

    # K tile: largest 128-multiple divisor <= max_tk; zero-pad only as a last resort.
    if K <= max_tk:
        tk = K
    else:
        tk = _largest_divisor_multiple(K, max_tk, 128) or max_tk
    k_pad = pl.cdiv(K, tk) * tk
    if k_pad != K:
        a = jnp.pad(a, ((0, 0), (0, k_pad - K)))
        b = jnp.pad(b, ((0, k_pad - K), (0, 0)))
    n_k = k_pad // tk

    operands = [a, b, bias]
    has_res = residual is not None

    # explicit VMEM budget (double-buffered streams + accumulator)
    def dbl(shape, dt):
        return 2 * int(jnp.dtype(dt).itemsize) * math.prod(shape)
    vmem = (dbl((tm, tk), a.dtype) + dbl((tk, tn), b.dtype)
            + dbl((1, tn), bias.dtype) + dbl((tm, tn), out_dtype))
    if has_res:
        vmem += dbl((tm, tn), residual.dtype)
    if n_k > 1:
        vmem += 4 * tm * tn

    flops = 2 * M * k_pad * C
    bytes_accessed = int(a.size * a.dtype.itemsize + b.size * b.dtype.itemsize
                         + bias.size * bias.dtype.itemsize
                         + M * C * jnp.dtype(out_dtype).itemsize
                         + (residual.size * residual.dtype.itemsize if has_res else 0))

    if n_k == 1:
        grid = (pl.cdiv(M, tm), n_co)
        in_specs = [
            pl.BlockSpec((tm, tk), lambda i, j: (i, 0)),
            pl.BlockSpec((tk, tn), lambda i, j: (0, j)),
            pl.BlockSpec((1, tn), lambda i, j: (0, j)),
        ]
        if has_res:
            in_specs.append(pl.BlockSpec((tm, tn), lambda i, j: (i, j)))
            operands.append(residual)
        out_spec = pl.BlockSpec((tm, tn), lambda i, j: (i, j))
        kernel = _gemm_kernel_single_k(apply_relu, has_res)
        scratch = []
        dims = ("parallel", "parallel")
    else:
        grid = (pl.cdiv(M, tm), n_co, n_k)
        in_specs = [
            pl.BlockSpec((tm, tk), lambda i, j, k: (i, k),
                         pipeline_mode=pl.Buffered(3)),
            pl.BlockSpec((tk, tn), lambda i, j, k: (k, j),
                         pipeline_mode=pl.Buffered(3)),
            pl.BlockSpec((1, tn), lambda i, j, k: (0, j)),
        ]
        if has_res:
            in_specs.append(pl.BlockSpec((tm, tn), lambda i, j, k: (i, j)))
            operands.append(residual)
        out_spec = pl.BlockSpec((tm, tn), lambda i, j, k: (i, j))
        kernel = _gemm_kernel_multi_k(apply_relu, has_res)
        scratch = [pltpu.VMEM((tm, tn), jnp.float32)]
        dims = ("parallel", "parallel", "arbitrary")

    return pl.pallas_call(
        kernel,
        out_shape=jax.ShapeDtypeStruct((M, C), out_dtype),
        grid_spec=pltpu.PrefetchScalarGridSpec(
            num_scalar_prefetch=0, grid=grid, in_specs=in_specs,
            out_specs=out_spec, scratch_shapes=scratch),
        compiler_params=pltpu.CompilerParams(
            dimension_semantics=dims, vmem_limit_bytes=_vmem_limit(vmem)),
        cost_estimate=pl.CostEstimate(flops=int(flops), transcendentals=0,
                                      bytes_accessed=bytes_accessed),
    )(*operands)


# ----------------------------------------------------------------------------
# fused 3x3 conv (pad=1, stride s) + BN + ReLU  — no materialized im2col
# ----------------------------------------------------------------------------

def _conv3x3_bn_relu_kernel(Ho, Wo, stride, Cin):
    def kernel(x_ref, w_ref, bias_ref, o_ref):
        # x_ref: (Hp, Wp, Cin) padded bf16 slab for one image
        # w_ref: (9, Cin, tco) bf16 taps-major, BN scale folded
        # bias_ref: (1, tco) f32 ; o_ref: (Ho*Wo, tco)
        acc = None
        for dh in range(3):
            for dw in range(3):
                if stride == 1:
                    a = x_ref[dh:dh + Ho, dw:dw + Wo, :]
                else:
                    # TODO(synk): strided tap reads are correct but less tuned.
                    a = x_ref[pl.ds(dh, Ho, stride=stride),
                              pl.ds(dw, Wo, stride=stride), :]
                a = a.reshape(Ho * Wo, Cin)
                d = jnp.dot(a, w_ref[dh * 3 + dw],
                            preferred_element_type=jnp.float32)
                acc = d if acc is None else acc + d
        y = jnp.maximum(acc + bias_ref[...], 0.0)
        o_ref[...] = y.astype(o_ref.dtype)
    return kernel


def fused_conv3x3_bn_relu(x_nhwc, w9, bias, *, stride=1, out_dtype=jnp.bfloat16,
                          tco_max=256):
    """3x3 conv (pad=1) + folded BN + ReLU as 9 shifted 1x1 GEMMs accumulated
    in-kernel.  Returns (N*Ho*Wo, Cout) with rows ordered (n, ho, wo)."""
    N, H, W, Cin = x_nhwc.shape
    Cout = w9.shape[-1]
    Ho = (H + 2 - 3) // stride + 1
    Wo = (W + 2 - 3) // stride + 1

    # single cheap spatial zero-pad (~1.07x one pass) instead of a 9x im2col tensor
    x_pad = jnp.pad(x_nhwc, ((0, 0), (1, 1), (1, 1), (0, 0)))
    Hp, Wp = H + 2, W + 2

    if Cout <= tco_max or Cout % 128 != 0:
        tco = Cout
    else:
        tco = _largest_divisor_multiple(Cout, tco_max, 128) or Cout
    n_co = Cout // tco

    vmem = (2 * Hp * Wp * Cin * 2 + 2 * 9 * Cin * tco * 2 + 2 * tco * 4
            + 2 * Ho * Wo * tco * int(jnp.dtype(out_dtype).itemsize)
            + 4 * Ho * Wo * tco)
    flops = 2 * N * Ho * Wo * 9 * Cin * Cout
    bytes_accessed = int(x_pad.size * 2 + w9.size * 2 + bias.size * 4
                         + N * Ho * Wo * Cout * int(jnp.dtype(out_dtype).itemsize))

    out = pl.pallas_call(
        _conv3x3_bn_relu_kernel(Ho, Wo, stride, Cin),
        out_shape=jax.ShapeDtypeStruct((N * Ho * Wo, Cout), out_dtype),
        grid_spec=pltpu.PrefetchScalarGridSpec(
            num_scalar_prefetch=0,
            grid=(N, n_co),
            in_specs=[
                pl.BlockSpec((None, Hp, Wp, Cin), lambda n, j: (n, 0, 0, 0)),
                pl.BlockSpec((9, Cin, tco), lambda n, j: (0, 0, j)),
                pl.BlockSpec((1, tco), lambda n, j: (0, j)),
            ],
            out_specs=pl.BlockSpec((Ho * Wo, tco), lambda n, j: (n, j)),
        ),
        compiler_params=pltpu.CompilerParams(
            dimension_semantics=("parallel", "parallel"),
            vmem_limit_bytes=_vmem_limit(vmem)),
        cost_estimate=pl.CostEstimate(flops=int(flops), transcendentals=0,
                                      bytes_accessed=bytes_accessed),
    )(x_pad, w9, bias)
    return out, Ho, Wo


# ----------------------------------------------------------------------------
# BN folding (inference mode) + Bottleneck forward
# ----------------------------------------------------------------------------

def _bn_fold(gamma, beta, mean, var, eps):
    inv_std = gamma / jnp.sqrt(var + eps)
    bias = (beta - mean * inv_std).reshape(1, -1).astype(jnp.float32)
    return inv_std, bias


def _fold_1x1(weight, gamma, beta, mean, var, eps):
    """(Cout, Cin, 1, 1) conv weight -> (Cin, Cout) bf16 with BN scale folded."""
    inv_std, bias = _bn_fold(gamma, beta, mean, var, eps)
    c_out, c_in = weight.shape[0], weight.shape[1]
    w2d = weight.reshape(c_out, c_in).T.astype(jnp.float32) * inv_std[None, :]
    return w2d.astype(jnp.bfloat16), bias


def _fold_3x3(weight, gamma, beta, mean, var, eps):
    """(Cout, Cin, 3, 3) conv weight -> (9, Cin, Cout) taps-major bf16, BN folded."""
    inv_std, bias = _bn_fold(gamma, beta, mean, var, eps)
    w = weight.astype(jnp.float32) * inv_std[:, None, None, None]
    w9 = jnp.transpose(w, (2, 3, 1, 0)).reshape(9, weight.shape[1], weight.shape[0])
    return w9.astype(jnp.bfloat16), bias


def bottleneck_forward(x, params, *, stride=1, eps=1e-5):
    """ResNet Bottleneck forward (inference-mode BN), NCHW f32 in / NCHW f32 out."""
    N, C_in, H, W = x.shape
    planes = params["conv1_w"].shape[0]
    c_out3 = params["conv3_w"].shape[0]
    has_downsample = "downsample_w" in params
    if not has_downsample:
        assert stride == 1 and C_in == c_out3, (
            "identity shortcut requires stride==1 and C_in == expansion*planes; "
            "provide downsample_w otherwise")

    # One layout + dtype pass at the module boundary (NCHW f32 -> NHWC bf16);
    # everything downstream stays NHWC / bf16, no standalone cast passes.
    x_nhwc = jnp.transpose(x, (0, 2, 3, 1)).astype(jnp.bfloat16)   # (N, H, W, C_in)

    # ---- stage 1: 1x1 conv + BN + ReLU (pure fused GEMM) ----
    b1, bias1 = _fold_1x1(params["conv1_w"], params["bn1_gamma"], params["bn1_beta"],
                          params["bn1_mean"], params["bn1_var"], eps)
    a1 = x_nhwc.reshape(N * H * W, C_in)
    h1 = fused_gemm_bn_act(a1, b1, bias1, apply_relu=True)         # (N*H*W, planes) bf16

    # ---- stage 2: 3x3 conv (stride, pad=1) + BN + ReLU, im2col-free in-kernel ----
    b2, bias2 = _fold_3x3(params["conv2_w"], params["bn2_gamma"], params["bn2_beta"],
                          params["bn2_mean"], params["bn2_var"], eps)
    h1_nhwc = h1.reshape(N, H, W, planes)
    h2, Ho, Wo = fused_conv3x3_bn_relu(h1_nhwc, b2, bias2, stride=stride)

    # ---- shortcut (carried in bf16 end-to-end) ----
    if has_downsample:
        bd, biasd = _fold_1x1(params["downsample_w"], params["ds_bn_gamma"],
                              params["ds_bn_beta"], params["ds_bn_mean"],
                              params["ds_bn_var"], eps)
        ad = x_nhwc[:, ::stride, ::stride, :].reshape(N * Ho * Wo, C_in)
        residual = fused_gemm_bn_act(ad, bd, biasd, apply_relu=False,
                                     out_dtype=jnp.bfloat16)       # (M2, c_out3) bf16
    else:
        residual = x_nhwc.reshape(N * Ho * Wo, C_in)

    # ---- stage 3: 1x1 conv + BN, residual added in-kernel BEFORE the final ReLU ----
    b3, bias3 = _fold_1x1(params["conv3_w"], params["bn3_gamma"], params["bn3_beta"],
                          params["bn3_mean"], params["bn3_var"], eps)
    h3 = fused_gemm_bn_act(h2, b3, bias3, residual=residual, apply_relu=True,
                           out_dtype=jnp.bfloat16)                 # (M2, c_out3) bf16

    out_nhwc = h3.reshape(N, Ho, Wo, c_out3)
    # single boundary pass back to PyTorch layout / dtype (transpose + cast fused by XLA)
    return jnp.transpose(out_nhwc, (0, 3, 1, 2)).astype(jnp.float32)


# ----------------------------------------------------------------------------
# demo + correctness check
# ----------------------------------------------------------------------------

if __name__ == "__main__":
    key = jax.random.PRNGKey(0)
    N, inplanes, H, W = 2, 32, 16, 16
    planes, stride, expansion = 8, 1, 4      # inplanes == planes*4 -> identity shortcut
    eps = 1e-5

    keys = jax.random.split(key, 8)

    def conv_init(k, c_out, c_in, ks):
        std = math.sqrt(2.0 / (ks * ks * c_out))
        return std * jax.random.normal(k, (c_out, c_in, ks, ks), dtype=jnp.float32)

    def bn_init(k, c):
        kg, kb, km, kv = jax.random.split(k, 4)
        return dict(
            gamma=1.0 + 0.2 * jax.random.normal(kg, (c,), jnp.float32),
            beta=0.1 * jax.random.normal(kb, (c,), jnp.float32),
            mean=0.1 * jax.random.normal(km, (c,), jnp.float32),
            var=1.0 + 0.2 * jax.random.uniform(kv, (c,), jnp.float32),
        )

    x = jax.random.normal(keys[0], (N, inplanes, H, W), dtype=jnp.float32)
    conv1_w = conv_init(keys[1], planes, inplanes, 1)
    conv2_w = conv_init(keys[2], planes, planes, 3)
    conv3_w = conv_init(keys[3], planes * expansion, planes, 1)
    bn1 = bn_init(keys[4], planes)
    bn2 = bn_init(keys[5], planes)
    bn3 = bn_init(keys[6], planes * expansion)

    params = dict(
        conv1_w=conv1_w, bn1_gamma=bn1["gamma"], bn1_beta=bn1["beta"],
        bn1_mean=bn1["mean"], bn1_var=bn1["var"],
        conv2_w=conv2_w, bn2_gamma=bn2["gamma"], bn2_beta=bn2["beta"],
        bn2_mean=bn2["mean"], bn2_var=bn2["var"],
        conv3_w=conv3_w, bn3_gamma=bn3["gamma"], bn3_beta=bn3["beta"],
        bn3_mean=bn3["mean"], bn3_var=bn3["var"],
    )

    fwd = jax.jit(lambda xx, pp: bottleneck_forward(xx, pp, stride=stride, eps=eps))
    y = jax.block_until_ready(fwd(x, params))

    # ---- pure-JAX reference mirroring the kernel's bf16-operand / f32-accum numerics ----
    def ref_stage(h, w, bn, s, pad, relu):
        inv = bn["gamma"] / jnp.sqrt(bn["var"] + eps)
        w_scaled = (w * inv[:, None, None, None]).astype(jnp.bfloat16)
        out = lax.conv_general_dilated(
            h.astype(jnp.bfloat16), w_scaled, (s, s), ((pad, pad), (pad, pad)),
            dimension_numbers=("NCHW", "OIHW", "NCHW"),
            preferred_element_type=jnp.float32)
        out = out + (bn["beta"] - bn["mean"] * inv)[None, :, None, None]
        return jnp.maximum(out, 0.0) if relu else out

    r1 = ref_stage(x, conv1_w, bn1, 1, 0, True).astype(jnp.bfloat16).astype(jnp.float32)
    r2 = ref_stage(r1, conv2_w, bn2, stride, 1, True).astype(jnp.bfloat16).astype(jnp.float32)
    r3 = ref_stage(r2, conv3_w, bn3, 1, 0, False)
    res = x.astype(jnp.bfloat16).astype(jnp.float32)        # kernel carries bf16 residual
    ref = jnp.maximum(r3 + res, 0.0)

    assert y.shape == ref.shape, (y.shape, ref.shape)
    err = float(jnp.max(jnp.abs(y - ref) / (1.0 + jnp.abs(ref))))
    assert err < 3e-2, f"max rel err {err}"
    print("KERNEL_OK")
</pallas_src>

<mosaic_0001>
module attributes {stable_mosaic.version = 11 : i64} {
  func.func @kernel(%arg0: i32, %arg1: i32, %arg2: memref<256x32xbf16, #tpu.memory_space<vmem>>, %arg3: memref<32x8xbf16, #tpu.memory_space<vmem>>, %arg4: memref<1x8xf32, #tpu.memory_space<vmem>>, %arg5: memref<256x8xbf16, #tpu.memory_space<vmem>>) attributes {dimension_semantics = [#tpu.dimension_semantics<parallel>, #tpu.dimension_semantics<parallel>], iteration_bounds = array<i64: 2, 1>, scalar_prefetch = 0 : i64, scratch_operands = 0 : i64, tpu.core_type = #tpu.core_type<tc>, window_params = [{transform_indices = @transform_0, window_bounds = array<i64: 256, 32>}, {transform_indices = @transform_1, window_bounds = array<i64: 32, 8>}, {transform_indices = @transform_2, window_bounds = array<i64: 1, 8>}, {transform_indices = @transform_3, window_bounds = array<i64: 256, 8>}]} {
    %c0 = arith.constant 0 : index
    %c0_0 = arith.constant 0 : index
    %0 = vector.load %arg2[%c0, %c0_0] : memref<256x32xbf16, #tpu.memory_space<vmem>>, vector<256x32xbf16>
    %c0_1 = arith.constant 0 : index
    %c0_2 = arith.constant 0 : index
    %1 = vector.load %arg3[%c0_1, %c0_2] : memref<32x8xbf16, #tpu.memory_space<vmem>>, vector<32x8xbf16>
    %cst = arith.constant dense<0.000000e+00> : vector<256x8xf32>
    %2 = tpu.matmul %0, %1, %cst {dimension_numbers = #tpu.dot_dimension_numbers<[1], [0], [0], [1], [0, 0, 1, 1], [], []>} : vector<256x32xbf16>, vector<32x8xbf16>, vector<256x8xf32> -> vector<256x8xf32>
    %c0_3 = arith.constant 0 : index
    %c0_4 = arith.constant 0 : index
    %3 = vector.load %arg4[%c0_3, %c0_4] : memref<1x8xf32, #tpu.memory_space<vmem>>, vector<1x8xf32>
    %4 = vector.broadcast %3 : vector<1x8xf32> to vector<256x8xf32>
    %5 = arith.addf %2, %4 : vector<256x8xf32>
    %cst_5 = arith.constant 0.000000e+00 : f32
    %6 = vector.broadcast %cst_5 : f32 to vector<256x8xf32>
    %7 = arith.maximumf %5, %6 : vector<256x8xf32>
    %8 = arith.truncf %7 : vector<256x8xf32> to vector<256x8xbf16>
    %c0_6 = arith.constant 0 : index
    %c0_7 = arith.constant 0 : index
    %9 = vector.load %arg5[%c0_6, %c0_7] : memref<256x8xbf16, #tpu.memory_space<vmem>>, vector<256x8xbf16>
    tpu.vector_store %arg5[%c0_6, %c0_7], %8 {strides = array<i32>} : memref<256x8xbf16, #tpu.memory_space<vmem>>, vector<256x8xbf16>,
    return
  }
  func.func @transform_0(%arg0: i32, %arg1: i32) -> (i32, i32) {
    %c0_i32 = arith.constant 0 : i32
    %c0_i32_0 = arith.constant 0 : i32
    return %arg0, %c0_i32 : i32, i32
  }
  func.func @transform_1(%arg0: i32, %arg1: i32) -> (i32, i32) {
    %c0_i32 = arith.constant 0 : i32
    %c0_i32_0 = arith.constant 0 : i32
    return %c0_i32, %arg1 : i32, i32
  }
  func.func @transform_2(%arg0: i32, %arg1: i32) -> (i32, i32) {
    %c0_i32 = arith.constant 0 : i32
    %c0_i32_0 = arith.constant 0 : i32
    return %c0_i32, %arg1 : i32, i32
  }
  func.func @transform_3(%arg0: i32, %arg1: i32) -> (i32, i32) {
    %c0_i32 = arith.constant 0 : i32
    return %arg0, %arg1 : i32, i32
  }
}

module attributes {stable_mosaic.version = 11 : i64} {
  func.func @kernel(%arg0: i32, %arg1: i32, %arg2: memref<1x18x18x8xbf16, #tpu.memory_space<vmem>>, %arg3: memref<9x8x8xbf16, #tpu.memory_space<vmem>>, %arg4: memref<1x8xf32, #tpu.memory_space<vmem>>, %arg5: memref<256x8xbf16, #tpu.memory_space<vmem>>) attributes {dimension_semantics = [#tpu.dimension_semantics<parallel>, #tpu.dimension_semantics<parallel>], iteration_bounds = array<i64: 2, 1>, scalar_prefetch = 0 : i64, scratch_operands = 0 : i64, tpu.core_type = #tpu.core_type<tc>, window_params = [{transform_indices = @transform_0, window_bounds = array<i64: 1, 18, 18, 8>}, {transform_indices = @transform_1, window_bounds = array<i64: 9, 8, 8>}, {transform_indices = @transform_2, window_bounds = array<i64: 1, 8>}, {transform_indices = @transform_3, window_bounds = array<i64: 256, 8>}]} {
    %c0 = arith.constant 0 : index
    %c0_0 = arith.constant 0 : index
    %c0_1 = arith.constant 0 : index
    %c0_2 = arith.constant 0 : index
    %0 = vector.load %arg2[%c0, %c0_0, %c0_1, %c0_2] : memref<1x18x18x8xbf16, #tpu.memory_space<vmem>>, vector<1x16x16x8xbf16>
    %1 = vector.shape_cast %0 : vector<1x16x16x8xbf16> to vector<16x16x8xbf16>
    %2 = vector.shape_cast %1 : vector<16x16x8xbf16> to vector<256x8xbf16>
    %c0_3 = arith.constant 0 : index
    %c0_4 = arith.constant 0 : index
    %c0_5 = arith.constant 0 : index
    %3 = vector.load %arg3[%c0_3, %c0_4, %c0_5] : memref<9x8x8xbf16, #tpu.memory_space<vmem>>, vector<1x8x8xbf16>
    %4 = vector.shape_cast %3 : vector<1x8x8xbf16> to vector<8x8xbf16>
    %cst = arith.constant dense<0.000000e+00> : vector<256x8xf32>
    %5 = tpu.matmul %2, %4, %cst {dimension_numbers = #tpu.dot_dimension_numbers<[1], [0], [0], [1], [0, 0, 1, 1], [], []>} : vector<256x8xbf16>, vector<8x8xbf16>, vector<256x8xf32> -> vector<256x8xf32>
    %c0_6 = arith.constant 0 : index
    %c0_7 = arith.constant 0 : index
    %c1 = arith.constant 1 : index
    %c0_8 = arith.constant 0 : index
    %6 = vector.load %arg2[%c0_6, %c0_7, %c1, %c0_8] : memref<1x18x18x8xbf16, #tpu.memory_space<vmem>>, vector<1x16x16x8xbf16>
    %7 = vector.shape_cast %6 : vector<1x16x16x8xbf16> to vector<16x16x8xbf16>
    %8 = vector.shape_cast %7 : vector<16x16x8xbf16> to vector<256x8xbf16>
    %c1_9 = arith.constant 1 : index
    %c0_10 = arith.constant 0 : index
    %c0_11 = arith.constant 0 : index
    %9 = vector.load %arg3[%c1_9, %c0_10, %c0_11] : memref<9x8x8xbf16, #tpu.memory_space<vmem>>, vector<1x8x8xbf16>
    %10 = vector.shape_cast %9 : vector<1x8x8xbf16> to vector<8x8xbf16>
    %cst_12 = arith.constant dense<0.000000e+00> : vector<256x8xf32>
    %11 = tpu.matmul %8, %10, %cst_12 {dimension_numbers = #tpu.dot_dimension_numbers<[1], [0], [0], [1], [0, 0, 1, 1], [], []>} : vector<256x8xbf16>, vector<8x8xbf16>, vector<256x8xf32> -> vector<256x8xf32>
    %12 = arith.addf %5, %11 : vector<256x8xf32>
    %c0_13 = arith.constant 0 : index
    %c0_14 = arith.constant 0 : index
    %c2 = arith.constant 2 : index
    %c0_15 = arith.constant 0 : index
    %13 = vector.load %arg2[%c0_13, %c0_14, %c2, %c0_15] : memref<1x18x18x8xbf16, #tpu.memory_space<vmem>>, vector<1x16x16x8xbf16>
    %14 = vector.shape_cast %13 : vector<1x16x16x8xbf16> to vector<16x16x8xbf16>
    %15 = vector.shape_cast %14 : vector<16x16x8xbf16> to vector<256x8xbf16>
    %c2_16 = arith.constant 2 : index
    %c0_17 = arith.constant 0 : index
    %c0_18 = arith.constant 0 : index
    %16 = vector.load %arg3[%c2_16, %c0_17, %c0_18] : memref<9x8x8xbf16, #tpu.memory_space<vmem>>, vector<1x8x8xbf16>
    %17 = vector.shape_cast %16 : vector<1x8x8xbf16> to vector<8x8xbf16>
    %cst_19 = arith.constant dense<0.000000e+00> : vector<256x8xf32>
    %18 = tpu.matmul %15, %17, %cst_19 {dimension_numbers = #tpu.dot_dimension_numbers<[1], [0], [0], [1], [0, 0, 1, 1], [], []>} : vector<256x8xbf16>, vector<8x8xbf16>, vector<256x8xf32> -> vector<256x8xf32>
    %19 = arith.addf %12, %18 : vector<256x8xf32>
    %c0_20 = arith.constant 0 : index
    %c1_21 = arith.constant 1 : index
    %c0_22 = arith.constant 0 : index
    %c0_23 = arith.constant 0 : index
    %20 = vector.load %arg2[%c0_20, %c1_21, %c0_22, %c0_23] : memref<1x18x18x8xbf16, #tpu.memory_space<vmem>>, vector<1x16x16x8xbf16>
    %21 = vector.shape_cast %20 : vector<1x16x16x8xbf16> to vector<16x16x8xbf16>
    %22 = vector.shape_cast %21 : vector<16x16x8xbf16> to vector<256x8xbf16>
    %c3 = arith.constant 3 : index
    %c0_24 = arith.constant 0 : index
    %c0_25 = arith.constant 0 : index
    %23 = vector.load %arg3[%c3, %c0_24, %c0_25] : memref<9x8x8xbf16, #tpu.memory_space<vmem>>, vector<1x8x8xbf16>
    %24 = vector.shape_cast %23 : vector<1x8x8xbf16> to vector<8x8xbf16>
    %cst_26 = arith.constant dense<0.000000e+00> : vector<256x8xf32>
    %25 = tpu.matmul %22, %24, %cst_26 {dimension_numbers = #tpu.dot_dimension_numbers<[1], [0], [0], [1], [0, 0, 1, 1], [], []>} : vector<256x8xbf16>, vector<8x8xbf16>, vector<256x8xf32> -> vector<256x8xf32>
    %26 = arith.addf %19, %25 : vector<256x8xf32>
    %c0_27 = arith.constant 0 : index
    %c1_28 = arith.constant 1 : index
    %c1_29 = arith.constant 1 : index
    %c0_30 = arith.constant 0 : index
    %27 = vector.load %arg2[%c0_27, %c1_28, %c1_29, %c0_30] : memref<1x18x18x8xbf16, #tpu.memory_space<vmem>>, vector<1x16x16x8xbf16>
    %28 = vector.shape_cast %27 : vector<1x16x16x8xbf16> to vector<16x16x8xbf16>
    %29 = vector.shape_cast %28 : vector<16x16x8xbf16> to vector<256x8xbf16>
    %c4 = arith.constant 4 : index
    %c0_31 = arith.constant 0 : index
    %c0_32 = arith.constant 0 : index
    %30 = vector.load %arg3[%c4, %c0_31, %c0_32] : memref<9x8x8xbf16, #tpu.memory_space<vmem>>, vector<1x8x8xbf16>
    %31 = vector.shape_cast %30 : vector<1x8x8xbf16> to vector<8x8xbf16>
    %cst_33 = arith.constant dense<0.000000e+00> : vector<256x8xf32>
    %32 = tpu.matmul %29, %31, %cst_33 {dimension_numbers = #tpu.dot_dimension_numbers<[1], [0], [0], [1], [0, 0, 1, 1], [], []>} : vector<256x8xbf16>, vector<8x8xbf16>, vector<256x8xf32> -> vector<256x8xf32>
    %33 = arith.addf %26, %32 : vector<256x8xf32>
    %c0_34 = arith.constant 0 : index
    %c1_35 = arith.constant 1 : index
    %c2_36 = arith.constant 2 : index
    %c0_37 = arith.constant 0 : index
    %34 = vector.load %arg2[%c0_34, %c1_35, %c2_36, %c0_37] : memref<1x18x18x8xbf16, #tpu.memory_space<vmem>>, vector<1x16x16x8xbf16>
    %35 = vector.shape_cast %34 : vector<1x16x16x8xbf16> to vector<16x16x8xbf16>
    %36 = vector.shape_cast %35 : vector<16x16x8xbf16> to vector<256x8xbf16>
    %c5 = arith.constant 5 : index
    %c0_38 = arith.constant 0 : index
    %c0_39 = arith.constant 0 : index
    %37 = vector.load %arg3[%c5, %c0_38, %c0_39] : memref<9x8x8xbf16, #tpu.memory_space<vmem>>, vector<1x8x8xbf16>
    %38 = vector.shape_cast %37 : vector<1x8x8xbf16> to vector<8x8xbf16>
    %cst_40 = arith.constant dense<0.000000e+00> : vector<256x8xf32>
    %39 = tpu.matmul %36, %38, %cst_40 {dimension_numbers = #tpu.dot_dimension_numbers<[1], [0], [0], [1], [0, 0, 1, 1], [], []>} : vector<256x8xbf16>, vector<8x8xbf16>, vector<256x8xf32> -> vector<256x8xf32>
    %40 = arith.addf %33, %39 : vector<256x8xf32>
    %c0_41 = arith.constant 0 : index
    %c2_42 = arith.constant 2 : index
    %c0_43 = arith.constant 0 : index
    %c0_44 = arith.constant 0 : index
    %41 = vector.load %arg2[%c0_41, %c2_42, %c0_43, %c0_44] : memref<1x18x18x8xbf16, #tpu.memory_space<vmem>>, vector<1x16x16x8xbf16>
    %42 = vector.shape_cast %41 : vector<1x16x16x8xbf16> to vector<16x16x8xbf16>
    %43 = vector.shape_cast %42 : vector<16x16x8xbf16> to vector<256x8xbf16>
    %c6 = arith.constant 6 : index
    %c0_45 = arith.constant 0 : index
    %c0_46 = arith.constant 0 : index
    %44 = vector.load %arg3[%c6, %c0_45, %c0_46] : memref<9x8x8xbf16, #tpu.memory_space<vmem>>, vector<1x8x8xbf16>
    %45 = vector.shape_cast %44 : vector<1x8x8xbf16> to vector<8x8xbf16>
    %cst_47 = arith.constant dense<0.000000e+00> : vector<256x8xf32>
    %46 = tpu.matmul %43, %45, %cst_47 {dimension_numbers = #tpu.dot_dimension_numbers<[1], [0], [0], [1], [0, 0, 1, 1], [], []>} : vector<256x8xbf16>, vector<8x8xbf16>, vector<256x8xf32> -> vector<256x8xf32>
    %47 = arith.addf %40, %46 : vector<256x8xf32>
    %c0_48 = arith.constant 0 : index
    %c2_49 = arith.constant 2 : index
    %c1_50 = arith.constant 1 : index
    %c0_51 = arith.constant 0 : index
    %48 = vector.load %arg2[%c0_48, %c2_49, %c1_50, %c0_51] : memref<1x18x18x8xbf16, #tpu.memory_space<vmem>>, vector<1x16x16x8xbf16>
    %49 = vector.shape_cast %48 : vector<1x16x16x8xbf16> to vector<16x16x8xbf16>
    %50 = vector.shape_cast %49 : vector<16x16x8xbf16> to vector<256x8xbf16>
    %c7 = arith.constant 7 : index
    %c0_52 = arith.constant 0 : index
    %c0_53 = arith.constant 0 : index
    %51 = vector.load %arg3[%c7, %c0_52, %c0_53] : memref<9x8x8xbf16, #tpu.memory_space<vmem>>, vector<1x8x8xbf16>
    %52 = vector.shape_cast %51 : vector<1x8x8xbf16> to vector<8x8xbf16>
    %cst_54 = arith.constant dense<0.000000e+00> : vector<256x8xf32>
    %53 = tpu.matmul %50, %52, %cst_54 {dimension_numbers = #tpu.dot_dimension_numbers<[1], [0], [0], [1], [0, 0, 1, 1], [], []>} : vector<256x8xbf16>, vector<8x8xbf16>, vector<256x8xf32> -> vector<256x8xf32>
    %54 = arith.addf %47, %53 : vector<256x8xf32>
    %c0_55 = arith.constant 0 : index
    %c2_56 = arith.constant 2 : index
    %c2_57 = arith.constant 2 : index
    %c0_58 = arith.constant 0 : index
    %55 = vector.load %arg2[%c0_55, %c2_56, %c2_57, %c0_58] : memref<1x18x18x8xbf16, #tpu.memory_space<vmem>>, vector<1x16x16x8xbf16>
    %56 = vector.shape_cast %55 : vector<1x16x16x8xbf16> to vector<16x16x8xbf16>
    %57 = vector.shape_cast %56 : vector<16x16x8xbf16> to vector<256x8xbf16>
    %c8 = arith.constant 8 : index
    %c0_59 = arith.constant 0 : index
    %c0_60 = arith.constant 0 : index
    %58 = vector.load %arg3[%c8, %c0_59, %c0_60] : memref<9x8x8xbf16, #tpu.memory_space<vmem>>, vector<1x8x8xbf16>
    %59 = vector.shape_cast %58 : vector<1x8x8xbf16> to vector<8x8xbf16>
    %cst_61 = arith.constant dense<0.000000e+00> : vector<256x8xf32>
    %60 = tpu.matmul %57, %59, %cst_61 {dimension_numbers = #tpu.dot_dimension_numbers<[1], [0], [0], [1], [0, 0, 1, 1], [], []>} : vector<256x8xbf16>, vector<8x8xbf16>, vector<256x8xf32> -> vector<256x8xf32>
    %61 = arith.addf %54, %60 : vector<256x8xf32>
    %c0_62 = arith.constant 0 : index
    %c0_63 = arith.constant 0 : index
    %62 = vector.load %arg4[%c0_62, %c0_63] : memref<1x8xf32, #tpu.memory_space<vmem>>, vector<1x8xf32>
    %63 = vector.broadcast %62 : vector<1x8xf32> to vector<256x8xf32>
    %64 = arith.addf %61, %63 : vector<256x8xf32>
    %cst_64 = arith.constant 0.000000e+00 : f32
    %65 = vector.broadcast %cst_64 : f32 to vector<256x8xf32>
    %66 = arith.maximumf %64, %65 : vector<256x8xf32>
    %67 = arith.truncf %66 : vector<256x8xf32> to vector<256x8xbf16>
    %c0_65 = arith.constant 0 : index
    %c0_66 = arith.constant 0 : index
    %68 = vector.load %arg5[%c0_65, %c0_66] : memref<256x8xbf16, #tpu.memory_space<vmem>>, vector<256x8xbf16>
    tpu.vector_store %arg5[%c0_65, %c0_66], %67 {strides = array<i32>} : memref<256x8xbf16, #tpu.memory_space<vmem>>, vector<256x8xbf16>,
    return
  }
  func.func @transform_0(%arg0: i32, %arg1: i32) -> (i32, i32, i32, i32) {
    %c0_i32 = arith.constant 0 : i32
    %c0_i32_0 = arith.constant 0 : i32
    %c0_i32_1 = arith.constant 0 : i32
    %c0_i32_2 = arith.constant 0 : i32
    return %arg0, %c0_i32, %c0_i32_0, %c0_i32_1 : i32, i32, i32, i32
  }
  func.func @transform_1(%arg0: i32, %arg1: i32) -> (i32, i32, i32) {
    %c0_i32 = arith.constant 0 : i32
    %c0_i32_0 = arith.constant 0 : i32
    %c0_i32_1 = arith.constant 0 : i32
    return %c0_i32, %c0_i32_0, %arg1 : i32, i32, i32
  }
  func.func @transform_2(%arg0: i32, %arg1: i32) -> (i32, i32) {
    %c0_i32 = arith.constant 0 : i32
    %c0_i32_0 = arith.constant 0 : i32
    return %c0_i32, %arg1 : i32, i32
  }
  func.func @transform_3(%arg0: i32, %arg1: i32) -> (i32, i32) {
    %c0_i32 = arith.constant 0 : i32
    return %arg0, %arg1 : i32, i32
  }
}

module attributes {stable_mosaic.version = 11 : i64} {
  func.func @kernel(%arg0: i32, %arg1: i32, %arg2: memref<256x8xbf16, #tpu.memory_space<vmem>>, %arg3: memref<8x32xbf16, #tpu.memory_space<vmem>>, %arg4: memref<1x32xf32, #tpu.memory_space<vmem>>, %arg5: memref<256x32xbf16, #tpu.memory_space<vmem>>, %arg6: memref<256x32xbf16, #tpu.memory_space<vmem>>) attributes {dimension_semantics = [#tpu.dimension_semantics<parallel>, #tpu.dimension_semantics<parallel>], iteration_bounds = array<i64: 2, 1>, scalar_prefetch = 0 : i64, scratch_operands = 0 : i64, tpu.core_type = #tpu.core_type<tc>, window_params = [{transform_indices = @transform_0, window_bounds = array<i64: 256, 8>}, {transform_indices = @transform_1, window_bounds = array<i64: 8, 32>}, {transform_indices = @transform_2, window_bounds = array<i64: 1, 32>}, {transform_indices = @transform_3, window_bounds = array<i64: 256, 32>}, {transform_indices = @transform_4, window_bounds = array<i64: 256, 32>}]} {
    %c0 = arith.constant 0 : index
    %c0_0 = arith.constant 0 : index
    %0 = vector.load %arg2[%c0, %c0_0] : memref<256x8xbf16, #tpu.memory_space<vmem>>, vector<256x8xbf16>
    %c0_1 = arith.constant 0 : index
    %c0_2 = arith.constant 0 : index
    %1 = vector.load %arg3[%c0_1, %c0_2] : memref<8x32xbf16, #tpu.memory_space<vmem>>, vector<8x32xbf16>
    %cst = arith.constant dense<0.000000e+00> : vector<256x32xf32>
    %2 = tpu.matmul %0, %1, %cst {dimension_numbers = #tpu.dot_dimension_numbers<[1], [0], [0], [1], [0, 0, 1, 1], [], []>} : vector<256x8xbf16>, vector<8x32xbf16>, vector<256x32xf32> -> vector<256x32xf32>
    %c0_3 = arith.constant 0 : index
    %c0_4 = arith.constant 0 : index
    %3 = vector.load %arg4[%c0_3, %c0_4] : memref<1x32xf32, #tpu.memory_space<vmem>>, vector<1x32xf32>
    %4 = vector.broadcast %3 : vector<1x32xf32> to vector<256x32xf32>
    %5 = arith.addf %2, %4 : vector<256x32xf32>
    %c0_5 = arith.constant 0 : index
    %c0_6 = arith.constant 0 : index
    %6 = vector.load %arg5[%c0_5, %c0_6] : memref<256x32xbf16, #tpu.memory_space<vmem>>, vector<256x32xbf16>
    %7 = arith.extf %6 : vector<256x32xbf16> to vector<256x32xf32>
    %8 = arith.addf %5, %7 : vector<256x32xf32>
    %cst_7 = arith.constant 0.000000e+00 : f32
    %9 = vector.broadcast %cst_7 : f32 to vector<256x32xf32>
    %10 = arith.maximumf %8, %9 : vector<256x32xf32>
    %11 = arith.truncf %10 : vector<256x32xf32> to vector<256x32xbf16>
    %c0_8 = arith.constant 0 : index
    %c0_9 = arith.constant 0 : index
    %12 = vector.load %arg6[%c0_8, %c0_9] : memref<256x32xbf16, #tpu.memory_space<vmem>>, vector<256x32xbf16>
    tpu.vector_store %arg6[%c0_8, %c0_9], %11 {strides = array<i32>} : memref<256x32xbf16, #tpu.memory_space<vmem>>, vector<256x32xbf16>,
    return
  }
  func.func @transform_0(%arg0: i32, %arg1: i32) -> (i32, i32) {
    %c0_i32 = arith.constant 0 : i32
    %c0_i32_0 = arith.constant 0 : i32
    return %arg0, %c0_i32 : i32, i32
  }
  func.func @transform_1(%arg0: i32, %arg1: i32) -> (i32, i32) {
    %c0_i32 = arith.constant 0 : i32
    %c0_i32_0 = arith.constant 0 : i32
    return %c0_i32, %arg1 : i32, i32
  }
  func.func @transform_2(%arg0: i32, %arg1: i32) -> (i32, i32) {
    %c0_i32 = arith.constant 0 : i32
    %c0_i32_0 = arith.constant 0 : i32
    return %c0_i32, %arg1 : i32, i32
  }
  func.func @transform_3(%arg0: i32, %arg1: i32) -> (i32, i32) {
    %c0_i32 = arith.constant 0 : i32
    return %arg0, %arg1 : i32, i32
  }
  func.func @transform_4(%arg0: i32, %arg1: i32) -> (i32, i32) {
    %c0_i32 = arith.constant 0 : i32
    return %arg0, %arg1 : i32, i32
  }
}

</mosaic_0001>

<llo_original>
// kernel: _lambda_.5
$region0: #{_lambda_.5}
  #allocation0 [shape = 'u32[]', space=smem, size = 0x4, offset = 0x4, fixed_abs, tag = 'smem constant byte address 0x4 - core index']
  #allocation1 [shape = 'u32[72,128]{1,0:T(1,128)}', space=vmem, size = 0x9000, scoped, tag = 'internal scratch']
  %s0 = inlined_call_operand.vmem [shape: bf16[512,8], index: 0, kind: input, shape index: {}]
  %s1 = inlined_call_operand.vmem [shape: bf16[8,32], index: 1, kind: input, shape index: {}]
  %s2 = inlined_call_operand.vmem [shape: f32[1,32], index: 2, kind: input, shape index: {}]
  %s3 = inlined_call_operand.vmem [shape: bf16[512,32], index: 3, kind: input, shape index: {}]
  %s4 = inlined_call_operand.vmem [shape: bf16[512,32], index: 4, kind: output, shape index: {}]
  %s5 = sld [smem:[#allocation0]]
  $region49: #{_lambda_.5} parent=0
    _
  %s7 = ssub.s32 1, %s5
  %s8 = scalar_select 0, %s7, %s5
  loop: start=0, step=1, limit=4
  $region2: #{_lambda_.5} parent=0 // loop_pre_header
    _
  $region3: #{_lambda_.5} parent=0 // loop_header
    %s10 = sphi 0, %s14
    %p11 = scmp.ge.s32.totalorder %s10, 4
    %s17 = sphi 0, %s29
    %s18 = sphi 0, %s25
    %s19 = sphi 0, %s17
    %s20 = sphi 0, %s18
    %s21 = sphi 0, %s19
    %s22 = sphi 0, %s20
    %s32 = sphi 0, %s34
    %s35 = sphi 0, %s32
    %s36 = sphi 0, %s35
    %s52 = sphi 0, %s36
    %s58 = sphi 0, %s60
    %s61 = sphi 0, %s58
    %s62 = sphi 0, %s61
    %s78 = sphi 0, %s62
    %s84 = sphi 0, %s86
    %s87 = sphi 0, %s84
    %s88 = sphi 0, %s87
    %s104 = sphi 0, %s88
    %s112 = sphi 0, %s114
    %s115 = sphi 0, %s112
    %s116 = sphi 0, %s115
    %s132 = sphi 0, %s116
    %s140 = sphi 0, %s142
    %s143 = sphi 0, %s140
    %s144 = sphi 0, %s143
    %s160 = sphi 0, %s144
  $region4: #{_lambda_.5} parent=0 // loop_header_branch
    %13 = sbr.rel (%p11) target = $region8
  $region5: #{_lambda_.5} parent=0 // loop_body
    %s15 = ssub.s32 %s10, 1
    %s16 = ssub.s32 %s10, 2
    %s23 = sadd.s32 1, %s18
    %p24 = scmp.ge.s32.totalorder %s23, 1
    %s25 = scalar_select %p24, 0, %s23
    %s26 = sadd.s32 1, %s17
    %s27 = scalar_select %p24, %s26, %s17
    %p28 = scmp.ge.s32.totalorder %s27, 2
    %s29 = scalar_select %p28, 0, %s27
    %s30 = ssub.s32 %s17, %s29
    %p31 = scmp.eq.s32.totalorder %s30, 0
    %s33 = sadd.s32 %s32, 1
    %s34 = scalar_select %p31, %s32, %s33
    %p37 = pneg %p31
    %p38 = scmp.eq.s32.totalorder %s10, 1
    %p39 = por %p37, %p38
    %p40 = scmp.ne.s32.totalorder %s32, %s35
    %p41 = scmp.eq.s32.totalorder %s10, 0
    %p42 = por %p40, %p41
    %p43 = scmp.ne.s32.totalorder %s32, %s35
    %p44 = scmp.eq.s32.totalorder %s15, 1
    %p45 = por %p43, %p44
    %p46 = scmp.ne.s32.totalorder %s35, %s36
    %p47 = scmp.eq.s32.totalorder %s15, 0
    %p48 = por %p46, %p47
    %p49 = scmp.ne.s32.totalorder %s35, %s36
    %p50 = scmp.eq.s32.totalorder %s16, 1
    %p51 = por %p49, %p50
    %p53 = scmp.ne.s32.totalorder %s36, %s52
    %p54 = scmp.eq.s32.totalorder %s16, 0
    %p55 = por %p53, %p54
    %s56 = ssub.s32 %s18, %s25
    %p57 = scmp.eq.s32.totalorder %s56, 0
    %s59 = sadd.s32 %s58, 1
    %s60 = scalar_select %p57, %s58, %s59
    %p63 = pneg %p57
    %p64 = scmp.eq.s32.totalorder %s10, 1
    %p65 = por %p63, %p64
    %p66 = scmp.ne.s32.totalorder %s58, %s61
    %p67 = scmp.eq.s32.totalorder %s10, 0
    %p68 = por %p66, %p67
    %p69 = scmp.ne.s32.totalorder %s58, %s61
    %p70 = scmp.eq.s32.totalorder %s15, 1
    %p71 = por %p69, %p70
    %p72 = scmp.ne.s32.totalorder %s61, %s62
    %p73 = scmp.eq.s32.totalorder %s15, 0
    %p74 = por %p72, %p73
    %p75 = scmp.ne.s32.totalorder %s61, %s62
    %p76 = scmp.eq.s32.totalorder %s16, 1
    %p77 = por %p75, %p76
    %p79 = scmp.ne.s32.totalorder %s62, %s78
    %p80 = scmp.eq.s32.totalorder %s16, 0
    %p81 = por %p79, %p80
    %s82 = ssub.s32 %s18, %s25
    %p83 = scmp.eq.s32.totalorder %s82, 0
    %s85 = sadd.s32 %s84, 1
    %s86 = scalar_select %p83, %s84, %s85
    %p89 = pneg %p83
    %p90 = scmp.eq.s32.totalorder %s10, 1
    %p91 = por %p89, %p90
    %p92 = scmp.ne.s32.totalorder %s84, %s87
    %p93 = scmp.eq.s32.totalorder %s10, 0
    %p94 = por %p92, %p93
    %p95 = scmp.ne.s32.totalorder %s84, %s87
    %p96 = scmp.eq.s32.totalorder %s15, 1
    %p97 = por %p95, %p96
    %p98 = scmp.ne.s32.totalorder %s87, %s88
    %p99 = scmp.eq.s32.totalorder %s15, 0
    %p100 = por %p98, %p99
    %p101 = scmp.ne.s32.totalorder %s87, %s88
    %p102 = scmp.eq.s32.totalorder %s16, 1
    %p103 = por %p101, %p102
    %p105 = scmp.ne.s32.totalorder %s88, %s104
    %p106 = scmp.eq.s32.totalorder %s16, 0
    %p107 = por %p105, %p106
    %s108 = ssub.s32 %s17, %s29
    %s109 = ssub.s32 %s18, %s25
    %s110 = sor.u32 %s108, %s109
    %p111 = scmp.eq.s32.totalorder %s110, 0
    %s113 = sadd.s32 %s112, 1
    %s114 = scalar_select %p111, %s112, %s113
    %p117 = pneg %p111
    %p118 = scmp.eq.s32.totalorder %s10, 1
    %p119 = por %p117, %p118
    %p120 = scmp.ne.s32.totalorder %s112, %s115
    %p121 = scmp.eq.s32.totalorder %s10, 0
    %p122 = por %p120, %p121
    %p123 = scmp.ne.s32.totalorder %s112, %s115
    %p124 = scmp.eq.s32.totalorder %s15, 1
    %p125 = por %p123, %p124
    %p126 = scmp.ne.s32.totalorder %s115, %s116
    %p127 = scmp.eq.s32.totalorder %s15, 0
    %p128 = por %p126, %p127
    %p129 = scmp.ne.s32.totalorder %s115, %s116
    %p130 = scmp.eq.s32.totalorder %s16, 1
    %p131 = por %p129, %p130
    %p133 = scmp.ne.s32.totalorder %s116, %s132
    %p134 = scmp.eq.s32.totalorder %s16, 0
    %p135 = por %p133, %p134
    %s136 = ssub.s32 %s17, %s29
    %s137 = ssub.s32 %s18, %s25
    %s138 = sor.u32 %s136, %s137
    %p139 = scmp.eq.s32.totalorder %s138, 0
    %s141 = sadd.s32 %s140, 1
    %s142 = scalar_select %p139, %s140, %s141
    %p145 = pneg %p139
    %p146 = scmp.eq.s32.totalorder %s10, 1
    %p147 = por %p145, %p146
    %p148 = scmp.ne.s32.totalorder %s140, %s143
    %p149 = scmp.eq.s32.totalorder %s10, 0
    %p150 = por %p148, %p149
    %p151 = scmp.ne.s32.totalorder %s140, %s143
    %p152 = scmp.eq.s32.totalorder %s15, 1
    %p153 = por %p151, %p152
    %p154 = scmp.ne.s32.totalorder %s143, %s144
    %p155 = scmp.eq.s32.totalorder %s15, 0
    %p156 = por %p154, %p155
    %p157 = scmp.ne.s32.totalorder %s143, %s144
    %p158 = scmp.eq.s32.totalorder %s16, 1
    %p159 = por %p157, %p158
    %p161 = scmp.ne.s32.totalorder %s144, %s160
    %p162 = scmp.eq.s32.totalorder %s16, 0
    %p163 = por %p161, %p162
    %p164 = scmp.le.s32.totalorder 1, %s10
    %p165 = scmp.lt.s32.totalorder %s10, 3
    %p166 = pnand %p164, %p165
    %p167 = pneg %p166
    // Predicated region
    $region9: #{_lambda_.5} parent=5 // pred_check
      _
    $region10: #{_lambda_.5} parent=5 // pred_check_branch
      %169 = sbr.rel (%p166) target = $region12
    $region11: #{_lambda_.5} parent=5 // pred_region
      %s170 = ssub.s32 %s10, 1
      // Predicated region
      $region13: #{_lambda_.5} parent=11 // pred_check
        %p171 = pneg %p74
      $region14: #{_lambda_.5} parent=11 // pred_check_branch
        %173 = sbr.rel (%p171) target = $region16
      $region15: #{_lambda_.5} parent=11 // pred_region
        %p174 = scmp.lt.s32.totalorder %s20, 0
        %s175 = scalar_select %p174, %s20, 0
        %s176 = smul.addr %s175, 4
        %s177 = scalar_lea.vmem %s1, %s176
      $region16: #{_lambda_.5} parent=11 // pred_fallthru
        _
      // Predicated region
      $region17: #{_lambda_.5} parent=11 // pred_check
        %p178 = pneg %p100
      $region18: #{_lambda_.5} parent=11 // pred_check_branch
        %180 = sbr.rel (%p178) target = $region20
      $region19: #{_lambda_.5} parent=11 // pred_region
        %p181 = scmp.lt.s32.totalorder %s20, 0
        %s182 = scalar_select %p181, %s20, 0
        %s183 = scalar_lea.vmem %s2, %s182
      $region20: #{_lambda_.5} parent=11 // pred_fallthru
        _
    $region12: #{_lambda_.5} parent=5 // pred_fallthru
      _
    %p184 = scmp.lt.s32.totalorder %s10, 2
    // Predicated region
    $region21: #{_lambda_.5} parent=5 // pred_check
      %p185 = pneg %p184
    $region22: #{_lambda_.5} parent=5 // pred_check_branch
      %187 = sbr.rel (%p185) target = $region24
    $region23: #{_lambda_.5} parent=5 // pred_region
      // Predicated region
      $region25: #{_lambda_.5} parent=23 // pred_check
        %p188 = pneg %p42
      $region26: #{_lambda_.5} parent=23 // pred_check_branch
        %190 = sbr.rel (%p188) target = $region28
      $region27: #{_lambda_.5} parent=23 // pred_region
        %s191 = smul.u32 32, %s17
        %p192 = scmp.lt.s32.totalorder %s191, 63
        %s193 = scalar_select %p192, %s191, 63
        %s194 = smul.addr %s193, 4
        %s195 = scalar_lea.vmem %s0, %s194
        %s196 = smul.u32 32, %s17
      $region28: #{_lambda_.5} parent=23 // pred_fallthru
        _
      // Predicated region
      $region29: #{_lambda_.5} parent=23 // pred_check
        %p197 = pneg %p122
      $region30: #{_lambda_.5} parent=23 // pred_check_branch
        %199 = sbr.rel (%p197) target = $region32
      $region31: #{_lambda_.5} parent=23 // pred_region
        %s200 = smul.u32 32, %s17
        %p201 = scmp.lt.s32.totalorder %s200, 63
        %s202 = scalar_select %p201, %s200, 63
        %p203 = scmp.lt.s32.totalorder %s18, 0
        %s204 = scalar_select %p203, %s18, 0
        %s205 = sadd.s32 %s204, %s202
        %s206 = smul.addr %s205, 4
        %s207 = scalar_lea.vmem %s3, %s206
        %s208 = smul.u32 32, %s17
      $region32: #{_lambda_.5} parent=23 // pred_fallthru
        _
    $region24: #{_lambda_.5} parent=5 // pred_fallthru
      _
    %p209 = scmp.le.s32.totalorder 1, %s10
    %p210 = scmp.lt.s32.totalorder %s10, 3
    %p211 = pnand %p209, %p210
    %p212 = pneg %p211
    // Predicated region
    $region33: #{_lambda_.5} parent=5 // pred_check
      _
    $region34: #{_lambda_.5} parent=5 // pred_check_branch
      %214 = sbr.rel (%p211) target = $region36
    $region35: #{_lambda_.5} parent=5 // pred_region
      %s215 = ssub.s32 %s10, 1
      %s216 = smul.u32 32, %s19
      %p217 = scmp.lt.s32.totalorder %s216, 63
      %s218 = scalar_select %p217, %s216, 63
      %s219 = smul.addr %s218, 4
      %s220 = scalar_lea.vmem %s0, %s219
      %p221 = pneg %p48
      %p222 = pneg %p45
      %p223 = scmp.lt.s32.totalorder %s20, 0
      %s224 = scalar_select %p223, %s20, 0
      %s225 = smul.addr %s224, 4
      %s226 = scalar_lea.vmem %s1, %s225
      %p227 = pneg %p74
      %p228 = pneg %p71
      %p229 = scmp.lt.s32.totalorder %s20, 0
      %s230 = scalar_select %p229, %s20, 0
      %s231 = scalar_lea.vmem %s2, %s230
      %p232 = pneg %p100
      %p233 = pneg %p97
      %s234 = smul.u32 32, %s19
      %p235 = scmp.lt.s32.totalorder %s234, 63
      %s236 = scalar_select %p235, %s234, 63
      %p237 = scmp.lt.s32.totalorder %s20, 0
      %s238 = scalar_select %p237, %s20, 0
      %s239 = sadd.s32 %s238, %s236
      %s240 = smul.addr %s239, 4
      %s241 = scalar_lea.vmem %s3, %s240
      %p242 = pneg %p128
      %p243 = pneg %p125
      %p244 = pneg %p156
      %p245 = pneg %p153
      %s246 = smul.u32 32, %s19
      %p247 = scmp.lt.s32.totalorder %s246, 63
      %s248 = scalar_select %p247, %s246, 63
      %p249 = scmp.lt.s32.totalorder %s20, 0
      %s250 = scalar_select %p249, %s20, 0
      %s251 = sadd.s32 %s250, %s248
      %s252 = smul.addr %s251, 4
      %s253 = scalar_lea.vmem %s4, %s252
      %s254 = smul.u32 32, %s19
      %p255 = scmp.lt.s32.totalorder %s254, 63
      %s256 = scalar_select %p255, %s254, 63
      %s257 = smul.addr %s256, 4
      %s258 = scalar_lea.vmem %s0, %s257
      %s259 = smul.u32 32, %s19
      %p260 = scmp.lt.s32.totalorder %s20, 0
      %s261 = scalar_select %p260, %s20, 0
      %s262 = smul.addr %s261, 4
      %s263 = scalar_lea.vmem %s1, %s262
      %p264 = scmp.lt.s32.totalorder %s20, 0
      %s265 = scalar_select %p264, %s20, 0
      %s266 = scalar_lea.vmem %s2, %s265
      %s267 = smul.u32 32, %s19
      %p268 = scmp.lt.s32.totalorder %s267, 63
      %s269 = scalar_select %p268, %s267, 63
      %p270 = scmp.lt.s32.totalorder %s20, 0
      %s271 = scalar_select %p270, %s20, 0
      %s272 = sadd.s32 %s271, %s269
      %s273 = smul.addr %s272, 4
      %s274 = scalar_lea.vmem %s3, %s273
      %s275 = smul.u32 32, %s19
      %s276 = smul.u32 32, %s19
      %p277 = scmp.lt.s32.totalorder %s276, 63
      %s278 = scalar_select %p277, %s276, 63
      %p279 = scmp.lt.s32.totalorder %s20, 0
      %s280 = scalar_select %p279, %s20, 0
      %s281 = sadd.s32 %s280, %s278
      %s282 = smul.addr %s281, 4
      %s283 = scalar_lea.vmem %s4, %s282
      %s284 = smul.u32 32, %s19
      %v286 = vld [vmem:[%s258] sm:$0xf]
      %v287 = vld [vmem:[%s258 + $0x4] sm:$0xf]
      %v288 = vld [vmem:[%s258 + $0x8] sm:$0xf]
      %v289 = vld [vmem:[%s258 + $0xc] sm:$0xf]
      %v290 = vld [vmem:[%s258 + $0x10] sm:$0xf]
      %v291 = vld [vmem:[%s258 + $0x14] sm:$0xf]
      %v292 = vld [vmem:[%s258 + $0x18] sm:$0xf]
      %v293 = vld [vmem:[%s258 + $0x1c] sm:$0xf]
      %v294 = vld [vmem:[%s258 + $0x20] sm:$0xf]
      %v295 = vld [vmem:[%s258 + $0x24] sm:$0xf]
      %v296 = vld [vmem:[%s258 + $0x28] sm:$0xf]
      %v297 = vld [vmem:[%s258 + $0x2c] sm:$0xf]
      %v298 = vld [vmem:[%s258 + $0x30] sm:$0xf]
      %v299 = vld [vmem:[%s258 + $0x34] sm:$0xf]
      %v300 = vld [vmem:[%s258 + $0x38] sm:$0xf]
      %v301 = vld [vmem:[%s258 + $0x3c] sm:$0xf]
      %v302 = vld [vmem:[%s258 + $0x40] sm:$0xf]
      %v303 = vld [vmem:[%s258 + $0x44] sm:$0xf]
      %v304 = vld [vmem:[%s258 + $0x48] sm:$0xf]
      %v305 = vld [vmem:[%s258 + $0x4c] sm:$0xf]
      %v306 = vld [vmem:[%s258 + $0x50] sm:$0xf]
      %v307 = vld [vmem:[%s258 + $0x54] sm:$0xf]
      %v308 = vld [vmem:[%s258 + $0x58] sm:$0xf]
      %v309 = vld [vmem:[%s258 + $0x5c] sm:$0xf]
      %v310 = vld [vmem:[%s258 + $0x60] sm:$0xf]
      %v311 = vld [vmem:[%s258 + $0x64] sm:$0xf]
      %v312 = vld [vmem:[%s258 + $0x68] sm:$0xf]
      %v313 = vld [vmem:[%s258 + $0x6c] sm:$0xf]
      %v314 = vld [vmem:[%s258 + $0x70] sm:$0xf]
      %v315 = vld [vmem:[%s258 + $0x74] sm:$0xf]
      %v316 = vld [vmem:[%s258 + $0x78] sm:$0xf]
      %v317 = vld [vmem:[%s258 + $0x7c] sm:$0xf]
      %v318 = vld [vmem:[%s263] sm:$0xf]
      %v319 = vld [vmem:[%s266] sm:$0x1]
      %v321 = vperm.slane %v319, 0
      %v355 = vunpack.c.l.b16 %v286
      %v356 = vunpack.c.l.b16 %v287
      %v357 = vunpack.c.l.b16 %v288
      %v358 = vunpack.c.l.b16 %v289
      %v359 = vunpack.c.l.b16 %v290
      %v360 = vunpack.c.l.b16 %v291
      %v361 = vunpack.c.l.b16 %v292
      %v362 = vunpack.c.l.b16 %v293
      %v363 = vunpack.c.l.b16 %v294
      %v364 = vunpack.c.l.b16 %v295
      %v365 = vunpack.c.l.b16 %v296
      %v366 = vunpack.c.l.b16 %v297
      %v367 = vunpack.c.l.b16 %v298
      %v368 = vunpack.c.l.b16 %v299
      %v369 = vunpack.c.l.b16 %v300
      %v370 = vunpack.c.l.b16 %v301
      %v371 = vunpack.c.l.b16 %v302
      %v372 = vunpack.c.l.b16 %v303
      %v373 = vunpack.c.l.b16 %v304
      %v374 = vunpack.c.l.b16 %v305
      %v375 = vunpack.c.l.b16 %v306
      %v376 = vunpack.c.l.b16 %v307
      %v377 = vunpack.c.l.b16 %v308
      %v378 = vunpack.c.l.b16 %v309
      %v379 = vunpack.c.l.b16 %v310
      %v380 = vunpack.c.l.b16 %v311
      %v381 = vunpack.c.l.b16 %v312
      %v382 = vunpack.c.l.b16 %v313
      %v383 = vunpack.c.l.b16 %v314
      %v384 = vunpack.c.l.b16 %v315
      %v385 = vunpack.c.l.b16 %v316
      %v386 = vunpack.c.l.b16 %v317
      %v387 = vpack.c.b16 %v356, %v355
      %v388 = vpack.c.b16 %v358, %v357
      %v389 = vpack.c.b16 %v360, %v359
      %v390 = vpack.c.b16 %v362, %v361
      %v391 = vpack.c.b16 %v364, %v363
      %v392 = vpack.c.b16 %v366, %v365
      %v393 = vpack.c.b16 %v368, %v367
      %v394 = vpack.c.b16 %v370, %v369
      %v395 = vpack.c.b16 %v372, %v371
      %v396 = vpack.c.b16 %v374, %v373
      %v397 = vpack.c.b16 %v376, %v375
      %v398 = vpack.c.b16 %v378, %v377
      %v399 = vpack.c.b16 %v380, %v379
      %v400 = vpack.c.b16 %v382, %v381
      %v401 = vpack.c.b16 %v384, %v383
      %v402 = vpack.c.b16 %v386, %v385
      %vm403 = vcmask 64512
      %v405 = vsel %vm403, %v387, 0
      %v408 = vsel %vm403, %v388, 0
      %v411 = vsel %vm403, %v389, 0
      %v414 = vsel %vm403, %v390, 0
      %v417 = vsel %vm403, %v391, 0
      %v420 = vsel %vm403, %v392, 0
      %v423 = vsel %vm403, %v393, 0
      %v426 = vsel %vm403, %v394, 0
      %v429 = vsel %vm403, %v395, 0
      %v432 = vsel %vm403, %v396, 0
      %v435 = vsel %vm403, %v397, 0
      %v438 = vsel %vm403, %v398, 0
      %v441 = vsel %vm403, %v399, 0
      %v444 = vsel %vm403, %v400, 0
      %v447 = vsel %vm403, %v401, 0
      %v450 = vsel %vm403, %v402, 0
      %vm452 = vcmask 1043456
      %v454 = vsel %vm452, %v318, 0
      %456 = vmatpush.bf16.msra.mxu0 0
      %457 = vmatpush.bf16.msra.mxu0 0
      %458 = vmatpush.bf16.msra.mxu0 0
      %459 = vmatpush.bf16.msra.mxu0 0
      %460 = vmatpush.bf16.msra.mxu0 0
      %461 = vmatpush.bf16.msra.mxu0 0
      %462 = vmatpush.bf16.msra.mxu0 0
      %463 = vmatpush.bf16.msra.mxu0 %v454
      %464 = vmatmul.bf16.gmra.mxu0 %v405
      %v465 = vpop.f32.mrf.mxu0
      %v466 = vadd.f32 %v321, %v465
      %v467 = vpop.f32.mrf.mxu0
      %v468 = vadd.f32 %v321, %v467
      %469 = vmatmul.bf16.gmra.mxu0 %v408
      %v470 = vpop.f32.mrf.mxu0
      %v471 = vadd.f32 %v321, %v470
      %v472 = vpop.f32.mrf.mxu0
      %v473 = vadd.f32 %v321, %v472
      %474 = vmatmul.bf16.gmra.mxu0 %v411
      %v475 = vpop.f32.mrf.mxu0
      %v476 = vadd.f32 %v321, %v475
      %v477 = vpop.f32.mrf.mxu0
      %v478 = vadd.f32 %v321, %v477
      %479 = vmatmul.bf16.gmra.mxu0 %v414
      %v480 = vpop.f32.mrf.mxu0
      %v481 = vadd.f32 %v321, %v480
      %v482 = vpop.f32.mrf.mxu0
      %v483 = vadd.f32 %v321, %v482
      %484 = vmatmul.bf16.gmra.mxu0 %v417
      %v485 = vpop.f32.mrf.mxu0
      %v486 = vadd.f32 %v321, %v485
      %v487 = vpop.f32.mrf.mxu0
      %v488 = vadd.f32 %v321, %v487
      %489 = vmatmul.bf16.gmra.mxu0 %v420
      %v490 = vpop.f32.mrf.mxu0
      %v491 = vadd.f32 %v321, %v490
      %v492 = vpop.f32.mrf.mxu0
      %v493 = vadd.f32 %v321, %v492
      %494 = vmatmul.bf16.gmra.mxu0 %v423
      %v495 = vpop.f32.mrf.mxu0
      %v496 = vadd.f32 %v321, %v495
      %v497 = vpop.f32.mrf.mxu0
      %v498 = vadd.f32 %v321, %v497
      %499 = vmatmul.bf16.gmra.mxu0 %v426
      %v500 = vpop.f32.mrf.mxu0
      %v501 = vadd.f32 %v321, %v500
      %v502 = vpop.f32.mrf.mxu0
      %v503 = vadd.f32 %v321, %v502
      %504 = vmatmul.bf16.gmra.mxu0 %v429
      %v505 = vpop.f32.mrf.mxu0
      %v506 = vadd.f32 %v321, %v505
      %v507 = vpop.f32.mrf.mxu0
      %v508 = vadd.f32 %v321, %v507
      %509 = vmatmul.bf16.gmra.mxu0 %v432
      %v510 = vpop.f32.mrf.mxu0
      %v511 = vadd.f32 %v321, %v510
      %v512 = vpop.f32.mrf.mxu0
      %v513 = vadd.f32 %v321, %v512
      %514 = vmatmul.bf16.gmra.mxu0 %v435
      %v515 = vpop.f32.mrf.mxu0
      %v516 = vadd.f32 %v321, %v515
      %v517 = vpop.f32.mrf.mxu0
      %v518 = vadd.f32 %v321, %v517
      %519 = vmatmul.bf16.gmra.mxu0 %v438
      %v520 = vpop.f32.mrf.mxu0
      %v521 = vadd.f32 %v321, %v520
      %v522 = vpop.f32.mrf.mxu0
      %v523 = vadd.f32 %v321, %v522
      %524 = vmatmul.bf16.gmra.mxu0 %v441
      %v525 = vpop.f32.mrf.mxu0
      %v526 = vadd.f32 %v321, %v525
      %v527 = vpop.f32.mrf.mxu0
      %v528 = vadd.f32 %v321, %v527
      %529 = vmatmul.bf16.gmra.mxu0 %v444
      %v530 = vpop.f32.mrf.mxu0
      %v531 = vadd.f32 %v321, %v530
      %v532 = vpop.f32.mrf.mxu0
      %v533 = vadd.f32 %v321, %v532
      %534 = vmatmul.bf16.gmra.mxu0 %v447
      %v535 = vpop.f32.mrf.mxu0
      %v536 = vadd.f32 %v321, %v535
      %v537 = vpop.f32.mrf.mxu0
      %v538 = vadd.f32 %v321, %v537
      %539 = vmatmul.bf16.gmra.mxu0 %v450
      %v540 = vpop.f32.mrf.mxu0
      %v541 = vadd.f32 %v321, %v540
      %v542 = vpop.f32.mrf.mxu0
      %v543 = vadd.f32 %v321, %v542
      %544 = vdwg.mxu0
      %v545 = vld [vmem:[%s274] sm:$0xf]
      %v546 = vld [vmem:[%s274 + $0x4] sm:$0xf]
      %v547 = vld [vmem:[%s274 + $0x8] sm:$0xf]
      %v548 = vld [vmem:[%s274 + $0xc] sm:$0xf]
      %v549 = vld [vmem:[%s274 + $0x10] sm:$0xf]
      %v550 = vld [vmem:[%s274 + $0x14] sm:$0xf]
      %v551 = vld [vmem:[%s274 + $0x18] sm:$0xf]
      %v552 = vld [vmem:[%s274 + $0x1c] sm:$0xf]
      %v553 = vld [vmem:[%s274 + $0x20] sm:$0xf]
      %v554 = vld [vmem:[%s274 + $0x24] sm:$0xf]
      %v555 = vld [vmem:[%s274 + $0x28] sm:$0xf]
      %v556 = vld [vmem:[%s274 + $0x2c] sm:$0xf]
      %v557 = vld [vmem:[%s274 + $0x30] sm:$0xf]
      %v558 = vld [vmem:[%s274 + $0x34] sm:$0xf]
      %v559 = vld [vmem:[%s274 + $0x38] sm:$0xf]
      %v560 = vld [vmem:[%s274 + $0x3c] sm:$0xf]
      %v561 = vld [vmem:[%s274 + $0x40] sm:$0xf]
      %v562 = vld [vmem:[%s274 + $0x44] sm:$0xf]
      %v563 = vld [vmem:[%s274 + $0x48] sm:$0xf]
      %v564 = vld [vmem:[%s274 + $0x4c] sm:$0xf]
      %v565 = vld [vmem:[%s274 + $0x50] sm:$0xf]
      %v566 = vld [vmem:[%s274 + $0x54] sm:$0xf]
      %v567 = vld [vmem:[%s274 + $0x58] sm:$0xf]
      %v568 = vld [vmem:[%s274 + $0x5c] sm:$0xf]
      %v569 = vld [vmem:[%s274 + $0x60] sm:$0xf]
      %v570 = vld [vmem:[%s274 + $0x64] sm:$0xf]
      %v571 = vld [vmem:[%s274 + $0x68] sm:$0xf]
      %v572 = vld [vmem:[%s274 + $0x6c] sm:$0xf]
      %v573 = vld [vmem:[%s274 + $0x70] sm:$0xf]
      %v574 = vld [vmem:[%s274 + $0x74] sm:$0xf]
      %v575 = vld [vmem:[%s274 + $0x78] sm:$0xf]
      %v576 = vld [vmem:[%s274 + $0x7c] sm:$0xf]
      %v577 = vunpack.c.l.bf16 %v545
      %v578 = vunpack.c.l.bf16 %v546
      %v579 = vunpack.c.l.bf16 %v547
      %v580 = vunpack.c.l.bf16 %v548
      %v581 = vunpack.c.l.bf16 %v549
      %v582 = vunpack.c.l.bf16 %v550
      %v583 = vunpack.c.l.bf16 %v551
      %v584 = vunpack.c.l.bf16 %v552
      %v585 = vunpack.c.l.bf16 %v553
      %v586 = vunpack.c.l.bf16 %v554
      %v587 = vunpack.c.l.bf16 %v555
      %v588 = vunpack.c.l.bf16 %v556
      %v589 = vunpack.c.l.bf16 %v557
      %v590 = vunpack.c.l.bf16 %v558
      %v591 = vunpack.c.l.bf16 %v559
      %v592 = vunpack.c.l.bf16 %v560
      %v593 = vunpack.c.l.bf16 %v561
      %v594 = vunpack.c.l.bf16 %v562
      %v595 = vunpack.c.l.bf16 %v563
      %v596 = vunpack.c.l.bf16 %v564
      %v597 = vunpack.c.l.bf16 %v565
      %v598 = vunpack.c.l.bf16 %v566
      %v599 = vunpack.c.l.bf16 %v567
      %v600 = vunpack.c.l.bf16 %v568
      %v601 = vunpack.c.l.bf16 %v569
      %v602 = vunpack.c.l.bf16 %v570
      %v603 = vunpack.c.l.bf16 %v571
      %v604 = vunpack.c.l.bf16 %v572
      %v605 = vunpack.c.l.bf16 %v573
      %v606 = vunpack.c.l.bf16 %v574
      %v607 = vunpack.c.l.bf16 %v575
      %v608 = vunpack.c.l.bf16 %v576
      %v609 = vadd.f32 %v466, %v577
      %v610 = vadd.f32 %v468, %v578
      %v611 = vadd.f32 %v471, %v579
      %v612 = vadd.f32 %v473, %v580
      %v613 = vadd.f32 %v476, %v581
      %v614 = vadd.f32 %v478, %v582
      %v615 = vadd.f32 %v481, %v583
      %v616 = vadd.f32 %v483, %v584
      %v617 = vadd.f32 %v486, %v585
      %v618 = vadd.f32 %v488, %v586
      %v619 = vadd.f32 %v491, %v587
      %v620 = vadd.f32 %v493, %v588
      %v621 = vadd.f32 %v496, %v589
      %v622 = vadd.f32 %v498, %v590
      %v623 = vadd.f32 %v501, %v591
      %v624 = vadd.f32 %v503, %v592
      %v625 = vadd.f32 %v506, %v593
      %v626 = vadd.f32 %v508, %v594
      %v627 = vadd.f32 %v511, %v595
      %v628 = vadd.f32 %v513, %v596
      %v629 = vadd.f32 %v516, %v597
      %v630 = vadd.f32 %v518, %v598
      %v631 = vadd.f32 %v521, %v599
      %v632 = vadd.f32 %v523, %v600
      %v633 = vadd.f32 %v526, %v601
      %v634 = vadd.f32 %v528, %v602
      %v635 = vadd.f32 %v531, %v603
      %v636 = vadd.f32 %v533, %v604
      %v637 = vadd.f32 %v536, %v605
      %v638 = vadd.f32 %v538, %v606
      %v639 = vadd.f32 %v541, %v607
      %v640 = vadd.f32 %v543, %v608
      %v641 = vmax.f32 %v609, 0.0
      %v642 = vmax.f32 %v610, 0.0
      %v643 = vmax.f32 %v611, 0.0
      %v644 = vmax.f32 %v612, 0.0
      %v645 = vmax.f32 %v613, 0.0
      %v646 = vmax.f32 %v614, 0.0
      %v647 = vmax.f32 %v615, 0.0
      %v648 = vmax.f32 %v616, 0.0
      %v649 = vmax.f32 %v617, 0.0
      %v650 = vmax.f32 %v618, 0.0
      %v651 = vmax.f32 %v619, 0.0
      %v652 = vmax.f32 %v620, 0.0
      %v653 = vmax.f32 %v621, 0.0
      %v654 = vmax.f32 %v622, 0.0
      %v655 = vmax.f32 %v623, 0.0
      %v656 = vmax.f32 %v624, 0.0
      %v657 = vmax.f32 %v625, 0.0
      %v658 = vmax.f32 %v626, 0.0
      %v659 = vmax.f32 %v627, 0.0
      %v660 = vmax.f32 %v628, 0.0
      %v661 = vmax.f32 %v629, 0.0
      %v662 = vmax.f32 %v630, 0.0
      %v663 = vmax.f32 %v631, 0.0
      %v664 = vmax.f32 %v632, 0.0
      %v665 = vmax.f32 %v633, 0.0
      %v666 = vmax.f32 %v634, 0.0
      %v667 = vmax.f32 %v635, 0.0
      %v668 = vmax.f32 %v636, 0.0
      %v669 = vmax.f32 %v637, 0.0
      %v670 = vmax.f32 %v638, 0.0
      %v671 = vmax.f32 %v639, 0.0
      %v672 = vmax.f32 %v640, 0.0
      %v673 = vpack.c.bf16 %v641, %v641
      %v674 = vpack.c.bf16 %v642, %v642
      %v675 = vpack.c.bf16 %v643, %v643
      %v676 = vpack.c.bf16 %v644, %v644
      %v677 = vpack.c.bf16 %v645, %v645
      %v678 = vpack.c.bf16 %v646, %v646
      %v679 = vpack.c.bf16 %v647, %v647
      %v680 = vpack.c.bf16 %v648, %v648
      %v681 = vpack.c.bf16 %v649, %v649
      %v682 = vpack.c.bf16 %v650, %v650
      %v683 = vpack.c.bf16 %v651, %v651
      %v684 = vpack.c.bf16 %v652, %v652
      %v685 = vpack.c.bf16 %v653, %v653
      %v686 = vpack.c.bf16 %v654, %v654
      %v687 = vpack.c.bf16 %v655, %v655
      %v688 = vpack.c.bf16 %v656, %v656
      %v689 = vpack.c.bf16 %v657, %v657
      %v690 = vpack.c.bf16 %v658, %v658
      %v691 = vpack.c.bf16 %v659, %v659
      %v692 = vpack.c.bf16 %v660, %v660
      %v693 = vpack.c.bf16 %v661, %v661
      %v694 = vpack.c.bf16 %v662, %v662
      %v695 = vpack.c.bf16 %v663, %v663
      %v696 = vpack.c.bf16 %v664, %v664
      %v697 = vpack.c.bf16 %v665, %v665
      %v698 = vpack.c.bf16 %v666, %v666
      %v699 = vpack.c.bf16 %v667, %v667
      %v700 = vpack.c.bf16 %v668, %v668
      %v701 = vpack.c.bf16 %v669, %v669
      %v702 = vpack.c.bf16 %v670, %v670
      %v703 = vpack.c.bf16 %v671, %v671
      %v704 = vpack.c.bf16 %v672, %v672
      %vm705 = vcmask 257024
      %706 = vst.msk [vmem:[%s283] sm:$0xf] %vm705, %v673
      %707 = vst.msk [vmem:[%s283 + $0x4] sm:$0xf] %vm705, %v674
      %708 = vst.msk [vmem:[%s283 + $0x8] sm:$0xf] %vm705, %v675
      %709 = vst.msk [vmem:[%s283 + $0xc] sm:$0xf] %vm705, %v676
      %710 = vst.msk [vmem:[%s283 + $0x10] sm:$0xf] %vm705, %v677
      %711 = vst.msk [vmem:[%s283 + $0x14] sm:$0xf] %vm705, %v678
      %712 = vst.msk [vmem:[%s283 + $0x18] sm:$0xf] %vm705, %v679
      %713 = vst.msk [vmem:[%s283 + $0x1c] sm:$0xf] %vm705, %v680
      %714 = vst.msk [vmem:[%s283 + $0x20] sm:$0xf] %vm705, %v681
      %715 = vst.msk [vmem:[%s283 + $0x24] sm:$0xf] %vm705, %v682
      %716 = vst.msk [vmem:[%s283 + $0x28] sm:$0xf] %vm705, %v683
      %717 = vst.msk [vmem:[%s283 + $0x2c] sm:$0xf] %vm705, %v684
      %718 = vst.msk [vmem:[%s283 + $0x30] sm:$0xf] %vm705, %v685
      %719 = vst.msk [vmem:[%s283 + $0x34] sm:$0xf] %vm705, %v686
      %720 = vst.msk [vmem:[%s283 + $0x38] sm:$0xf] %vm705, %v687
      %721 = vst.msk [vmem:[%s283 + $0x3c] sm:$0xf] %vm705, %v688
      %722 = vst.msk [vmem:[%s283 + $0x40] sm:$0xf] %vm705, %v689
      %723 = vst.msk [vmem:[%s283 + $0x44] sm:$0xf] %vm705, %v690
      %724 = vst.msk [vmem:[%s283 + $0x48] sm:$0xf] %vm705, %v691
      %725 = vst.msk [vmem:[%s283 + $0x4c] sm:$0xf] %vm705, %v692
      %726 = vst.msk [vmem:[%s283 + $0x50] sm:$0xf] %vm705, %v693
      %727 = vst.msk [vmem:[%s283 + $0x54] sm:$0xf] %vm705, %v694
      %728 = vst.msk [vmem:[%s283 + $0x58] sm:$0xf] %vm705, %v695
      %729 = vst.msk [vmem:[%s283 + $0x5c] sm:$0xf] %vm705, %v696
      %730 = vst.msk [vmem:[%s283 + $0x60] sm:$0xf] %vm705, %v697
      %731 = vst.msk [vmem:[%s283 + $0x64] sm:$0xf] %vm705, %v698
      %732 = vst.msk [vmem:[%s283 + $0x68] sm:$0xf] %vm705, %v699
      %733 = vst.msk [vmem:[%s283 + $0x6c] sm:$0xf] %vm705, %v700
      %734 = vst.msk [vmem:[%s283 + $0x70] sm:$0xf] %vm705, %v701
      %735 = vst.msk [vmem:[%s283 + $0x74] sm:$0xf] %vm705, %v702
      %736 = vst.msk [vmem:[%s283 + $0x78] sm:$0xf] %vm705, %v703
      %737 = vst.msk [vmem:[%s283 + $0x7c] sm:$0xf] %vm705, %v704
      %s738 = smul.u32 32, %s19
      %p739 = scmp.lt.s32.totalorder %s738, 63
      %s740 = scalar_select %p739, %s738, 63
      %p741 = scmp.lt.s32.totalorder %s20, 0
      %s742 = scalar_select %p741, %s20, 0
      %s743 = sadd.s32 %s742, %s740
      %s744 = smul.addr %s743, 4
      %s745 = scalar_lea.vmem %s4, %s744
      // Predicated region
      $region37: #{_lambda_.5} parent=35 // pred_check
        %p746 = pneg %p153
      $region38: #{_lambda_.5} parent=35 // pred_check_branch
        %748 = sbr.rel (%p746) target = $region40
      $region39: #{_lambda_.5} parent=35 // pred_region
        %s749 = smul.u32 32, %s19
      $region40: #{_lambda_.5} parent=35 // pred_fallthru
        _
    $region36: #{_lambda_.5} parent=5 // pred_fallthru
      _
    %p750 = scmp.le.s32.totalorder 2, %s10
    // Predicated region
    $region41: #{_lambda_.5} parent=5 // pred_check
      %p751 = pneg %p750
    $region42: #{_lambda_.5} parent=5 // pred_check_branch
      %753 = sbr.rel (%p751) target = $region44
    $region43: #{_lambda_.5} parent=5 // pred_region
      %s754 = ssub.s32 %s10, 2
      // Predicated region
      $region45: #{_lambda_.5} parent=43 // pred_check
        %p755 = pneg %p159
      $region46: #{_lambda_.5} parent=43 // pred_check_branch
        %757 = sbr.rel (%p755) target = $region48
      $region47: #{_lambda_.5} parent=43 // pred_region
        %s758 = smul.u32 32, %s21
        %p759 = scmp.lt.s32.totalorder %s758, 63
        %s760 = scalar_select %p759, %s758, 63
        %p761 = scmp.lt.s32.totalorder %s22, 0
        %s762 = scalar_select %p761, %s22, 0
        %s763 = sadd.s32 %s762, %s760
        %s764 = smul.addr %s763, 4
        %s765 = scalar_lea.vmem %s4, %s764
      $region48: #{_lambda_.5} parent=43 // pred_fallthru
        _
    $region44: #{_lambda_.5} parent=5 // pred_fallthru
      _
  $region6: #{_lambda_.5} parent=0 // loop_footer
    %s14 = sadd.s32 1, %s10
  $region7: #{_lambda_.5} parent=0 // loop_footer_branch
    %9 = sbr.rel target = $region3
  $region8: #{_lambda_.5} parent=0 // loop_exit
    _

// kernel: _lambda_.3
$region0: #{_lambda_.3}
  #allocation0 [shape = 'u32[]', space=smem, size = 0x4, offset = 0x4, fixed_abs, tag = 'smem constant byte address 0x4 - core index']
  #allocation1 [shape = 'u32[72,128]{1,0:T(1,128)}', space=vmem, size = 0x9000, scoped, tag = 'internal scratch']
  %s0 = inlined_call_operand.vmem [shape: bf16[512,32], index: 0, kind: input, shape index: {}]
  %s1 = inlined_call_operand.vmem [shape: bf16[32,8], index: 1, kind: input, shape index: {}]
  %s2 = inlined_call_operand.vmem [shape: f32[1,8], index: 2, kind: input, shape index: {}]
  %s3 = inlined_call_operand.vmem [shape: bf16[512,8], index: 3, kind: output, shape index: {}]
  %s4 = sld [smem:[#allocation0]]
  $region45: #{_lambda_.3} parent=0
    _
  %s6 = ssub.s32 1, %s4
  %s7 = scalar_select 0, %s6, %s4
  loop: start=0, step=1, limit=4
  $region2: #{_lambda_.3} parent=0 // loop_pre_header
    _
  $region3: #{_lambda_.3} parent=0 // loop_header
    %s9 = sphi 0, %s13
    %p10 = scmp.ge.s32.totalorder %s9, 4
    %s16 = sphi 0, %s28
    %s17 = sphi 0, %s24
    %s18 = sphi 0, %s16
    %s19 = sphi 0, %s17
    %s20 = sphi 0, %s18
    %s21 = sphi 0, %s19
    %s31 = sphi 0, %s33
    %s34 = sphi 0, %s31
    %s35 = sphi 0, %s34
    %s51 = sphi 0, %s35
    %s57 = sphi 0, %s59
    %s60 = sphi 0, %s57
    %s61 = sphi 0, %s60
    %s77 = sphi 0, %s61
    %s83 = sphi 0, %s85
    %s86 = sphi 0, %s83
    %s87 = sphi 0, %s86
    %s103 = sphi 0, %s87
    %s111 = sphi 0, %s113
    %s114 = sphi 0, %s111
    %s115 = sphi 0, %s114
    %s131 = sphi 0, %s115
  $region4: #{_lambda_.3} parent=0 // loop_header_branch
    %12 = sbr.rel (%p10) target = $region8
  $region5: #{_lambda_.3} parent=0 // loop_body
    %s14 = ssub.s32 %s9, 1
    %s15 = ssub.s32 %s9, 2
    %s22 = sadd.s32 1, %s17
    %p23 = scmp.ge.s32.totalorder %s22, 1
    %s24 = scalar_select %p23, 0, %s22
    %s25 = sadd.s32 1, %s16
    %s26 = scalar_select %p23, %s25, %s16
    %p27 = scmp.ge.s32.totalorder %s26, 2
    %s28 = scalar_select %p27, 0, %s26
    %s29 = ssub.s32 %s16, %s28
    %p30 = scmp.eq.s32.totalorder %s29, 0
    %s32 = sadd.s32 %s31, 1
    %s33 = scalar_select %p30, %s31, %s32
    %p36 = pneg %p30
    %p37 = scmp.eq.s32.totalorder %s9, 1
    %p38 = por %p36, %p37
    %p39 = scmp.ne.s32.totalorder %s31, %s34
    %p40 = scmp.eq.s32.totalorder %s9, 0
    %p41 = por %p39, %p40
    %p42 = scmp.ne.s32.totalorder %s31, %s34
    %p43 = scmp.eq.s32.totalorder %s14, 1
    %p44 = por %p42, %p43
    %p45 = scmp.ne.s32.totalorder %s34, %s35
    %p46 = scmp.eq.s32.totalorder %s14, 0
    %p47 = por %p45, %p46
    %p48 = scmp.ne.s32.totalorder %s34, %s35
    %p49 = scmp.eq.s32.totalorder %s15, 1
    %p50 = por %p48, %p49
    %p52 = scmp.ne.s32.totalorder %s35, %s51
    %p53 = scmp.eq.s32.totalorder %s15, 0
    %p54 = por %p52, %p53
    %s55 = ssub.s32 %s17, %s24
    %p56 = scmp.eq.s32.totalorder %s55, 0
    %s58 = sadd.s32 %s57, 1
    %s59 = scalar_select %p56, %s57, %s58
    %p62 = pneg %p56
    %p63 = scmp.eq.s32.totalorder %s9, 1
    %p64 = por %p62, %p63
    %p65 = scmp.ne.s32.totalorder %s57, %s60
    %p66 = scmp.eq.s32.totalorder %s9, 0
    %p67 = por %p65, %p66
    %p68 = scmp.ne.s32.totalorder %s57, %s60
    %p69 = scmp.eq.s32.totalorder %s14, 1
    %p70 = por %p68, %p69
    %p71 = scmp.ne.s32.totalorder %s60, %s61
    %p72 = scmp.eq.s32.totalorder %s14, 0
    %p73 = por %p71, %p72
    %p74 = scmp.ne.s32.totalorder %s60, %s61
    %p75 = scmp.eq.s32.totalorder %s15, 1
    %p76 = por %p74, %p75
    %p78 = scmp.ne.s32.totalorder %s61, %s77
    %p79 = scmp.eq.s32.totalorder %s15, 0
    %p80 = por %p78, %p79
    %s81 = ssub.s32 %s17, %s24
    %p82 = scmp.eq.s32.totalorder %s81, 0
    %s84 = sadd.s32 %s83, 1
    %s85 = scalar_select %p82, %s83, %s84
    %p88 = pneg %p82
    %p89 = scmp.eq.s32.totalorder %s9, 1
    %p90 = por %p88, %p89
    %p91 = scmp.ne.s32.totalorder %s83, %s86
    %p92 = scmp.eq.s32.totalorder %s9, 0
    %p93 = por %p91, %p92
    %p94 = scmp.ne.s32.totalorder %s83, %s86
    %p95 = scmp.eq.s32.totalorder %s14, 1
    %p96 = por %p94, %p95
    %p97 = scmp.ne.s32.totalorder %s86, %s87
    %p98 = scmp.eq.s32.totalorder %s14, 0
    %p99 = por %p97, %p98
    %p100 = scmp.ne.s32.totalorder %s86, %s87
    %p101 = scmp.eq.s32.totalorder %s15, 1
    %p102 = por %p100, %p101
    %p104 = scmp.ne.s32.totalorder %s87, %s103
    %p105 = scmp.eq.s32.totalorder %s15, 0
    %p106 = por %p104, %p105
    %s107 = ssub.s32 %s16, %s28
    %s108 = ssub.s32 %s17, %s24
    %s109 = sor.u32 %s107, %s108
    %p110 = scmp.eq.s32.totalorder %s109, 0
    %s112 = sadd.s32 %s111, 1
    %s113 = scalar_select %p110, %s111, %s112
    %p116 = pneg %p110
    %p117 = scmp.eq.s32.totalorder %s9, 1
    %p118 = por %p116, %p117
    %p119 = scmp.ne.s32.totalorder %s111, %s114
    %p120 = scmp.eq.s32.totalorder %s9, 0
    %p121 = por %p119, %p120
    %p122 = scmp.ne.s32.totalorder %s111, %s114
    %p123 = scmp.eq.s32.totalorder %s14, 1
    %p124 = por %p122, %p123
    %p125 = scmp.ne.s32.totalorder %s114, %s115
    %p126 = scmp.eq.s32.totalorder %s14, 0
    %p127 = por %p125, %p126
    %p128 = scmp.ne.s32.totalorder %s114, %s115
    %p129 = scmp.eq.s32.totalorder %s15, 1
    %p130 = por %p128, %p129
    %p132 = scmp.ne.s32.totalorder %s115, %s131
    %p133 = scmp.eq.s32.totalorder %s15, 0
    %p134 = por %p132, %p133
    %p135 = scmp.le.s32.totalorder 1, %s9
    %p136 = scmp.lt.s32.totalorder %s9, 3
    %p137 = pnand %p135, %p136
    %p138 = pneg %p137
    // Predicated region
    $region9: #{_lambda_.3} parent=5 // pred_check
      _
    $region10: #{_lambda_.3} parent=5 // pred_check_branch
      %140 = sbr.rel (%p137) target = $region12
    $region11: #{_lambda_.3} parent=5 // pred_region
      %s141 = ssub.s32 %s9, 1
      // Predicated region
      $region13: #{_lambda_.3} parent=11 // pred_check
        %p142 = pneg %p73
      $region14: #{_lambda_.3} parent=11 // pred_check_branch
        %144 = sbr.rel (%p142) target = $region16
      $region15: #{_lambda_.3} parent=11 // pred_region
        %p145 = scmp.lt.s32.totalorder %s19, 0
        %s146 = scalar_select %p145, %s19, 0
        %s147 = smul.addr %s146, 4
        %s148 = scalar_lea.vmem %s1, %s147
      $region16: #{_lambda_.3} parent=11 // pred_fallthru
        _
      // Predicated region
      $region17: #{_lambda_.3} parent=11 // pred_check
        %p149 = pneg %p99
      $region18: #{_lambda_.3} parent=11 // pred_check_branch
        %151 = sbr.rel (%p149) target = $region20
      $region19: #{_lambda_.3} parent=11 // pred_region
        %p152 = scmp.lt.s32.totalorder %s19, 0
        %s153 = scalar_select %p152, %s19, 0
        %s154 = scalar_lea.vmem %s2, %s153
      $region20: #{_lambda_.3} parent=11 // pred_fallthru
        _
    $region12: #{_lambda_.3} parent=5 // pred_fallthru
      _
    %p155 = scmp.lt.s32.totalorder %s9, 2
    // Predicated region
    $region21: #{_lambda_.3} parent=5 // pred_check
      %p156 = pneg %p155
    $region22: #{_lambda_.3} parent=5 // pred_check_branch
      %158 = sbr.rel (%p156) target = $region24
    $region23: #{_lambda_.3} parent=5 // pred_region
      // Predicated region
      $region25: #{_lambda_.3} parent=23 // pred_check
        %p159 = pneg %p41
      $region26: #{_lambda_.3} parent=23 // pred_check_branch
        %161 = sbr.rel (%p159) target = $region28
      $region27: #{_lambda_.3} parent=23 // pred_region
        %s162 = smul.u32 32, %s16
        %p163 = scmp.lt.s32.totalorder %s162, 63
        %s164 = scalar_select %p163, %s162, 63
        %s165 = smul.addr %s164, 4
        %s166 = scalar_lea.vmem %s0, %s165
        %s167 = smul.u32 32, %s16
      $region28: #{_lambda_.3} parent=23 // pred_fallthru
        _
    $region24: #{_lambda_.3} parent=5 // pred_fallthru
      _
    %p168 = scmp.le.s32.totalorder 1, %s9
    %p169 = scmp.lt.s32.totalorder %s9, 3
    %p170 = pnand %p168, %p169
    %p171 = pneg %p170
    // Predicated region
    $region29: #{_lambda_.3} parent=5 // pred_check
      _
    $region30: #{_lambda_.3} parent=5 // pred_check_branch
      %173 = sbr.rel (%p170) target = $region32
    $region31: #{_lambda_.3} parent=5 // pred_region
      %s174 = ssub.s32 %s9, 1
      %s175 = smul.u32 32, %s18
      %p176 = scmp.lt.s32.totalorder %s175, 63
      %s177 = scalar_select %p176, %s175, 63
      %s178 = smul.addr %s177, 4
      %s179 = scalar_lea.vmem %s0, %s178
      %p180 = pneg %p47
      %p181 = pneg %p44
      %p182 = scmp.lt.s32.totalorder %s19, 0
      %s183 = scalar_select %p182, %s19, 0
      %s184 = smul.addr %s183, 4
      %s185 = scalar_lea.vmem %s1, %s184
      %p186 = pneg %p73
      %p187 = pneg %p70
      %p188 = scmp.lt.s32.totalorder %s19, 0
      %s189 = scalar_select %p188, %s19, 0
      %s190 = scalar_lea.vmem %s2, %s189
      %p191 = pneg %p99
      %p192 = pneg %p96
      %p193 = pneg %p127
      %p194 = pneg %p124
      %s195 = smul.u32 32, %s18
      %p196 = scmp.lt.s32.totalorder %s195, 63
      %s197 = scalar_select %p196, %s195, 63
      %p198 = scmp.lt.s32.totalorder %s19, 0
      %s199 = scalar_select %p198, %s19, 0
      %s200 = sadd.s32 %s199, %s197
      %s201 = smul.addr %s200, 4
      %s202 = scalar_lea.vmem %s3, %s201
      %s203 = smul.u32 32, %s18
      %p204 = scmp.lt.s32.totalorder %s203, 63
      %s205 = scalar_select %p204, %s203, 63
      %s206 = smul.addr %s205, 4
      %s207 = scalar_lea.vmem %s0, %s206
      %s208 = smul.u32 32, %s18
      %p209 = scmp.lt.s32.totalorder %s19, 0
      %s210 = scalar_select %p209, %s19, 0
      %s211 = smul.addr %s210, 4
      %s212 = scalar_lea.vmem %s1, %s211
      %p213 = scmp.lt.s32.totalorder %s19, 0
      %s214 = scalar_select %p213, %s19, 0
      %s215 = scalar_lea.vmem %s2, %s214
      %s216 = smul.u32 32, %s18
      %p217 = scmp.lt.s32.totalorder %s216, 63
      %s218 = scalar_select %p217, %s216, 63
      %p219 = scmp.lt.s32.totalorder %s19, 0
      %s220 = scalar_select %p219, %s19, 0
      %s221 = sadd.s32 %s220, %s218
      %s222 = smul.addr %s221, 4
      %s223 = scalar_lea.vmem %s3, %s222
      %s224 = smul.u32 32, %s18
      %v226 = vld [vmem:[%s207] sm:$0xf]
      %v227 = vld [vmem:[%s207 + $0x4] sm:$0xf]
      %v228 = vld [vmem:[%s207 + $0x8] sm:$0xf]
      %v229 = vld [vmem:[%s207 + $0xc] sm:$0xf]
      %v230 = vld [vmem:[%s207 + $0x10] sm:$0xf]
      %v231 = vld [vmem:[%s207 + $0x14] sm:$0xf]
      %v232 = vld [vmem:[%s207 + $0x18] sm:$0xf]
      %v233 = vld [vmem:[%s207 + $0x1c] sm:$0xf]
      %v234 = vld [vmem:[%s207 + $0x20] sm:$0xf]
      %v235 = vld [vmem:[%s207 + $0x24] sm:$0xf]
      %v236 = vld [vmem:[%s207 + $0x28] sm:$0xf]
      %v237 = vld [vmem:[%s207 + $0x2c] sm:$0xf]
      %v238 = vld [vmem:[%s207 + $0x30] sm:$0xf]
      %v239 = vld [vmem:[%s207 + $0x34] sm:$0xf]
      %v240 = vld [vmem:[%s207 + $0x38] sm:$0xf]
      %v241 = vld [vmem:[%s207 + $0x3c] sm:$0xf]
      %v242 = vld [vmem:[%s207 + $0x40] sm:$0xf]
      %v243 = vld [vmem:[%s207 + $0x44] sm:$0xf]
      %v244 = vld [vmem:[%s207 + $0x48] sm:$0xf]
      %v245 = vld [vmem:[%s207 + $0x4c] sm:$0xf]
      %v246 = vld [vmem:[%s207 + $0x50] sm:$0xf]
      %v247 = vld [vmem:[%s207 + $0x54] sm:$0xf]
      %v248 = vld [vmem:[%s207 + $0x58] sm:$0xf]
      %v249 = vld [vmem:[%s207 + $0x5c] sm:$0xf]
      %v250 = vld [vmem:[%s207 + $0x60] sm:$0xf]
      %v251 = vld [vmem:[%s207 + $0x64] sm:$0xf]
      %v252 = vld [vmem:[%s207 + $0x68] sm:$0xf]
      %v253 = vld [vmem:[%s207 + $0x6c] sm:$0xf]
      %v254 = vld [vmem:[%s207 + $0x70] sm:$0xf]
      %v255 = vld [vmem:[%s207 + $0x74] sm:$0xf]
      %v256 = vld [vmem:[%s207 + $0x78] sm:$0xf]
      %v257 = vld [vmem:[%s207 + $0x7c] sm:$0xf]
      %v258 = vld [vmem:[%s212] sm:$0xf]
      %v259 = vld [vmem:[%s212 + $0x4] sm:$0xf]
      %v260 = vld [vmem:[%s212 + $0x8] sm:$0xf]
      %v261 = vld [vmem:[%s212 + $0xc] sm:$0xf]
      %v262 = vld [vmem:[%s215] sm:$0x1]
      %v264 = vperm.slane %v262, 0
      %v298 = vunpack.c.l.b16 %v226
      %v299 = vunpack.c.l.b16 %v227
      %v300 = vunpack.c.l.b16 %v228
      %v301 = vunpack.c.l.b16 %v229
      %v302 = vunpack.c.l.b16 %v230
      %v303 = vunpack.c.l.b16 %v231
      %v304 = vunpack.c.l.b16 %v232
      %v305 = vunpack.c.l.b16 %v233
      %v306 = vunpack.c.l.b16 %v234
      %v307 = vunpack.c.l.b16 %v235
      %v308 = vunpack.c.l.b16 %v236
      %v309 = vunpack.c.l.b16 %v237
      %v310 = vunpack.c.l.b16 %v238
      %v311 = vunpack.c.l.b16 %v239
      %v312 = vunpack.c.l.b16 %v240
      %v313 = vunpack.c.l.b16 %v241
      %v314 = vunpack.c.l.b16 %v242
      %v315 = vunpack.c.l.b16 %v243
      %v316 = vunpack.c.l.b16 %v244
      %v317 = vunpack.c.l.b16 %v245
      %v318 = vunpack.c.l.b16 %v246
      %v319 = vunpack.c.l.b16 %v247
      %v320 = vunpack.c.l.b16 %v248
      %v321 = vunpack.c.l.b16 %v249
      %v322 = vunpack.c.l.b16 %v250
      %v323 = vunpack.c.l.b16 %v251
      %v324 = vunpack.c.l.b16 %v252
      %v325 = vunpack.c.l.b16 %v253
      %v326 = vunpack.c.l.b16 %v254
      %v327 = vunpack.c.l.b16 %v255
      %v328 = vunpack.c.l.b16 %v256
      %v329 = vunpack.c.l.b16 %v257
      %v330 = vpack.c.b16 %v299, %v298
      %v331 = vpack.c.b16 %v301, %v300
      %v332 = vpack.c.b16 %v303, %v302
      %v333 = vpack.c.b16 %v305, %v304
      %v334 = vpack.c.b16 %v307, %v306
      %v335 = vpack.c.b16 %v309, %v308
      %v336 = vpack.c.b16 %v311, %v310
      %v337 = vpack.c.b16 %v313, %v312
      %v338 = vpack.c.b16 %v315, %v314
      %v339 = vpack.c.b16 %v317, %v316
      %v340 = vpack.c.b16 %v319, %v318
      %v341 = vpack.c.b16 %v321, %v320
      %v342 = vpack.c.b16 %v323, %v322
      %v343 = vpack.c.b16 %v325, %v324
      %v344 = vpack.c.b16 %v327, %v326
      %v345 = vpack.c.b16 %v329, %v328
      %v350 = vunpack.c.l.b16 %v258
      %v351 = vunpack.c.l.b16 %v259
      %v352 = vunpack.c.l.b16 %v260
      %v353 = vunpack.c.l.b16 %v261
      %v354 = vpack.c.b16 %v351, %v350
      %v355 = vpack.c.b16 %v353, %v352
      %vm358 = vcmask 261120
      %v360 = vsel %vm358, %v330, 0
      %v363 = vsel %vm358, %v331, 0
      %v366 = vsel %vm358, %v332, 0
      %v369 = vsel %vm358, %v333, 0
      %v372 = vsel %vm358, %v334, 0
      %v375 = vsel %vm358, %v335, 0
      %v378 = vsel %vm358, %v336, 0
      %v381 = vsel %vm358, %v337, 0
      %v384 = vsel %vm358, %v338, 0
      %v387 = vsel %vm358, %v339, 0
      %v390 = vsel %vm358, %v340, 0
      %v393 = vsel %vm358, %v341, 0
      %v396 = vsel %vm358, %v342, 0
      %v399 = vsel %vm358, %v343, 0
      %v402 = vsel %vm358, %v344, 0
      %v405 = vsel %vm358, %v345, 0
      %407 = vmatpush.bf16.msra.mxu0 0
      %408 = vmatpush.bf16.msra.mxu0 0
      %409 = vmatpush.bf16.msra.mxu0 0
      %410 = vmatpush.bf16.msra.mxu0 0
      %411 = vmatpush.bf16.msra.mxu0 0
      %412 = vmatpush.bf16.msra.mxu0 0
      %413 = vmatpush.bf16.msra.mxu0 %v355
      %414 = vmatpush.bf16.msra.mxu0 %v354
      %415 = vmatmul.bf16.gmra.mxu0 %v360
      %v416 = vpop.f32.mrf.mxu0
      %v417 = vadd.f32 %v264, %v416
      %v418 = vpop.f32.mrf.mxu0
      %v419 = vadd.f32 %v264, %v418
      %420 = vmatmul.bf16.gmra.mxu0 %v363
      %v421 = vpop.f32.mrf.mxu0
      %v422 = vadd.f32 %v264, %v421
      %v423 = vpop.f32.mrf.mxu0
      %v424 = vadd.f32 %v264, %v423
      %425 = vmatmul.bf16.gmra.mxu0 %v366
      %v426 = vpop.f32.mrf.mxu0
      %v427 = vadd.f32 %v264, %v426
      %v428 = vpop.f32.mrf.mxu0
      %v429 = vadd.f32 %v264, %v428
      %430 = vmatmul.bf16.gmra.mxu0 %v369
      %v431 = vpop.f32.mrf.mxu0
      %v432 = vadd.f32 %v264, %v431
      %v433 = vpop.f32.mrf.mxu0
      %v434 = vadd.f32 %v264, %v433
      %435 = vmatmul.bf16.gmra.mxu0 %v372
      %v436 = vpop.f32.mrf.mxu0
      %v437 = vadd.f32 %v264, %v436
      %v438 = vpop.f32.mrf.mxu0
      %v439 = vadd.f32 %v264, %v438
      %440 = vmatmul.bf16.gmra.mxu0 %v375
      %v441 = vpop.f32.mrf.mxu0
      %v442 = vadd.f32 %v264, %v441
      %v443 = vpop.f32.mrf.mxu0
      %v444 = vadd.f32 %v264, %v443
      %445 = vmatmul.bf16.gmra.mxu0 %v378
      %v446 = vpop.f32.mrf.mxu0
      %v447 = vadd.f32 %v264, %v446
      %v448 = vpop.f32.mrf.mxu0
      %v449 = vadd.f32 %v264, %v448
      %450 = vmatmul.bf16.gmra.mxu0 %v381
      %v451 = vpop.f32.mrf.mxu0
      %v452 = vadd.f32 %v264, %v451
      %v453 = vpop.f32.mrf.mxu0
      %v454 = vadd.f32 %v264, %v453
      %455 = vmatmul.bf16.gmra.mxu0 %v384
      %v456 = vpop.f32.mrf.mxu0
      %v457 = vadd.f32 %v264, %v456
      %v458 = vpop.f32.mrf.mxu0
      %v459 = vadd.f32 %v264, %v458
      %460 = vmatmul.bf16.gmra.mxu0 %v387
      %v461 = vpop.f32.mrf.mxu0
      %v462 = vadd.f32 %v264, %v461
      %v463 = vpop.f32.mrf.mxu0
      %v464 = vadd.f32 %v264, %v463
      %465 = vmatmul.bf16.gmra.mxu0 %v390
      %v466 = vpop.f32.mrf.mxu0
      %v467 = vadd.f32 %v264, %v466
      %v468 = vpop.f32.mrf.mxu0
      %v469 = vadd.f32 %v264, %v468
      %470 = vmatmul.bf16.gmra.mxu0 %v393
      %v471 = vpop.f32.mrf.mxu0
      %v472 = vadd.f32 %v264, %v471
      %v473 = vpop.f32.mrf.mxu0
      %v474 = vadd.f32 %v264, %v473
      %475 = vmatmul.bf16.gmra.mxu0 %v396
      %v476 = vpop.f32.mrf.mxu0
      %v477 = vadd.f32 %v264, %v476
      %v478 = vpop.f32.mrf.mxu0
      %v479 = vadd.f32 %v264, %v478
      %480 = vmatmul.bf16.gmra.mxu0 %v399
      %v481 = vpop.f32.mrf.mxu0
      %v482 = vadd.f32 %v264, %v481
      %v483 = vpop.f32.mrf.mxu0
      %v484 = vadd.f32 %v264, %v483
      %485 = vmatmul.bf16.gmra.mxu0 %v402
      %v486 = vpop.f32.mrf.mxu0
      %v487 = vadd.f32 %v264, %v486
      %v488 = vpop.f32.mrf.mxu0
      %v489 = vadd.f32 %v264, %v488
      %490 = vmatmul.bf16.gmra.mxu0 %v405
      %v491 = vpop.f32.mrf.mxu0
      %v492 = vadd.f32 %v264, %v491
      %v493 = vpop.f32.mrf.mxu0
      %v494 = vadd.f32 %v264, %v493
      %495 = vdwg.mxu0
      %v496 = vmax.f32 %v417, 0.0
      %v497 = vmax.f32 %v419, 0.0
      %v498 = vmax.f32 %v422, 0.0
      %v499 = vmax.f32 %v424, 0.0
      %v500 = vmax.f32 %v427, 0.0
      %v501 = vmax.f32 %v429, 0.0
      %v502 = vmax.f32 %v432, 0.0
      %v503 = vmax.f32 %v434, 0.0
      %v504 = vmax.f32 %v437, 0.0
      %v505 = vmax.f32 %v439, 0.0
      %v506 = vmax.f32 %v442, 0.0
      %v507 = vmax.f32 %v444, 0.0
      %v508 = vmax.f32 %v447, 0.0
      %v509 = vmax.f32 %v449, 0.0
      %v510 = vmax.f32 %v452, 0.0
      %v511 = vmax.f32 %v454, 0.0
      %v512 = vmax.f32 %v457, 0.0
      %v513 = vmax.f32 %v459, 0.0
      %v514 = vmax.f32 %v462, 0.0
      %v515 = vmax.f32 %v464, 0.0
      %v516 = vmax.f32 %v467, 0.0
      %v517 = vmax.f32 %v469, 0.0
      %v518 = vmax.f32 %v472, 0.0
      %v519 = vmax.f32 %v474, 0.0
      %v520 = vmax.f32 %v477, 0.0
      %v521 = vmax.f32 %v479, 0.0
      %v522 = vmax.f32 %v482, 0.0
      %v523 = vmax.f32 %v484, 0.0
      %v524 = vmax.f32 %v487, 0.0
      %v525 = vmax.f32 %v489, 0.0
      %v526 = vmax.f32 %v492, 0.0
      %v527 = vmax.f32 %v494, 0.0
      %v528 = vpack.c.bf16 %v496, %v496
      %v529 = vpack.c.bf16 %v497, %v497
      %v530 = vpack.c.bf16 %v498, %v498
      %v531 = vpack.c.bf16 %v499, %v499
      %v532 = vpack.c.bf16 %v500, %v500
      %v533 = vpack.c.bf16 %v501, %v501
      %v534 = vpack.c.bf16 %v502, %v502
      %v535 = vpack.c.bf16 %v503, %v503
      %v536 = vpack.c.bf16 %v504, %v504
      %v537 = vpack.c.bf16 %v505, %v505
      %v538 = vpack.c.bf16 %v506, %v506
      %v539 = vpack.c.bf16 %v507, %v507
      %v540 = vpack.c.bf16 %v508, %v508
      %v541 = vpack.c.bf16 %v509, %v509
      %v542 = vpack.c.bf16 %v510, %v510
      %v543 = vpack.c.bf16 %v511, %v511
      %v544 = vpack.c.bf16 %v512, %v512
      %v545 = vpack.c.bf16 %v513, %v513
      %v546 = vpack.c.bf16 %v514, %v514
      %v547 = vpack.c.bf16 %v515, %v515
      %v548 = vpack.c.bf16 %v516, %v516
      %v549 = vpack.c.bf16 %v517, %v517
      %v550 = vpack.c.bf16 %v518, %v518
      %v551 = vpack.c.bf16 %v519, %v519
      %v552 = vpack.c.bf16 %v520, %v520
      %v553 = vpack.c.bf16 %v521, %v521
      %v554 = vpack.c.bf16 %v522, %v522
      %v555 = vpack.c.bf16 %v523, %v523
      %v556 = vpack.c.bf16 %v524, %v524
      %v557 = vpack.c.bf16 %v525, %v525
      %v558 = vpack.c.bf16 %v526, %v526
      %v559 = vpack.c.bf16 %v527, %v527
      %vm560 = vcmask 60416
      %561 = vst.msk [vmem:[%s223] sm:$0xf] %vm560, %v528
      %562 = vst.msk [vmem:[%s223 + $0x4] sm:$0xf] %vm560, %v529
      %563 = vst.msk [vmem:[%s223 + $0x8] sm:$0xf] %vm560, %v530
      %564 = vst.msk [vmem:[%s223 + $0xc] sm:$0xf] %vm560, %v531
      %565 = vst.msk [vmem:[%s223 + $0x10] sm:$0xf] %vm560, %v532
      %566 = vst.msk [vmem:[%s223 + $0x14] sm:$0xf] %vm560, %v533
      %567 = vst.msk [vmem:[%s223 + $0x18] sm:$0xf] %vm560, %v534
      %568 = vst.msk [vmem:[%s223 + $0x1c] sm:$0xf] %vm560, %v535
      %569 = vst.msk [vmem:[%s223 + $0x20] sm:$0xf] %vm560, %v536
      %570 = vst.msk [vmem:[%s223 + $0x24] sm:$0xf] %vm560, %v537
      %571 = vst.msk [vmem:[%s223 + $0x28] sm:$0xf] %vm560, %v538
      %572 = vst.msk [vmem:[%s223 + $0x2c] sm:$0xf] %vm560, %v539
      %573 = vst.msk [vmem:[%s223 + $0x30] sm:$0xf] %vm560, %v540
      %574 = vst.msk [vmem:[%s223 + $0x34] sm:$0xf] %vm560, %v541
      %575 = vst.msk [vmem:[%s223 + $0x38] sm:$0xf] %vm560, %v542
      %576 = vst.msk [vmem:[%s223 + $0x3c] sm:$0xf] %vm560, %v543
      %577 = vst.msk [vmem:[%s223 + $0x40] sm:$0xf] %vm560, %v544
      %578 = vst.msk [vmem:[%s223 + $0x44] sm:$0xf] %vm560, %v545
      %579 = vst.msk [vmem:[%s223 + $0x48] sm:$0xf] %vm560, %v546
      %580 = vst.msk [vmem:[%s223 + $0x4c] sm:$0xf] %vm560, %v547
      %581 = vst.msk [vmem:[%s223 + $0x50] sm:$0xf] %vm560, %v548
      %582 = vst.msk [vmem:[%s223 + $0x54] sm:$0xf] %vm560, %v549
      %583 = vst.msk [vmem:[%s223 + $0x58] sm:$0xf] %vm560, %v550
      %584 = vst.msk [vmem:[%s223 + $0x5c] sm:$0xf] %vm560, %v551
      %585 = vst.msk [vmem:[%s223 + $0x60] sm:$0xf] %vm560, %v552
      %586 = vst.msk [vmem:[%s223 + $0x64] sm:$0xf] %vm560, %v553
      %587 = vst.msk [vmem:[%s223 + $0x68] sm:$0xf] %vm560, %v554
      %588 = vst.msk [vmem:[%s223 + $0x6c] sm:$0xf] %vm560, %v555
      %589 = vst.msk [vmem:[%s223 + $0x70] sm:$0xf] %vm560, %v556
      %590 = vst.msk [vmem:[%s223 + $0x74] sm:$0xf] %vm560, %v557
      %591 = vst.msk [vmem:[%s223 + $0x78] sm:$0xf] %vm560, %v558
      %592 = vst.msk [vmem:[%s223 + $0x7c] sm:$0xf] %vm560, %v559
      %s593 = smul.u32 32, %s18
      %p594 = scmp.lt.s32.totalorder %s593, 63
      %s595 = scalar_select %p594, %s593, 63
      %p596 = scmp.lt.s32.totalorder %s19, 0
      %s597 = scalar_select %p596, %s19, 0
      %s598 = sadd.s32 %s597, %s595
      %s599 = smul.addr %s598, 4
      %s600 = scalar_lea.vmem %s3, %s599
      // Predicated region
      $region33: #{_lambda_.3} parent=31 // pred_check
        %p601 = pneg %p124
      $region34: #{_lambda_.3} parent=31 // pred_check_branch
        %603 = sbr.rel (%p601) target = $region36
      $region35: #{_lambda_.3} parent=31 // pred_region
        %s604 = smul.u32 32, %s18
      $region36: #{_lambda_.3} parent=31 // pred_fallthru
        _
    $region32: #{_lambda_.3} parent=5 // pred_fallthru
      _
    %p605 = scmp.le.s32.totalorder 2, %s9
    // Predicated region
    $region37: #{_lambda_.3} parent=5 // pred_check
      %p606 = pneg %p605
    $region38: #{_lambda_.3} parent=5 // pred_check_branch
      %608 = sbr.rel (%p606) target = $region40
    $region39: #{_lambda_.3} parent=5 // pred_region
      %s609 = ssub.s32 %s9, 2
      // Predicated region
      $region41: #{_lambda_.3} parent=39 // pred_check
        %p610 = pneg %p130
      $region42: #{_lambda_.3} parent=39 // pred_check_branch
        %612 = sbr.rel (%p610) target = $region44
      $region43: #{_lambda_.3} parent=39 // pred_region
        %s613 = smul.u32 32, %s20
        %p614 = scmp.lt.s32.totalorder %s613, 63
        %s615 = scalar_select %p614, %s613, 63
        %p616 = scmp.lt.s32.totalorder %s21, 0
        %s617 = scalar_select %p616, %s21, 0
        %s618 = sadd.s32 %s617, %s615
        %s619 = smul.addr %s618, 4
        %s620 = scalar_lea.vmem %s3, %s619
      $region44: #{_lambda_.3} parent=39 // pred_fallthru
        _
    $region40: #{_lambda_.3} parent=5 // pred_fallthru
      _
  $region6: #{_lambda_.3} parent=0 // loop_footer
    %s13 = sadd.s32 1, %s9
  $region7: #{_lambda_.3} parent=0 // loop_footer_branch
    %8 = sbr.rel target = $region3
  $region8: #{_lambda_.3} parent=0 // loop_exit
    _

// kernel: _lambda_.4
$region0: #{_lambda_.4}
  #allocation0 [shape = 'u32[]', space=smem, size = 0x4, offset = 0x4, fixed_abs, tag = 'smem constant byte address 0x4 - core index']
  #allocation1 [shape = 'u32[72,128]{1,0:T(1,128)}', space=vmem, size = 0x9000, scoped, tag = 'internal scratch']
  %s0 = inlined_call_operand.vmem [shape: bf16[2,18,18,8], index: 0, kind: input, shape index: {}]
  %s1 = inlined_call_operand.vmem [shape: bf16[9,8,8], index: 1, kind: input, shape index: {}]
  %s2 = inlined_call_operand.vmem [shape: f32[1,8], index: 2, kind: input, shape index: {}]
  %s3 = inlined_call_operand.vmem [shape: bf16[512,8], index: 3, kind: output, shape index: {}]
  %s4 = sld [smem:[#allocation0]]
  $region45: #{_lambda_.4} parent=0
    _
  %s6 = ssub.s32 1, %s4
  %s7 = scalar_select 0, %s6, %s4
  loop: start=0, step=1, limit=4
  $region2: #{_lambda_.4} parent=0 // loop_pre_header
    _
  $region3: #{_lambda_.4} parent=0 // loop_header
    %s9 = sphi 0, %s13
    %p10 = scmp.ge.s32.totalorder %s9, 4
    %s16 = sphi 0, %s28
    %s17 = sphi 0, %s24
    %s18 = sphi 0, %s16
    %s19 = sphi 0, %s17
    %s20 = sphi 0, %s18
    %s21 = sphi 0, %s19
    %s31 = sphi 0, %s33
    %s34 = sphi 0, %s31
    %s35 = sphi 0, %s34
    %s51 = sphi 0, %s35
    %s57 = sphi 0, %s59
    %s60 = sphi 0, %s57
    %s61 = sphi 0, %s60
    %s77 = sphi 0, %s61
    %s83 = sphi 0, %s85
    %s86 = sphi 0, %s83
    %s87 = sphi 0, %s86
    %s103 = sphi 0, %s87
    %s111 = sphi 0, %s113
    %s114 = sphi 0, %s111
    %s115 = sphi 0, %s114
    %s131 = sphi 0, %s115
  $region4: #{_lambda_.4} parent=0 // loop_header_branch
    %12 = sbr.rel (%p10) target = $region8
  $region5: #{_lambda_.4} parent=0 // loop_body
    %s14 = ssub.s32 %s9, 1
    %s15 = ssub.s32 %s9, 2
    %s22 = sadd.s32 1, %s17
    %p23 = scmp.ge.s32.totalorder %s22, 1
    %s24 = scalar_select %p23, 0, %s22
    %s25 = sadd.s32 1, %s16
    %s26 = scalar_select %p23, %s25, %s16
    %p27 = scmp.ge.s32.totalorder %s26, 2
    %s28 = scalar_select %p27, 0, %s26
    %s29 = ssub.s32 %s16, %s28
    %p30 = scmp.eq.s32.totalorder %s29, 0
    %s32 = sadd.s32 %s31, 1
    %s33 = scalar_select %p30, %s31, %s32
    %p36 = pneg %p30
    %p37 = scmp.eq.s32.totalorder %s9, 1
    %p38 = por %p36, %p37
    %p39 = scmp.ne.s32.totalorder %s31, %s34
    %p40 = scmp.eq.s32.totalorder %s9, 0
    %p41 = por %p39, %p40
    %p42 = scmp.ne.s32.totalorder %s31, %s34
    %p43 = scmp.eq.s32.totalorder %s14, 1
    %p44 = por %p42, %p43
    %p45 = scmp.ne.s32.totalorder %s34, %s35
    %p46 = scmp.eq.s32.totalorder %s14, 0
    %p47 = por %p45, %p46
    %p48 = scmp.ne.s32.totalorder %s34, %s35
    %p49 = scmp.eq.s32.totalorder %s15, 1
    %p50 = por %p48, %p49
    %p52 = scmp.ne.s32.totalorder %s35, %s51
    %p53 = scmp.eq.s32.totalorder %s15, 0
    %p54 = por %p52, %p53
    %s55 = ssub.s32 %s17, %s24
    %p56 = scmp.eq.s32.totalorder %s55, 0
    %s58 = sadd.s32 %s57, 1
    %s59 = scalar_select %p56, %s57, %s58
    %p62 = pneg %p56
    %p63 = scmp.eq.s32.totalorder %s9, 1
    %p64 = por %p62, %p63
    %p65 = scmp.ne.s32.totalorder %s57, %s60
    %p66 = scmp.eq.s32.totalorder %s9, 0
    %p67 = por %p65, %p66
    %p68 = scmp.ne.s32.totalorder %s57, %s60
    %p69 = scmp.eq.s32.totalorder %s14, 1
    %p70 = por %p68, %p69
    %p71 = scmp.ne.s32.totalorder %s60, %s61
    %p72 = scmp.eq.s32.totalorder %s14, 0
    %p73 = por %p71, %p72
    %p74 = scmp.ne.s32.totalorder %s60, %s61
    %p75 = scmp.eq.s32.totalorder %s15, 1
    %p76 = por %p74, %p75
    %p78 = scmp.ne.s32.totalorder %s61, %s77
    %p79 = scmp.eq.s32.totalorder %s15, 0
    %p80 = por %p78, %p79
    %s81 = ssub.s32 %s17, %s24
    %p82 = scmp.eq.s32.totalorder %s81, 0
    %s84 = sadd.s32 %s83, 1
    %s85 = scalar_select %p82, %s83, %s84
    %p88 = pneg %p82
    %p89 = scmp.eq.s32.totalorder %s9, 1
    %p90 = por %p88, %p89
    %p91 = scmp.ne.s32.totalorder %s83, %s86
    %p92 = scmp.eq.s32.totalorder %s9, 0
    %p93 = por %p91, %p92
    %p94 = scmp.ne.s32.totalorder %s83, %s86
    %p95 = scmp.eq.s32.totalorder %s14, 1
    %p96 = por %p94, %p95
    %p97 = scmp.ne.s32.totalorder %s86, %s87
    %p98 = scmp.eq.s32.totalorder %s14, 0
    %p99 = por %p97, %p98
    %p100 = scmp.ne.s32.totalorder %s86, %s87
    %p101 = scmp.eq.s32.totalorder %s15, 1
    %p102 = por %p100, %p101
    %p104 = scmp.ne.s32.totalorder %s87, %s103
    %p105 = scmp.eq.s32.totalorder %s15, 0
    %p106 = por %p104, %p105
    %s107 = ssub.s32 %s16, %s28
    %s108 = ssub.s32 %s17, %s24
    %s109 = sor.u32 %s107, %s108
    %p110 = scmp.eq.s32.totalorder %s109, 0
    %s112 = sadd.s32 %s111, 1
    %s113 = scalar_select %p110, %s111, %s112
    %p116 = pneg %p110
    %p117 = scmp.eq.s32.totalorder %s9, 1
    %p118 = por %p116, %p117
    %p119 = scmp.ne.s32.totalorder %s111, %s114
    %p120 = scmp.eq.s32.totalorder %s9, 0
    %p121 = por %p119, %p120
    %p122 = scmp.ne.s32.totalorder %s111, %s114
    %p123 = scmp.eq.s32.totalorder %s14, 1
    %p124 = por %p122, %p123
    %p125 = scmp.ne.s32.totalorder %s114, %s115
    %p126 = scmp.eq.s32.totalorder %s14, 0
    %p127 = por %p125, %p126
    %p128 = scmp.ne.s32.totalorder %s114, %s115
    %p129 = scmp.eq.s32.totalorder %s15, 1
    %p130 = por %p128, %p129
    %p132 = scmp.ne.s32.totalorder %s115, %s131
    %p133 = scmp.eq.s32.totalorder %s15, 0
    %p134 = por %p132, %p133
    %p135 = scmp.le.s32.totalorder 1, %s9
    %p136 = scmp.lt.s32.totalorder %s9, 3
    %p137 = pnand %p135, %p136
    %p138 = pneg %p137
    // Predicated region
    $region9: #{_lambda_.4} parent=5 // pred_check
      _
    $region10: #{_lambda_.4} parent=5 // pred_check_branch
      %140 = sbr.rel (%p137) target = $region12
    $region11: #{_lambda_.4} parent=5 // pred_region
      %s141 = ssub.s32 %s9, 1
      // Predicated region
      $region13: #{_lambda_.4} parent=11 // pred_check
        %p142 = pneg %p73
      $region14: #{_lambda_.4} parent=11 // pred_check_branch
        %144 = sbr.rel (%p142) target = $region16
      $region15: #{_lambda_.4} parent=11 // pred_region
        %p145 = scmp.lt.s32.totalorder %s19, 0
        %s146 = scalar_select %p145, %s19, 0
        %s147 = smul.addr %s146, 4
        %s148 = scalar_lea.vmem %s1, %s147
      $region16: #{_lambda_.4} parent=11 // pred_fallthru
        _
      // Predicated region
      $region17: #{_lambda_.4} parent=11 // pred_check
        %p149 = pneg %p99
      $region18: #{_lambda_.4} parent=11 // pred_check_branch
        %151 = sbr.rel (%p149) target = $region20
      $region19: #{_lambda_.4} parent=11 // pred_region
        %p152 = scmp.lt.s32.totalorder %s19, 0
        %s153 = scalar_select %p152, %s19, 0
        %s154 = scalar_lea.vmem %s2, %s153
      $region20: #{_lambda_.4} parent=11 // pred_fallthru
        _
    $region12: #{_lambda_.4} parent=5 // pred_fallthru
      _
    %p155 = scmp.lt.s32.totalorder %s9, 2
    // Predicated region
    $region21: #{_lambda_.4} parent=5 // pred_check
      %p156 = pneg %p155
    $region22: #{_lambda_.4} parent=5 // pred_check_branch
      %158 = sbr.rel (%p156) target = $region24
    $region23: #{_lambda_.4} parent=5 // pred_region
      // Predicated region
      $region25: #{_lambda_.4} parent=23 // pred_check
        %p159 = pneg %p41
      $region26: #{_lambda_.4} parent=23 // pred_check_branch
        %161 = sbr.rel (%p159) target = $region28
      $region27: #{_lambda_.4} parent=23 // pred_region
        %p162 = scmp.lt.s32.totalorder %s16, 1
        %s163 = scalar_select %p162, %s16, 1
        %s164 = smul.addr %s163, 54
        %s165 = smul.addr %s164, 4
        %s166 = scalar_lea.vmem %s0, %s165
      $region28: #{_lambda_.4} parent=23 // pred_fallthru
        _
    $region24: #{_lambda_.4} parent=5 // pred_fallthru
      _
    %p167 = scmp.le.s32.totalorder 1, %s9
    %p168 = scmp.lt.s32.totalorder %s9, 3
    %p169 = pnand %p167, %p168
    %p170 = pneg %p169
    // Predicated region
    $region29: #{_lambda_.4} parent=5 // pred_check
      _
    $region30: #{_lambda_.4} parent=5 // pred_check_branch
      %172 = sbr.rel (%p169) target = $region32
    $region31: #{_lambda_.4} parent=5 // pred_region
      %s173 = ssub.s32 %s9, 1
      %p174 = scmp.lt.s32.totalorder %s18, 1
      %s175 = scalar_select %p174, %s18, 1
      %s176 = smul.addr %s175, 54
      %s177 = smul.addr %s176, 4
      %s178 = scalar_lea.vmem %s0, %s177
      %p179 = pneg %p47
      %p180 = pneg %p44
      %p181 = scmp.lt.s32.totalorder %s19, 0
      %s182 = scalar_select %p181, %s19, 0
      %s183 = smul.addr %s182, 4
      %s184 = scalar_lea.vmem %s1, %s183
      %p185 = pneg %p73
      %p186 = pneg %p70
      %p187 = scmp.lt.s32.totalorder %s19, 0
      %s188 = scalar_select %p187, %s19, 0
      %s189 = scalar_lea.vmem %s2, %s188
      %p190 = pneg %p99
      %p191 = pneg %p96
      %p192 = pneg %p127
      %p193 = pneg %p124
      %s194 = smul.u32 32, %s18
      %p195 = scmp.lt.s32.totalorder %s194, 63
      %s196 = scalar_select %p195, %s194, 63
      %p197 = scmp.lt.s32.totalorder %s19, 0
      %s198 = scalar_select %p197, %s19, 0
      %s199 = sadd.s32 %s198, %s196
      %s200 = smul.addr %s199, 4
      %s201 = scalar_lea.vmem %s3, %s200
      %p202 = scmp.lt.s32.totalorder %s18, 1
      %s203 = scalar_select %p202, %s18, 1
      %s204 = smul.addr %s203, 54
      %s205 = smul.addr %s204, 4
      %s206 = scalar_lea.vmem %s0, %s205
      %p207 = scmp.lt.s32.totalorder %s19, 0
      %s208 = scalar_select %p207, %s19, 0
      %s209 = smul.addr %s208, 4
      %s210 = scalar_lea.vmem %s1, %s209
      %p211 = scmp.lt.s32.totalorder %s19, 0
      %s212 = scalar_select %p211, %s19, 0
      %s213 = scalar_lea.vmem %s2, %s212
      %s214 = smul.u32 32, %s18
      %p215 = scmp.lt.s32.totalorder %s214, 63
      %s216 = scalar_select %p215, %s214, 63
      %p217 = scmp.lt.s32.totalorder %s19, 0
      %s218 = scalar_select %p217, %s19, 0
      %s219 = sadd.s32 %s218, %s216
      %s220 = smul.addr %s219, 4
      %s221 = scalar_lea.vmem %s3, %s220
      %s222 = smul.u32 32, %s18
      %v224 = vld [vmem:[%s206] sm:$0xf]
      %v225 = vld [vmem:[%s206 + $0x4] sm:$0xf]
      %v226 = vld [vmem:[%s206 + $0xc] sm:$0xf]
      %v227 = vld [vmem:[%s206 + $0x10] sm:$0xf]
      %v228 = vld [vmem:[%s206 + $0x18] sm:$0xf]
      %v229 = vld [vmem:[%s206 + $0x1c] sm:$0xf]
      %v230 = vld [vmem:[%s206 + $0x24] sm:$0xf]
      %v231 = vld [vmem:[%s206 + $0x28] sm:$0xf]
      %v232 = vld [vmem:[%s206 + $0x30] sm:$0xf]
      %v233 = vld [vmem:[%s206 + $0x34] sm:$0xf]
      %v234 = vld [vmem:[%s206 + $0x3c] sm:$0xf]
      %v235 = vld [vmem:[%s206 + $0x40] sm:$0xf]
      %v236 = vld [vmem:[%s206 + $0x48] sm:$0xf]
      %v237 = vld [vmem:[%s206 + $0x4c] sm:$0xf]
      %v238 = vld [vmem:[%s206 + $0x54] sm:$0xf]
      %v239 = vld [vmem:[%s206 + $0x58] sm:$0xf]
      %v240 = vld [vmem:[%s206 + $0x60] sm:$0xf]
      %v241 = vld [vmem:[%s206 + $0x64] sm:$0xf]
      %v242 = vld [vmem:[%s206 + $0x6c] sm:$0xf]
      %v243 = vld [vmem:[%s206 + $0x70] sm:$0xf]
      %v244 = vld [vmem:[%s206 + $0x78] sm:$0xf]
      %v245 = vld [vmem:[%s206 + $0x7c] sm:$0xf]
      %v246 = vld [vmem:[%s206 + $0x84] sm:$0xf]
      %v247 = vld [vmem:[%s206 + $0x88] sm:$0xf]
      %v248 = vld [vmem:[%s206 + $0x90] sm:$0xf]
      %v249 = vld [vmem:[%s206 + $0x94] sm:$0xf]
      %v250 = vld [vmem:[%s206 + $0x9c] sm:$0xf]
      %v251 = vld [vmem:[%s206 + $0xa0] sm:$0xf]
      %v252 = vld [vmem:[%s206 + $0xa8] sm:$0xf]
      %v253 = vld [vmem:[%s206 + $0xac] sm:$0xf]
      %v254 = vld [vmem:[%s206 + $0xb4] sm:$0xf]
      %v255 = vld [vmem:[%s206 + $0xb8] sm:$0xf]
      %v256 = vld [vmem:[%s210] sm:$0xf]
      %v257 = vld [vmem:[%s206 + $0x8] sm:$0x1]
      %v258 = vld [vmem:[%s206 + $0x14] sm:$0x1]
      %v259 = vld [vmem:[%s206 + $0x20] sm:$0x1]
      %v260 = vld [vmem:[%s206 + $0x2c] sm:$0x1]
      %v261 = vld [vmem:[%s206 + $0x38] sm:$0x1]
      %v262 = vld [vmem:[%s206 + $0x44] sm:$0x1]
      %v263 = vld [vmem:[%s206 + $0x50] sm:$0x1]
      %v264 = vld [vmem:[%s206 + $0x5c] sm:$0x1]
      %v265 = vld [vmem:[%s206 + $0x68] sm:$0x1]
      %v266 = vld [vmem:[%s206 + $0x74] sm:$0x1]
      %v267 = vld [vmem:[%s206 + $0x80] sm:$0x1]
      %v268 = vld [vmem:[%s206 + $0x8c] sm:$0x1]
      %v269 = vld [vmem:[%s206 + $0x98] sm:$0x1]
      %v270 = vld [vmem:[%s206 + $0xa4] sm:$0x1]
      %v271 = vld [vmem:[%s206 + $0xb0] sm:$0x1]
      %v272 = vld [vmem:[%s206 + $0xbc] sm:$0x1]
      %vm273 = vsmask.f32 3328
      %vm274 = vsmask.f32 7440
      %vm275 = vmor %vm273, %vm274
      %v277 = vshrl.u32 %v224, 16
      %v279 = vrot.slane %v277, 4
      %v280 = vshll.u32 %v224, 16
      %v282 = vrot.slane %v280, 5
      %v283 = vor.u32 %v279, %v282
      %v284 = vrot.slane %v283, 4
      %v286 = vshll.u32 %v225, 16
      %v288 = vrot.slane %v286, 5
      %v289 = vsel %vm275, %v284, %v288
      %v290 = vshrl.u32 %v225, 16
      %v292 = vrot.slane %v290, 4
      %v293 = vor.u32 %v292, %v288
      %v294 = vrot.slane %v293, 4
      %v296 = vshll.u32 %v257, 16
      %v298 = vrot.slane %v296, 5
      %v299 = vsel %vm275, %v294, %v298
      %v301 = vshrl.u32 %v226, 16
      %v303 = vrot.slane %v301, 4
      %v304 = vshll.u32 %v226, 16
      %v306 = vrot.slane %v304, 5
      %v307 = vor.u32 %v303, %v306
      %v308 = vrot.slane %v307, 4
      %v310 = vshll.u32 %v227, 16
      %v312 = vrot.slane %v310, 5
      %v313 = vsel %vm275, %v308, %v312
      %v314 = vshrl.u32 %v227, 16
      %v316 = vrot.slane %v314, 4
      %v317 = vor.u32 %v316, %v312
      %v318 = vrot.slane %v317, 4
      %v320 = vshll.u32 %v258, 16
      %v322 = vrot.slane %v320, 5
      %v323 = vsel %vm275, %v318, %v322
      %v325 = vshrl.u32 %v228, 16
      %v327 = vrot.slane %v325, 4
      %v328 = vshll.u32 %v228, 16
      %v330 = vrot.slane %v328, 5
      %v331 = vor.u32 %v327, %v330
      %v332 = vrot.slane %v331, 4
      %v334 = vshll.u32 %v229, 16
      %v336 = vrot.slane %v334, 5
      %v337 = vsel %vm275, %v332, %v336
      %v338 = vshrl.u32 %v229, 16
      %v340 = vrot.slane %v338, 4
      %v341 = vor.u32 %v340, %v336
      %v342 = vrot.slane %v341, 4
      %v344 = vshll.u32 %v259, 16
      %v346 = vrot.slane %v344, 5
      %v347 = vsel %vm275, %v342, %v346
      %v349 = vshrl.u32 %v230, 16
      %v351 = vrot.slane %v349, 4
      %v352 = vshll.u32 %v230, 16
      %v354 = vrot.slane %v352, 5
      %v355 = vor.u32 %v351, %v354
      %v356 = vrot.slane %v355, 4
      %v358 = vshll.u32 %v231, 16
      %v360 = vrot.slane %v358, 5
      %v361 = vsel %vm275, %v356, %v360
      %v362 = vshrl.u32 %v231, 16
      %v364 = vrot.slane %v362, 4
      %v365 = vor.u32 %v364, %v360
      %v366 = vrot.slane %v365, 4
      %v368 = vshll.u32 %v260, 16
      %v370 = vrot.slane %v368, 5
      %v371 = vsel %vm275, %v366, %v370
      %v373 = vshrl.u32 %v232, 16
      %v375 = vrot.slane %v373, 4
      %v376 = vshll.u32 %v232, 16
      %v378 = vrot.slane %v376, 5
      %v379 = vor.u32 %v375, %v378
      %v380 = vrot.slane %v379, 4
      %v382 = vshll.u32 %v233, 16
      %v384 = vrot.slane %v382, 5
      %v385 = vsel %vm275, %v380, %v384
      %v386 = vshrl.u32 %v233, 16
      %v388 = vrot.slane %v386, 4
      %v389 = vor.u32 %v388, %v384
      %v390 = vrot.slane %v389, 4
      %v392 = vshll.u32 %v261, 16
      %v394 = vrot.slane %v392, 5
      %v395 = vsel %vm275, %v390, %v394
      %v397 = vshrl.u32 %v234, 16
      %v399 = vrot.slane %v397, 4
      %v400 = vshll.u32 %v234, 16
      %v402 = vrot.slane %v400, 5
      %v403 = vor.u32 %v399, %v402
      %v404 = vrot.slane %v403, 4
      %v406 = vshll.u32 %v235, 16
      %v408 = vrot.slane %v406, 5
      %v409 = vsel %vm275, %v404, %v408
      %v410 = vshrl.u32 %v235, 16
      %v412 = vrot.slane %v410, 4
      %v413 = vor.u32 %v412, %v408
      %v414 = vrot.slane %v413, 4
      %v416 = vshll.u32 %v262, 16
      %v418 = vrot.slane %v416, 5
      %v419 = vsel %vm275, %v414, %v418
      %v421 = vshrl.u32 %v236, 16
      %v423 = vrot.slane %v421, 4
      %v424 = vshll.u32 %v236, 16
      %v426 = vrot.slane %v424, 5
      %v427 = vor.u32 %v423, %v426
      %v428 = vrot.slane %v427, 4
      %v430 = vshll.u32 %v237, 16
      %v432 = vrot.slane %v430, 5
      %v433 = vsel %vm275, %v428, %v432
      %v434 = vshrl.u32 %v237, 16
      %v436 = vrot.slane %v434, 4
      %v437 = vor.u32 %v436, %v432
      %v438 = vrot.slane %v437, 4
      %v440 = vshll.u32 %v263, 16
      %v442 = vrot.slane %v440, 5
      %v443 = vsel %vm275, %v438, %v442
      %v445 = vshrl.u32 %v238, 16
      %v447 = vrot.slane %v445, 4
      %v448 = vshll.u32 %v238, 16
      %v450 = vrot.slane %v448, 5
      %v451 = vor.u32 %v447, %v450
      %v452 = vrot.slane %v451, 4
      %v454 = vshll.u32 %v239, 16
      %v456 = vrot.slane %v454, 5
      %v457 = vsel %vm275, %v452, %v456
      %v458 = vshrl.u32 %v239, 16
      %v460 = vrot.slane %v458, 4
      %v461 = vor.u32 %v460, %v456
      %v462 = vrot.slane %v461, 4
      %v464 = vshll.u32 %v264, 16
      %v466 = vrot.slane %v464, 5
      %v467 = vsel %vm275, %v462, %v466
      %v469 = vshrl.u32 %v240, 16
      %v471 = vrot.slane %v469, 4
      %v472 = vshll.u32 %v240, 16
      %v474 = vrot.slane %v472, 5
      %v475 = vor.u32 %v471, %v474
      %v476 = vrot.slane %v475, 4
      %v478 = vshll.u32 %v241, 16
      %v480 = vrot.slane %v478, 5
      %v481 = vsel %vm275, %v476, %v480
      %v482 = vshrl.u32 %v241, 16
      %v484 = vrot.slane %v482, 4
      %v485 = vor.u32 %v484, %v480
      %v486 = vrot.slane %v485, 4
      %v488 = vshll.u32 %v265, 16
      %v490 = vrot.slane %v488, 5
      %v491 = vsel %vm275, %v486, %v490
      %v493 = vshrl.u32 %v242, 16
      %v495 = vrot.slane %v493, 4
      %v496 = vshll.u32 %v242, 16
      %v498 = vrot.slane %v496, 5
      %v499 = vor.u32 %v495, %v498
      %v500 = vrot.slane %v499, 4
      %v502 = vshll.u32 %v243, 16
      %v504 = vrot.slane %v502, 5
      %v505 = vsel %vm275, %v500, %v504
      %v506 = vshrl.u32 %v243, 16
      %v508 = vrot.slane %v506, 4
      %v509 = vor.u32 %v508, %v504
      %v510 = vrot.slane %v509, 4
      %v512 = vshll.u32 %v266, 16
      %v514 = vrot.slane %v512, 5
      %v515 = vsel %vm275, %v510, %v514
      %v517 = vshrl.u32 %v244, 16
      %v519 = vrot.slane %v517, 4
      %v520 = vshll.u32 %v244, 16
      %v522 = vrot.slane %v520, 5
      %v523 = vor.u32 %v519, %v522
      %v524 = vrot.slane %v523, 4
      %v526 = vshll.u32 %v245, 16
      %v528 = vrot.slane %v526, 5
      %v529 = vsel %vm275, %v524, %v528
      %v530 = vshrl.u32 %v245, 16
      %v532 = vrot.slane %v530, 4
      %v533 = vor.u32 %v532, %v528
      %v534 = vrot.slane %v533, 4
      %v536 = vshll.u32 %v267, 16
      %v538 = vrot.slane %v536, 5
      %v539 = vsel %vm275, %v534, %v538
      %v541 = vshrl.u32 %v246, 16
      %v543 = vrot.slane %v541, 4
      %v544 = vshll.u32 %v246, 16
      %v546 = vrot.slane %v544, 5
      %v547 = vor.u32 %v543, %v546
      %v548 = vrot.slane %v547, 4
      %v550 = vshll.u32 %v247, 16
      %v552 = vrot.slane %v550, 5
      %v553 = vsel %vm275, %v548, %v552
      %v554 = vshrl.u32 %v247, 16
      %v556 = vrot.slane %v554, 4
      %v557 = vor.u32 %v556, %v552
      %v558 = vrot.slane %v557, 4
      %v560 = vshll.u32 %v268, 16
      %v562 = vrot.slane %v560, 5
      %v563 = vsel %vm275, %v558, %v562
      %v565 = vshrl.u32 %v248, 16
      %v567 = vrot.slane %v565, 4
      %v568 = vshll.u32 %v248, 16
      %v570 = vrot.slane %v568, 5
      %v571 = vor.u32 %v567, %v570
      %v572 = vrot.slane %v571, 4
      %v574 = vshll.u32 %v249, 16
      %v576 = vrot.slane %v574, 5
      %v577 = vsel %vm275, %v572, %v576
      %v578 = vshrl.u32 %v249, 16
      %v580 = vrot.slane %v578, 4
      %v581 = vor.u32 %v580, %v576
      %v582 = vrot.slane %v581, 4
      %v584 = vshll.u32 %v269, 16
      %v586 = vrot.slane %v584, 5
      %v587 = vsel %vm275, %v582, %v586
      %v589 = vshrl.u32 %v250, 16
      %v591 = vrot.slane %v589, 4
      %v592 = vshll.u32 %v250, 16
      %v594 = vrot.slane %v592, 5
      %v595 = vor.u32 %v591, %v594
      %v596 = vrot.slane %v595, 4
      %v598 = vshll.u32 %v251, 16
      %v600 = vrot.slane %v598, 5
      %v601 = vsel %vm275, %v596, %v600
      %v602 = vshrl.u32 %v251, 16
      %v604 = vrot.slane %v602, 4
      %v605 = vor.u32 %v604, %v600
      %v606 = vrot.slane %v605, 4
      %v608 = vshll.u32 %v270, 16
      %v610 = vrot.slane %v608, 5
      %v611 = vsel %vm275, %v606, %v610
      %v613 = vshrl.u32 %v252, 16
      %v615 = vrot.slane %v613, 4
      %v616 = vshll.u32 %v252, 16
      %v618 = vrot.slane %v616, 5
      %v619 = vor.u32 %v615, %v618
      %v620 = vrot.slane %v619, 4
      %v622 = vshll.u32 %v253, 16
      %v624 = vrot.slane %v622, 5
      %v625 = vsel %vm275, %v620, %v624
      %v626 = vshrl.u32 %v253, 16
      %v628 = vrot.slane %v626, 4
      %v629 = vor.u32 %v628, %v624
      %v630 = vrot.slane %v629, 4
      %v632 = vshll.u32 %v271, 16
      %v634 = vrot.slane %v632, 5
      %v635 = vsel %vm275, %v630, %v634
      %v637 = vshrl.u32 %v254, 16
      %v639 = vrot.slane %v637, 4
      %v640 = vshll.u32 %v254, 16
      %v642 = vrot.slane %v640, 5
      %v643 = vor.u32 %v639, %v642
      %v644 = vrot.slane %v643, 4
      %v646 = vshll.u32 %v255, 16
      %v648 = vrot.slane %v646, 5
      %v649 = vsel %vm275, %v644, %v648
      %v650 = vshrl.u32 %v255, 16
      %v652 = vrot.slane %v650, 4
      %v653 = vor.u32 %v652, %v648
      %v654 = vrot.slane %v653, 4
      %v656 = vshll.u32 %v272, 16
      %v658 = vrot.slane %v656, 5
      %v659 = vsel %vm275, %v654, %v658
      %s660 = scalar_lea.vmem %s210, 4
      %v661 = vld [vmem:[%s660] sm:$0xf]
      %v662 = vunpack.c.l.b16 %v289
      %v663 = vunpack.c.l.b16 %v299
      %v664 = vunpack.c.l.b16 %v313
      %v665 = vunpack.c.l.b16 %v323
      %v666 = vunpack.c.l.b16 %v337
      %v667 = vunpack.c.l.b16 %v347
      %v668 = vunpack.c.l.b16 %v361
      %v669 = vunpack.c.l.b16 %v371
      %v670 = vunpack.c.l.b16 %v385
      %v671 = vunpack.c.l.b16 %v395
      %v672 = vunpack.c.l.b16 %v409
      %v673 = vunpack.c.l.b16 %v419
      %v674 = vunpack.c.l.b16 %v433
      %v675 = vunpack.c.l.b16 %v443
      %v676 = vunpack.c.l.b16 %v457
      %v677 = vunpack.c.l.b16 %v467
      %v678 = vunpack.c.l.b16 %v481
      %v679 = vunpack.c.l.b16 %v491
      %v680 = vunpack.c.l.b16 %v505
      %v681 = vunpack.c.l.b16 %v515
      %v682 = vunpack.c.l.b16 %v529
      %v683 = vunpack.c.l.b16 %v539
      %v684 = vunpack.c.l.b16 %v553
      %v685 = vunpack.c.l.b16 %v563
      %v686 = vunpack.c.l.b16 %v577
      %v687 = vunpack.c.l.b16 %v587
      %v688 = vunpack.c.l.b16 %v601
      %v689 = vunpack.c.l.b16 %v611
      %v690 = vunpack.c.l.b16 %v625
      %v691 = vunpack.c.l.b16 %v635
      %v692 = vunpack.c.l.b16 %v649
      %v693 = vunpack.c.l.b16 %v659
      %v694 = vpack.c.b16 %v663, %v662
      %v695 = vpack.c.b16 %v665, %v664
      %v696 = vpack.c.b16 %v667, %v666
      %v697 = vpack.c.b16 %v669, %v668
      %v698 = vpack.c.b16 %v671, %v670
      %v699 = vpack.c.b16 %v673, %v672
      %v700 = vpack.c.b16 %v675, %v674
      %v701 = vpack.c.b16 %v677, %v676
      %v702 = vpack.c.b16 %v679, %v678
      %v703 = vpack.c.b16 %v681, %v680
      %v704 = vpack.c.b16 %v683, %v682
      %v705 = vpack.c.b16 %v685, %v684
      %v706 = vpack.c.b16 %v687, %v686
      %v707 = vpack.c.b16 %v689, %v688
      %v708 = vpack.c.b16 %v691, %v690
      %v709 = vpack.c.b16 %v693, %v692
      %vm710 = vcmask 64512
      %v712 = vsel %vm710, %v694, 0
      %v715 = vsel %vm710, %v695, 0
      %v718 = vsel %vm710, %v696, 0
      %v721 = vsel %vm710, %v697, 0
      %v724 = vsel %vm710, %v698, 0
      %v727 = vsel %vm710, %v699, 0
      %v730 = vsel %vm710, %v700, 0
      %v733 = vsel %vm710, %v701, 0
      %v736 = vsel %vm710, %v702, 0
      %v739 = vsel %vm710, %v703, 0
      %v742 = vsel %vm710, %v704, 0
      %v745 = vsel %vm710, %v705, 0
      %v748 = vsel %vm710, %v706, 0
      %v751 = vsel %vm710, %v707, 0
      %v754 = vsel %vm710, %v708, 0
      %v757 = vsel %vm710, %v709, 0
      %vm759 = vcmask 1043456
      %v761 = vsel %vm759, %v661, 0
      %763 = vmatpush.bf16.msra.mxu0 0
      %764 = vmatpush.bf16.msra.mxu0 0
      %765 = vmatpush.bf16.msra.mxu0 0
      %766 = vmatpush.bf16.msra.mxu0 0
      %767 = vmatpush.bf16.msra.mxu0 0
      %768 = vmatpush.bf16.msra.mxu0 0
      %769 = vmatpush.bf16.msra.mxu0 0
      %770 = vmatpush.bf16.msra.mxu0 %v761
      %771 = vmatmul.bf16.gmra.mxu0 %v712
      %v772 = vpop.f32.mrf.mxu0
      %v773 = vadd.f32 0.0, %v772
      %v774 = vpop.f32.mrf.mxu0
      %v775 = vadd.f32 0.0, %v774
      %776 = vmatmul.bf16.gmra.mxu0 %v715
      %v777 = vpop.f32.mrf.mxu0
      %v778 = vadd.f32 0.0, %v777
      %v779 = vpop.f32.mrf.mxu0
      %v780 = vadd.f32 0.0, %v779
      %781 = vmatmul.bf16.gmra.mxu0 %v718
      %v782 = vpop.f32.mrf.mxu0
      %v783 = vadd.f32 0.0, %v782
      %v784 = vpop.f32.mrf.mxu0
      %v785 = vadd.f32 0.0, %v784
      %786 = vmatmul.bf16.gmra.mxu0 %v721
      %v787 = vpop.f32.mrf.mxu0
      %v788 = vadd.f32 0.0, %v787
      %v789 = vpop.f32.mrf.mxu0
      %v790 = vadd.f32 0.0, %v789
      %791 = vmatmul.bf16.gmra.mxu0 %v724
      %v792 = vpop.f32.mrf.mxu0
      %v793 = vadd.f32 0.0, %v792
      %v794 = vpop.f32.mrf.mxu0
      %v795 = vadd.f32 0.0, %v794
      %796 = vmatmul.bf16.gmra.mxu0 %v727
      %v797 = vpop.f32.mrf.mxu0
      %v798 = vadd.f32 0.0, %v797
      %v799 = vpop.f32.mrf.mxu0
      %v800 = vadd.f32 0.0, %v799
      %801 = vmatmul.bf16.gmra.mxu0 %v730
      %v802 = vpop.f32.mrf.mxu0
      %v803 = vadd.f32 0.0, %v802
      %v804 = vpop.f32.mrf.mxu0
      %v805 = vadd.f32 0.0, %v804
      %806 = vmatmul.bf16.gmra.mxu0 %v733
      %v807 = vpop.f32.mrf.mxu0
      %v808 = vadd.f32 0.0, %v807
      %v809 = vpop.f32.mrf.mxu0
      %v810 = vadd.f32 0.0, %v809
      %811 = vmatmul.bf16.gmra.mxu0 %v736
      %v812 = vpop.f32.mrf.mxu0
      %v813 = vadd.f32 0.0, %v812
      %v814 = vpop.f32.mrf.mxu0
      %v815 = vadd.f32 0.0, %v814
      %816 = vmatmul.bf16.gmra.mxu0 %v739
      %v817 = vpop.f32.mrf.mxu0
      %v818 = vadd.f32 0.0, %v817
      %v819 = vpop.f32.mrf.mxu0
      %v820 = vadd.f32 0.0, %v819
      %821 = vmatmul.bf16.gmra.mxu0 %v742
      %v822 = vpop.f32.mrf.mxu0
      %v823 = vadd.f32 0.0, %v822
      %v824 = vpop.f32.mrf.mxu0
      %v825 = vadd.f32 0.0, %v824
      %826 = vmatmul.bf16.gmra.mxu0 %v745
      %v827 = vpop.f32.mrf.mxu0
      %v828 = vadd.f32 0.0, %v827
      %v829 = vpop.f32.mrf.mxu0
      %v830 = vadd.f32 0.0, %v829
      %831 = vmatmul.bf16.gmra.mxu0 %v748
      %v832 = vpop.f32.mrf.mxu0
      %v833 = vadd.f32 0.0, %v832
      %v834 = vpop.f32.mrf.mxu0
      %v835 = vadd.f32 0.0, %v834
      %836 = vmatmul.bf16.gmra.mxu0 %v751
      %v837 = vpop.f32.mrf.mxu0
      %v838 = vadd.f32 0.0, %v837
      %v839 = vpop.f32.mrf.mxu0
      %v840 = vadd.f32 0.0, %v839
      %841 = vmatmul.bf16.gmra.mxu0 %v754
      %v842 = vpop.f32.mrf.mxu0
      %v843 = vadd.f32 0.0, %v842
      %v844 = vpop.f32.mrf.mxu0
      %v845 = vadd.f32 0.0, %v844
      %846 = vmatmul.bf16.gmra.mxu0 %v757
      %v847 = vpop.f32.mrf.mxu0
      %v848 = vadd.f32 0.0, %v847
      %v849 = vpop.f32.mrf.mxu0
      %v850 = vadd.f32 0.0, %v849
      %851 = vdwg.mxu0
      %v884 = vunpack.c.l.b16 %v224
      %v885 = vunpack.c.l.b16 %v225
      %v886 = vunpack.c.l.b16 %v226
      %v887 = vunpack.c.l.b16 %v227
      %v888 = vunpack.c.l.b16 %v228
      %v889 = vunpack.c.l.b16 %v229
      %v890 = vunpack.c.l.b16 %v230
      %v891 = vunpack.c.l.b16 %v231
      %v892 = vunpack.c.l.b16 %v232
      %v893 = vunpack.c.l.b16 %v233
      %v894 = vunpack.c.l.b16 %v234
      %v895 = vunpack.c.l.b16 %v235
      %v896 = vunpack.c.l.b16 %v236
      %v897 = vunpack.c.l.b16 %v237
      %v898 = vunpack.c.l.b16 %v238
      %v899 = vunpack.c.l.b16 %v239
      %v900 = vunpack.c.l.b16 %v240
      %v901 = vunpack.c.l.b16 %v241
      %v902 = vunpack.c.l.b16 %v242
      %v903 = vunpack.c.l.b16 %v243
      %v904 = vunpack.c.l.b16 %v244
      %v905 = vunpack.c.l.b16 %v245
      %v906 = vunpack.c.l.b16 %v246
      %v907 = vunpack.c.l.b16 %v247
      %v908 = vunpack.c.l.b16 %v248
      %v909 = vunpack.c.l.b16 %v249
      %v910 = vunpack.c.l.b16 %v250
      %v911 = vunpack.c.l.b16 %v251
      %v912 = vunpack.c.l.b16 %v252
      %v913 = vunpack.c.l.b16 %v253
      %v914 = vunpack.c.l.b16 %v254
      %v915 = vunpack.c.l.b16 %v255
      %v916 = vpack.c.b16 %v885, %v884
      %v917 = vpack.c.b16 %v887, %v886
      %v918 = vpack.c.b16 %v889, %v888
      %v919 = vpack.c.b16 %v891, %v890
      %v920 = vpack.c.b16 %v893, %v892
      %v921 = vpack.c.b16 %v895, %v894
      %v922 = vpack.c.b16 %v897, %v896
      %v923 = vpack.c.b16 %v899, %v898
      %v924 = vpack.c.b16 %v901, %v900
      %v925 = vpack.c.b16 %v903, %v902
      %v926 = vpack.c.b16 %v905, %v904
      %v927 = vpack.c.b16 %v907, %v906
      %v928 = vpack.c.b16 %v909, %v908
      %v929 = vpack.c.b16 %v911, %v910
      %v930 = vpack.c.b16 %v913, %v912
      %v931 = vpack.c.b16 %v915, %v914
      %v933 = vsel %vm710, %v916, 0
      %v936 = vsel %vm710, %v917, 0
      %v939 = vsel %vm710, %v918, 0
      %v942 = vsel %vm710, %v919, 0
      %v945 = vsel %vm710, %v920, 0
      %v948 = vsel %vm710, %v921, 0
      %v951 = vsel %vm710, %v922, 0
      %v954 = vsel %vm710, %v923, 0
      %v957 = vsel %vm710, %v924, 0
      %v960 = vsel %vm710, %v925, 0
      %v963 = vsel %vm710, %v926, 0
      %v966 = vsel %vm710, %v927, 0
      %v969 = vsel %vm710, %v928, 0
      %v972 = vsel %vm710, %v929, 0
      %v975 = vsel %vm710, %v930, 0
      %v978 = vsel %vm710, %v931, 0
      %v981 = vsel %vm759, %v256, 0
      %983 = vmatpush.bf16.msra.mxu0 0
      %984 = vmatpush.bf16.msra.mxu0 0
      %985 = vmatpush.bf16.msra.mxu0 0
      %986 = vmatpush.bf16.msra.mxu0 0
      %987 = vmatpush.bf16.msra.mxu0 0
      %988 = vmatpush.bf16.msra.mxu0 0
      %989 = vmatpush.bf16.msra.mxu0 0
      %990 = vmatpush.bf16.msra.mxu0 %v981
      %991 = vmatmul.bf16.gmra.mxu0 %v933
      %v992 = vpop.f32.mrf.mxu0
      %v993 = vadd.f32 %v773, %v992
      %v994 = vpop.f32.mrf.mxu0
      %v995 = vadd.f32 %v775, %v994
      %996 = vmatmul.bf16.gmra.mxu0 %v936
      %v997 = vpop.f32.mrf.mxu0
      %v998 = vadd.f32 %v778, %v997
      %v999 = vpop.f32.mrf.mxu0
      %v1000 = vadd.f32 %v780, %v999
      %1001 = vmatmul.bf16.gmra.mxu0 %v939
      %v1002 = vpop.f32.mrf.mxu0
      %v1003 = vadd.f32 %v783, %v1002
      %v1004 = vpop.f32.mrf.mxu0
      %v1005 = vadd.f32 %v785, %v1004
      %1006 = vmatmul.bf16.gmra.mxu0 %v942
      %v1007 = vpop.f32.mrf.mxu0
      %v1008 = vadd.f32 %v788, %v1007
      %v1009 = vpop.f32.mrf.mxu0
      %v1010 = vadd.f32 %v790, %v1009
      %1011 = vmatmul.bf16.gmra.mxu0 %v945
      %v1012 = vpop.f32.mrf.mxu0
      %v1013 = vadd.f32 %v793, %v1012
      %v1014 = vpop.f32.mrf.mxu0
      %v1015 = vadd.f32 %v795, %v1014
      %1016 = vmatmul.bf16.gmra.mxu0 %v948
      %v1017 = vpop.f32.mrf.mxu0
      %v1018 = vadd.f32 %v798, %v1017
      %v1019 = vpop.f32.mrf.mxu0
      %v1020 = vadd.f32 %v800, %v1019
      %1021 = vmatmul.bf16.gmra.mxu0 %v951
      %v1022 = vpop.f32.mrf.mxu0
      %v1023 = vadd.f32 %v803, %v1022
      %v1024 = vpop.f32.mrf.mxu0
      %v1025 = vadd.f32 %v805, %v1024
      %1026 = vmatmul.bf16.gmra.mxu0 %v954
      %v1027 = vpop.f32.mrf.mxu0
      %v1028 = vadd.f32 %v808, %v1027
      %v1029 = vpop.f32.mrf.mxu0
      %v1030 = vadd.f32 %v810, %v1029
      %1031 = vmatmul.bf16.gmra.mxu0 %v957
      %v1032 = vpop.f32.mrf.mxu0
      %v1033 = vadd.f32 %v813, %v1032
      %v1034 = vpop.f32.mrf.mxu0
      %v1035 = vadd.f32 %v815, %v1034
      %1036 = vmatmul.bf16.gmra.mxu0 %v960
      %v1037 = vpop.f32.mrf.mxu0
      %v1038 = vadd.f32 %v818, %v1037
      %v1039 = vpop.f32.mrf.mxu0
      %v1040 = vadd.f32 %v820, %v1039
      %1041 = vmatmul.bf16.gmra.mxu0 %v963
      %v1042 = vpop.f32.mrf.mxu0
      %v1043 = vadd.f32 %v823, %v1042
      %v1044 = vpop.f32.mrf.mxu0
      %v1045 = vadd.f32 %v825, %v1044
      %1046 = vmatmul.bf16.gmra.mxu0 %v966
      %v1047 = vpop.f32.mrf.mxu0
      %v1048 = vadd.f32 %v828, %v1047
      %v1049 = vpop.f32.mrf.mxu0
      %v1050 = vadd.f32 %v830, %v1049
      %1051 = vmatmul.bf16.gmra.mxu0 %v969
      %v1052 = vpop.f32.mrf.mxu0
      %v1053 = vadd.f32 %v833, %v1052
      %v1054 = vpop.f32.mrf.mxu0
      %v1055 = vadd.f32 %v835, %v1054
      %1056 = vmatmul.bf16.gmra.mxu0 %v972
      %v1057 = vpop.f32.mrf.mxu0
      %v1058 = vadd.f32 %v838, %v1057
      %v1059 = vpop.f32.mrf.mxu0
      %v1060 = vadd.f32 %v840, %v1059
      %1061 = vmatmul.bf16.gmra.mxu0 %v975
      %v1062 = vpop.f32.mrf.mxu0
      %v1063 = vadd.f32 %v843, %v1062
      %v1064 = vpop.f32.mrf.mxu0
      %v1065 = vadd.f32 %v845, %v1064
      %1066 = vmatmul.bf16.gmra.mxu0 %v978
      %v1067 = vpop.f32.mrf.mxu0
      %v1068 = vadd.f32 %v848, %v1067
      %v1069 = vpop.f32.mrf.mxu0
      %v1070 = vadd.f32 %v850, %v1069
      %1071 = vdwg.mxu0
      %v1072 = vld [vmem:[%s206] sm:$0xe]
      %v1073 = vld [vmem:[%s206 + $0xc] sm:$0xe]
      %v1074 = vld [vmem:[%s206 + $0x18] sm:$0xe]
      %v1075 = vld [vmem:[%s206 + $0x24] sm:$0xe]
      %v1076 = vld [vmem:[%s206 + $0x30] sm:$0xe]
      %v1077 = vld [vmem:[%s206 + $0x3c] sm:$0xe]
      %v1078 = vld [vmem:[%s206 + $0x48] sm:$0xe]
      %v1079 = vld [vmem:[%s206 + $0x54] sm:$0xe]
      %v1080 = vld [vmem:[%s206 + $0x60] sm:$0xe]
      %v1081 = vld [vmem:[%s206 + $0x6c] sm:$0xe]
      %v1082 = vld [vmem:[%s206 + $0x78] sm:$0xe]
      %v1083 = vld [vmem:[%s206 + $0x84] sm:$0xe]
      %v1084 = vld [vmem:[%s206 + $0x90] sm:$0xe]
      %v1085 = vld [vmem:[%s206 + $0x9c] sm:$0xe]
      %v1086 = vld [vmem:[%s206 + $0xa8] sm:$0xe]
      %v1087 = vld [vmem:[%s206 + $0xb4] sm:$0xe]
      %vm1120 = vcmask 1042432
      %vm1121 = vcmask 1046532
      %vm1122 = vmor %vm1120, %vm1121
      %v1123 = vrot.slane %v1072, 5
      %v1124 = vrot.slane %v1123, 4
      %v1125 = vrot.slane %v225, 5
      %v1126 = vsel %vm1122, %v1124, %v1125
      %v1127 = vrot.slane %v1125, 4
      %v1128 = vrot.slane %v257, 5
      %v1129 = vsel %vm1122, %v1127, %v1128
      %v1130 = vrot.slane %v1073, 5
      %v1131 = vrot.slane %v1130, 4
      %v1132 = vrot.slane %v227, 5
      %v1133 = vsel %vm1122, %v1131, %v1132
      %v1134 = vrot.slane %v1132, 4
      %v1135 = vrot.slane %v258, 5
      %v1136 = vsel %vm1122, %v1134, %v1135
      %v1137 = vrot.slane %v1074, 5
      %v1138 = vrot.slane %v1137, 4
      %v1139 = vrot.slane %v229, 5
      %v1140 = vsel %vm1122, %v1138, %v1139
      %v1141 = vrot.slane %v1139, 4
      %v1142 = vrot.slane %v259, 5
      %v1143 = vsel %vm1122, %v1141, %v1142
      %v1144 = vrot.slane %v1075, 5
      %v1145 = vrot.slane %v1144, 4
      %v1146 = vrot.slane %v231, 5
      %v1147 = vsel %vm1122, %v1145, %v1146
      %v1148 = vrot.slane %v1146, 4
      %v1149 = vrot.slane %v260, 5
      %v1150 = vsel %vm1122, %v1148, %v1149
      %v1151 = vrot.slane %v1076, 5
      %v1152 = vrot.slane %v1151, 4
      %v1153 = vrot.slane %v233, 5
      %v1154 = vsel %vm1122, %v1152, %v1153
      %v1155 = vrot.slane %v1153, 4
      %v1156 = vrot.slane %v261, 5
      %v1157 = vsel %vm1122, %v1155, %v1156
      %v1158 = vrot.slane %v1077, 5
      %v1159 = vrot.slane %v1158, 4
      %v1160 = vrot.slane %v235, 5
      %v1161 = vsel %vm1122, %v1159, %v1160
      %v1162 = vrot.slane %v1160, 4
      %v1163 = vrot.slane %v262, 5
      %v1164 = vsel %vm1122, %v1162, %v1163
      %v1165 = vrot.slane %v1078, 5
      %v1166 = vrot.slane %v1165, 4
      %v1167 = vrot.slane %v237, 5
      %v1168 = vsel %vm1122, %v1166, %v1167
      %v1169 = vrot.slane %v1167, 4
      %v1170 = vrot.slane %v263, 5
      %v1171 = vsel %vm1122, %v1169, %v1170
      %v1172 = vrot.slane %v1079, 5
      %v1173 = vrot.slane %v1172, 4
      %v1174 = vrot.slane %v239, 5
      %v1175 = vsel %vm1122, %v1173, %v1174
      %v1176 = vrot.slane %v1174, 4
      %v1177 = vrot.slane %v264, 5
      %v1178 = vsel %vm1122, %v1176, %v1177
      %v1179 = vrot.slane %v1080, 5
      %v1180 = vrot.slane %v1179, 4
      %v1181 = vrot.slane %v241, 5
      %v1182 = vsel %vm1122, %v1180, %v1181
      %v1183 = vrot.slane %v1181, 4
      %v1184 = vrot.slane %v265, 5
      %v1185 = vsel %vm1122, %v1183, %v1184
      %v1186 = vrot.slane %v1081, 5
      %v1187 = vrot.slane %v1186, 4
      %v1188 = vrot.slane %v243, 5
      %v1189 = vsel %vm1122, %v1187, %v1188
      %v1190 = vrot.slane %v1188, 4
      %v1191 = vrot.slane %v266, 5
      %v1192 = vsel %vm1122, %v1190, %v1191
      %v1193 = vrot.slane %v1082, 5
      %v1194 = vrot.slane %v1193, 4
      %v1195 = vrot.slane %v245, 5
      %v1196 = vsel %vm1122, %v1194, %v1195
      %v1197 = vrot.slane %v1195, 4
      %v1198 = vrot.slane %v267, 5
      %v1199 = vsel %vm1122, %v1197, %v1198
      %v1200 = vrot.slane %v1083, 5
      %v1201 = vrot.slane %v1200, 4
      %v1202 = vrot.slane %v247, 5
      %v1203 = vsel %vm1122, %v1201, %v1202
      %v1204 = vrot.slane %v1202, 4
      %v1205 = vrot.slane %v268, 5
      %v1206 = vsel %vm1122, %v1204, %v1205
      %v1207 = vrot.slane %v1084, 5
      %v1208 = vrot.slane %v1207, 4
      %v1209 = vrot.slane %v249, 5
      %v1210 = vsel %vm1122, %v1208, %v1209
      %v1211 = vrot.slane %v1209, 4
      %v1212 = vrot.slane %v269, 5
      %v1213 = vsel %vm1122, %v1211, %v1212
      %v1214 = vrot.slane %v1085, 5
      %v1215 = vrot.slane %v1214, 4
      %v1216 = vrot.slane %v251, 5
      %v1217 = vsel %vm1122, %v1215, %v1216
      %v1218 = vrot.slane %v1216, 4
      %v1219 = vrot.slane %v270, 5
      %v1220 = vsel %vm1122, %v1218, %v1219
      %v1221 = vrot.slane %v1086, 5
      %v1222 = vrot.slane %v1221, 4
      %v1223 = vrot.slane %v253, 5
      %v1224 = vsel %vm1122, %v1222, %v1223
      %v1225 = vrot.slane %v1223, 4
      %v1226 = vrot.slane %v271, 5
      %v1227 = vsel %vm1122, %v1225, %v1226
      %v1228 = vrot.slane %v1087, 5
      %v1229 = vrot.slane %v1228, 4
      %v1230 = vrot.slane %v255, 5
      %v1231 = vsel %vm1122, %v1229, %v1230
      %v1232 = vrot.slane %v1230, 4
      %v1233 = vrot.slane %v272, 5
      %v1234 = vsel %vm1122, %v1232, %v1233
      %s1235 = scalar_lea.vmem %s210, 8
      %v1236 = vld [vmem:[%s1235] sm:$0xf]
      %v1237 = vunpack.c.l.b16 %v1126
      %v1238 = vunpack.c.l.b16 %v1129
      %v1239 = vunpack.c.l.b16 %v1133
      %v1240 = vunpack.c.l.b16 %v1136
      %v1241 = vunpack.c.l.b16 %v1140
      %v1242 = vunpack.c.l.b16 %v1143
      %v1243 = vunpack.c.l.b16 %v1147
      %v1244 = vunpack.c.l.b16 %v1150
      %v1245 = vunpack.c.l.b16 %v1154
      %v1246 = vunpack.c.l.b16 %v1157
      %v1247 = vunpack.c.l.b16 %v1161
      %v1248 = vunpack.c.l.b16 %v1164
      %v1249 = vunpack.c.l.b16 %v1168
      %v1250 = vunpack.c.l.b16 %v1171
      %v1251 = vunpack.c.l.b16 %v1175
      %v1252 = vunpack.c.l.b16 %v1178
      %v1253 = vunpack.c.l.b16 %v1182
      %v1254 = vunpack.c.l.b16 %v1185
      %v1255 = vunpack.c.l.b16 %v1189
      %v1256 = vunpack.c.l.b16 %v1192
      %v1257 = vunpack.c.l.b16 %v1196
      %v1258 = vunpack.c.l.b16 %v1199
      %v1259 = vunpack.c.l.b16 %v1203
      %v1260 = vunpack.c.l.b16 %v1206
      %v1261 = vunpack.c.l.b16 %v1210
      %v1262 = vunpack.c.l.b16 %v1213
      %v1263 = vunpack.c.l.b16 %v1217
      %v1264 = vunpack.c.l.b16 %v1220
      %v1265 = vunpack.c.l.b16 %v1224
      %v1266 = vunpack.c.l.b16 %v1227
      %v1267 = vunpack.c.l.b16 %v1231
      %v1268 = vunpack.c.l.b16 %v1234
      %v1269 = vpack.c.b16 %v1238, %v1237
      %v1270 = vpack.c.b16 %v1240, %v1239
      %v1271 = vpack.c.b16 %v1242, %v1241
      %v1272 = vpack.c.b16 %v1244, %v1243
      %v1273 = vpack.c.b16 %v1246, %v1245
      %v1274 = vpack.c.b16 %v1248, %v1247
      %v1275 = vpack.c.b16 %v1250, %v1249
      %v1276 = vpack.c.b16 %v1252, %v1251
      %v1277 = vpack.c.b16 %v1254, %v1253
      %v1278 = vpack.c.b16 %v1256, %v1255
      %v1279 = vpack.c.b16 %v1258, %v1257
      %v1280 = vpack.c.b16 %v1260, %v1259
      %v1281 = vpack.c.b16 %v1262, %v1261
      %v1282 = vpack.c.b16 %v1264, %v1263
      %v1283 = vpack.c.b16 %v1266, %v1265
      %v1284 = vpack.c.b16 %v1268, %v1267
      %v1286 = vsel %vm710, %v1269, 0
      %v1289 = vsel %vm710, %v1270, 0
      %v1292 = vsel %vm710, %v1271, 0
      %v1295 = vsel %vm710, %v1272, 0
      %v1298 = vsel %vm710, %v1273, 0
      %v1301 = vsel %vm710, %v1274, 0
      %v1304 = vsel %vm710, %v1275, 0
      %v1307 = vsel %vm710, %v1276, 0
      %v1310 = vsel %vm710, %v1277, 0
      %v1313 = vsel %vm710, %v1278, 0
      %v1316 = vsel %vm710, %v1279, 0
      %v1319 = vsel %vm710, %v1280, 0
      %v1322 = vsel %vm710, %v1281, 0
      %v1325 = vsel %vm710, %v1282, 0
      %v1328 = vsel %vm710, %v1283, 0
      %v1331 = vsel %vm710, %v1284, 0
      %v1334 = vsel %vm759, %v1236, 0
      %1336 = vmatpush.bf16.msra.mxu0 0
      %1337 = vmatpush.bf16.msra.mxu0 0
      %1338 = vmatpush.bf16.msra.mxu0 0
      %1339 = vmatpush.bf16.msra.mxu0 0
      %1340 = vmatpush.bf16.msra.mxu0 0
      %1341 = vmatpush.bf16.msra.mxu0 0
      %1342 = vmatpush.bf16.msra.mxu0 0
      %1343 = vmatpush.bf16.msra.mxu0 %v1334
      %1344 = vmatmul.bf16.gmra.mxu0 %v1286
      %v1345 = vpop.f32.mrf.mxu0
      %v1346 = vadd.f32 0.0, %v1345
      %v1347 = vpop.f32.mrf.mxu0
      %v1348 = vadd.f32 0.0, %v1347
      %1349 = vmatmul.bf16.gmra.mxu0 %v1289
      %v1350 = vpop.f32.mrf.mxu0
      %v1351 = vadd.f32 0.0, %v1350
      %v1352 = vpop.f32.mrf.mxu0
      %v1353 = vadd.f32 0.0, %v1352
      %1354 = vmatmul.bf16.gmra.mxu0 %v1292
      %v1355 = vpop.f32.mrf.mxu0
      %v1356 = vadd.f32 0.0, %v1355
      %v1357 = vpop.f32.mrf.mxu0
      %v1358 = vadd.f32 0.0, %v1357
      %1359 = vmatmul.bf16.gmra.mxu0 %v1295
      %v1360 = vpop.f32.mrf.mxu0
      %v1361 = vadd.f32 0.0, %v1360
      %v1362 = vpop.f32.mrf.mxu0
      %v1363 = vadd.f32 0.0, %v1362
      %1364 = vmatmul.bf16.gmra.mxu0 %v1298
      %v1365 = vpop.f32.mrf.mxu0
      %v1366 = vadd.f32 0.0, %v1365
      %v1367 = vpop.f32.mrf.mxu0
      %v1368 = vadd.f32 0.0, %v1367
      %1369 = vmatmul.bf16.gmra.mxu0 %v1301
      %v1370 = vpop.f32.mrf.mxu0
      %v1371 = vadd.f32 0.0, %v1370
      %v1372 = vpop.f32.mrf.mxu0
      %v1373 = vadd.f32 0.0, %v1372
      %1374 = vmatmul.bf16.gmra.mxu0 %v1304
      %v1375 = vpop.f32.mrf.mxu0
      %v1376 = vadd.f32 0.0, %v1375
      %v1377 = vpop.f32.mrf.mxu0
      %v1378 = vadd.f32 0.0, %v1377
      %1379 = vmatmul.bf16.gmra.mxu0 %v1307
      %v1380 = vpop.f32.mrf.mxu0
      %v1381 = vadd.f32 0.0, %v1380
      %v1382 = vpop.f32.mrf.mxu0
      %v1383 = vadd.f32 0.0, %v1382
      %1384 = vmatmul.bf16.gmra.mxu0 %v1310
      %v1385 = vpop.f32.mrf.mxu0
      %v1386 = vadd.f32 0.0, %v1385
      %v1387 = vpop.f32.mrf.mxu0
      %v1388 = vadd.f32 0.0, %v1387
      %1389 = vmatmul.bf16.gmra.mxu0 %v1313
      %v1390 = vpop.f32.mrf.mxu0
      %v1391 = vadd.f32 0.0, %v1390
      %v1392 = vpop.f32.mrf.mxu0
      %v1393 = vadd.f32 0.0, %v1392
      %1394 = vmatmul.bf16.gmra.mxu0 %v1316
      %v1395 = vpop.f32.mrf.mxu0
      %v1396 = vadd.f32 0.0, %v1395
      %v1397 = vpop.f32.mrf.mxu0
      %v1398 = vadd.f32 0.0, %v1397
      %1399 = vmatmul.bf16.gmra.mxu0 %v1319
      %v1400 = vpop.f32.mrf.mxu0
      %v1401 = vadd.f32 0.0, %v1400
      %v1402 = vpop.f32.mrf.mxu0
      %v1403 = vadd.f32 0.0, %v1402
      %1404 = vmatmul.bf16.gmra.mxu0 %v1322
      %v1405 = vpop.f32.mrf.mxu0
      %v1406 = vadd.f32 0.0, %v1405
      %v1407 = vpop.f32.mrf.mxu0
      %v1408 = vadd.f32 0.0, %v1407
      %1409 = vmatmul.bf16.gmra.mxu0 %v1325
      %v1410 = vpop.f32.mrf.mxu0
      %v1411 = vadd.f32 0.0, %v1410
      %v1412 = vpop.f32.mrf.mxu0
      %v1413 = vadd.f32 0.0, %v1412
      %1414 = vmatmul.bf16.gmra.mxu0 %v1328
      %v1415 = vpop.f32.mrf.mxu0
      %v1416 = vadd.f32 0.0, %v1415
      %v1417 = vpop.f32.mrf.mxu0
      %v1418 = vadd.f32 0.0, %v1417
      %1419 = vmatmul.bf16.gmra.mxu0 %v1331
      %v1420 = vpop.f32.mrf.mxu0
      %v1421 = vadd.f32 0.0, %v1420
      %v1422 = vpop.f32.mrf.mxu0
      %v1423 = vadd.f32 0.0, %v1422
      %1424 = vdwg.mxu0
      %v1425 = vadd.f32 %v993, %v1346
      %v1426 = vadd.f32 %v995, %v1348
      %v1427 = vadd.f32 %v998, %v1351
      %v1428 = vadd.f32 %v1000, %v1353
      %v1429 = vadd.f32 %v1003, %v1356
      %v1430 = vadd.f32 %v1005, %v1358
      %v1431 = vadd.f32 %v1008, %v1361
      %v1432 = vadd.f32 %v1010, %v1363
      %v1433 = vadd.f32 %v1013, %v1366
      %v1434 = vadd.f32 %v1015, %v1368
      %v1435 = vadd.f32 %v1018, %v1371
      %v1436 = vadd.f32 %v1020, %v1373
      %v1437 = vadd.f32 %v1023, %v1376
      %v1438 = vadd.f32 %v1025, %v1378
      %v1439 = vadd.f32 %v1028, %v1381
      %v1440 = vadd.f32 %v1030, %v1383
      %v1441 = vadd.f32 %v1033, %v1386
      %v1442 = vadd.f32 %v1035, %v1388
      %v1443 = vadd.f32 %v1038, %v1391
      %v1444 = vadd.f32 %v1040, %v1393
      %v1445 = vadd.f32 %v1043, %v1396
      %v1446 = vadd.f32 %v1045, %v1398
      %v1447 = vadd.f32 %v1048, %v1401
      %v1448 = vadd.f32 %v1050, %v1403
      %v1449 = vadd.f32 %v1053, %v1406
      %v1450 = vadd.f32 %v1055, %v1408
      %v1451 = vadd.f32 %v1058, %v1411
      %v1452 = vadd.f32 %v1060, %v1413
      %v1453 = vadd.f32 %v1063, %v1416
      %v1454 = vadd.f32 %v1065, %v1418
      %v1455 = vadd.f32 %v1068, %v1421
      %v1456 = vadd.f32 %v1070, %v1423
      %s1457 = scalar_lea.vmem %s206, 12
      %v1458 = vld [vmem:[%s1457] sm:$0xf]
      %v1459 = vld [vmem:[%s1457 + $0x4] sm:$0xf]
      %v1460 = vld [vmem:[%s1457 + $0xc] sm:$0xf]
      %v1461 = vld [vmem:[%s1457 + $0x10] sm:$0xf]
      %v1462 = vld [vmem:[%s1457 + $0x18] sm:$0xf]
      %v1463 = vld [vmem:[%s1457 + $0x1c] sm:$0xf]
      %v1464 = vld [vmem:[%s1457 + $0x24] sm:$0xf]
      %v1465 = vld [vmem:[%s1457 + $0x28] sm:$0xf]
      %v1466 = vld [vmem:[%s1457 + $0x30] sm:$0xf]
      %v1467 = vld [vmem:[%s1457 + $0x34] sm:$0xf]
      %v1468 = vld [vmem:[%s1457 + $0x3c] sm:$0xf]
      %v1469 = vld [vmem:[%s1457 + $0x40] sm:$0xf]
      %v1470 = vld [vmem:[%s1457 + $0x48] sm:$0xf]
      %v1471 = vld [vmem:[%s1457 + $0x4c] sm:$0xf]
      %v1472 = vld [vmem:[%s1457 + $0x54] sm:$0xf]
      %v1473 = vld [vmem:[%s1457 + $0x58] sm:$0xf]
      %v1474 = vld [vmem:[%s1457 + $0x60] sm:$0xf]
      %v1475 = vld [vmem:[%s1457 + $0x64] sm:$0xf]
      %v1476 = vld [vmem:[%s1457 + $0x6c] sm:$0xf]
      %v1477 = vld [vmem:[%s1457 + $0x70] sm:$0xf]
      %v1478 = vld [vmem:[%s1457 + $0x78] sm:$0xf]
      %v1479 = vld [vmem:[%s1457 + $0x7c] sm:$0xf]
      %v1480 = vld [vmem:[%s1457 + $0x84] sm:$0xf]
      %v1481 = vld [vmem:[%s1457 + $0x88] sm:$0xf]
      %v1482 = vld [vmem:[%s1457 + $0x90] sm:$0xf]
      %v1483 = vld [vmem:[%s1457 + $0x94] sm:$0xf]
      %v1484 = vld [vmem:[%s1457 + $0x9c] sm:$0xf]
      %v1485 = vld [vmem:[%s1457 + $0xa0] sm:$0xf]
      %v1486 = vld [vmem:[%s1457 + $0xa8] sm:$0xf]
      %v1487 = vld [vmem:[%s1457 + $0xac] sm:$0xf]
      %v1488 = vld [vmem:[%s1457 + $0xb4] sm:$0xf]
      %v1489 = vld [vmem:[%s1457 + $0xb8] sm:$0xf]
      %s1490 = scalar_lea.vmem %s210, 12
      %v1491 = vld [vmem:[%s1490] sm:$0xf]
      %v1524 = vunpack.c.l.b16 %v1458
      %v1525 = vunpack.c.l.b16 %v1459
      %v1526 = vunpack.c.l.b16 %v1460
      %v1527 = vunpack.c.l.b16 %v1461
      %v1528 = vunpack.c.l.b16 %v1462
      %v1529 = vunpack.c.l.b16 %v1463
      %v1530 = vunpack.c.l.b16 %v1464
      %v1531 = vunpack.c.l.b16 %v1465
      %v1532 = vunpack.c.l.b16 %v1466
      %v1533 = vunpack.c.l.b16 %v1467
      %v1534 = vunpack.c.l.b16 %v1468
      %v1535 = vunpack.c.l.b16 %v1469
      %v1536 = vunpack.c.l.b16 %v1470
      %v1537 = vunpack.c.l.b16 %v1471
      %v1538 = vunpack.c.l.b16 %v1472
      %v1539 = vunpack.c.l.b16 %v1473
      %v1540 = vunpack.c.l.b16 %v1474
      %v1541 = vunpack.c.l.b16 %v1475
      %v1542 = vunpack.c.l.b16 %v1476
      %v1543 = vunpack.c.l.b16 %v1477
      %v1544 = vunpack.c.l.b16 %v1478
      %v1545 = vunpack.c.l.b16 %v1479
      %v1546 = vunpack.c.l.b16 %v1480
      %v1547 = vunpack.c.l.b16 %v1481
      %v1548 = vunpack.c.l.b16 %v1482
      %v1549 = vunpack.c.l.b16 %v1483
      %v1550 = vunpack.c.l.b16 %v1484
      %v1551 = vunpack.c.l.b16 %v1485
      %v1552 = vunpack.c.l.b16 %v1486
      %v1553 = vunpack.c.l.b16 %v1487
      %v1554 = vunpack.c.l.b16 %v1488
      %v1555 = vunpack.c.l.b16 %v1489
      %v1556 = vpack.c.b16 %v1525, %v1524
      %v1557 = vpack.c.b16 %v1527, %v1526
      %v1558 = vpack.c.b16 %v1529, %v1528
      %v1559 = vpack.c.b16 %v1531, %v1530
      %v1560 = vpack.c.b16 %v1533, %v1532
      %v1561 = vpack.c.b16 %v1535, %v1534
      %v1562 = vpack.c.b16 %v1537, %v1536
      %v1563 = vpack.c.b16 %v1539, %v1538
      %v1564 = vpack.c.b16 %v1541, %v1540
      %v1565 = vpack.c.b16 %v1543, %v1542
      %v1566 = vpack.c.b16 %v1545, %v1544
      %v1567 = vpack.c.b16 %v1547, %v1546
      %v1568 = vpack.c.b16 %v1549, %v1548
      %v1569 = vpack.c.b16 %v1551, %v1550
      %v1570 = vpack.c.b16 %v1553, %v1552
      %v1571 = vpack.c.b16 %v1555, %v1554
      %v1573 = vsel %vm710, %v1556, 0
      %v1576 = vsel %vm710, %v1557, 0
      %v1579 = vsel %vm710, %v1558, 0
      %v1582 = vsel %vm710, %v1559, 0
      %v1585 = vsel %vm710, %v1560, 0
      %v1588 = vsel %vm710, %v1561, 0
      %v1591 = vsel %vm710, %v1562, 0
      %v1594 = vsel %vm710, %v1563, 0
      %v1597 = vsel %vm710, %v1564, 0
      %v1600 = vsel %vm710, %v1565, 0
      %v1603 = vsel %vm710, %v1566, 0
      %v1606 = vsel %vm710, %v1567, 0
      %v1609 = vsel %vm710, %v1568, 0
      %v1612 = vsel %vm710, %v1569, 0
      %v1615 = vsel %vm710, %v1570, 0
      %v1618 = vsel %vm710, %v1571, 0
      %v1621 = vsel %vm759, %v1491, 0
      %1623 = vmatpush.bf16.msra.mxu0 0
      %1624 = vmatpush.bf16.msra.mxu0 0
      %1625 = vmatpush.bf16.msra.mxu0 0
      %1626 = vmatpush.bf16.msra.mxu0 0
      %1627 = vmatpush.bf16.msra.mxu0 0
      %1628 = vmatpush.bf16.msra.mxu0 0
      %1629 = vmatpush.bf16.msra.mxu0 0
      %1630 = vmatpush.bf16.msra.mxu0 %v1621
      %1631 = vmatmul.bf16.gmra.mxu0 %v1573
      %v1632 = vpop.f32.mrf.mxu0
      %v1633 = vadd.f32 0.0, %v1632
      %v1634 = vpop.f32.mrf.mxu0
      %v1635 = vadd.f32 0.0, %v1634
      %1636 = vmatmul.bf16.gmra.mxu0 %v1576
      %v1637 = vpop.f32.mrf.mxu0
      %v1638 = vadd.f32 0.0, %v1637
      %v1639 = vpop.f32.mrf.mxu0
      %v1640 = vadd.f32 0.0, %v1639
      %1641 = vmatmul.bf16.gmra.mxu0 %v1579
      %v1642 = vpop.f32.mrf.mxu0
      %v1643 = vadd.f32 0.0, %v1642
      %v1644 = vpop.f32.mrf.mxu0
      %v1645 = vadd.f32 0.0, %v1644
      %1646 = vmatmul.bf16.gmra.mxu0 %v1582
      %v1647 = vpop.f32.mrf.mxu0
      %v1648 = vadd.f32 0.0, %v1647
      %v1649 = vpop.f32.mrf.mxu0
      %v1650 = vadd.f32 0.0, %v1649
      %1651 = vmatmul.bf16.gmra.mxu0 %v1585
      %v1652 = vpop.f32.mrf.mxu0
      %v1653 = vadd.f32 0.0, %v1652
      %v1654 = vpop.f32.mrf.mxu0
      %v1655 = vadd.f32 0.0, %v1654
      %1656 = vmatmul.bf16.gmra.mxu0 %v1588
      %v1657 = vpop.f32.mrf.mxu0
      %v1658 = vadd.f32 0.0, %v1657
      %v1659 = vpop.f32.mrf.mxu0
      %v1660 = vadd.f32 0.0, %v1659
      %1661 = vmatmul.bf16.gmra.mxu0 %v1591
      %v1662 = vpop.f32.mrf.mxu0
      %v1663 = vadd.f32 0.0, %v1662
      %v1664 = vpop.f32.mrf.mxu0
      %v1665 = vadd.f32 0.0, %v1664
      %1666 = vmatmul.bf16.gmra.mxu0 %v1594
      %v1667 = vpop.f32.mrf.mxu0
      %v1668 = vadd.f32 0.0, %v1667
      %v1669 = vpop.f32.mrf.mxu0
      %v1670 = vadd.f32 0.0, %v1669
      %1671 = vmatmul.bf16.gmra.mxu0 %v1597
      %v1672 = vpop.f32.mrf.mxu0
      %v1673 = vadd.f32 0.0, %v1672
      %v1674 = vpop.f32.mrf.mxu0
      %v1675 = vadd.f32 0.0, %v1674
      %1676 = vmatmul.bf16.gmra.mxu0 %v1600
      %v1677 = vpop.f32.mrf.mxu0
      %v1678 = vadd.f32 0.0, %v1677
      %v1679 = vpop.f32.mrf.mxu0
      %v1680 = vadd.f32 0.0, %v1679
      %1681 = vmatmul.bf16.gmra.mxu0 %v1603
      %v1682 = vpop.f32.mrf.mxu0
      %v1683 = vadd.f32 0.0, %v1682
      %v1684 = vpop.f32.mrf.mxu0
      %v1685 = vadd.f32 0.0, %v1684
      %1686 = vmatmul.bf16.gmra.mxu0 %v1606
      %v1687 = vpop.f32.mrf.mxu0
      %v1688 = vadd.f32 0.0, %v1687
      %v1689 = vpop.f32.mrf.mxu0
      %v1690 = vadd.f32 0.0, %v1689
      %1691 = vmatmul.bf16.gmra.mxu0 %v1609
      %v1692 = vpop.f32.mrf.mxu0
      %v1693 = vadd.f32 0.0, %v1692
      %v1694 = vpop.f32.mrf.mxu0
      %v1695 = vadd.f32 0.0, %v1694
      %1696 = vmatmul.bf16.gmra.mxu0 %v1612
      %v1697 = vpop.f32.mrf.mxu0
      %v1698 = vadd.f32 0.0, %v1697
      %v1699 = vpop.f32.mrf.mxu0
      %v1700 = vadd.f32 0.0, %v1699
      %1701 = vmatmul.bf16.gmra.mxu0 %v1615
      %v1702 = vpop.f32.mrf.mxu0
      %v1703 = vadd.f32 0.0, %v1702
      %v1704 = vpop.f32.mrf.mxu0
      %v1705 = vadd.f32 0.0, %v1704
      %1706 = vmatmul.bf16.gmra.mxu0 %v1618
      %v1707 = vpop.f32.mrf.mxu0
      %v1708 = vadd.f32 0.0, %v1707
      %v1709 = vpop.f32.mrf.mxu0
      %v1710 = vadd.f32 0.0, %v1709
      %1711 = vdwg.mxu0
      %v1712 = vadd.f32 %v1425, %v1633
      %v1713 = vadd.f32 %v1426, %v1635
      %v1714 = vadd.f32 %v1427, %v1638
      %v1715 = vadd.f32 %v1428, %v1640
      %v1716 = vadd.f32 %v1429, %v1643
      %v1717 = vadd.f32 %v1430, %v1645
      %v1718 = vadd.f32 %v1431, %v1648
      %v1719 = vadd.f32 %v1432, %v1650
      %v1720 = vadd.f32 %v1433, %v1653
      %v1721 = vadd.f32 %v1434, %v1655
      %v1722 = vadd.f32 %v1435, %v1658
      %v1723 = vadd.f32 %v1436, %v1660
      %v1724 = vadd.f32 %v1437, %v1663
      %v1725 = vadd.f32 %v1438, %v1665
      %v1726 = vadd.f32 %v1439, %v1668
      %v1727 = vadd.f32 %v1440, %v1670
      %v1728 = vadd.f32 %v1441, %v1673
      %v1729 = vadd.f32 %v1442, %v1675
      %v1730 = vadd.f32 %v1443, %v1678
      %v1731 = vadd.f32 %v1444, %v1680
      %v1732 = vadd.f32 %v1445, %v1683
      %v1733 = vadd.f32 %v1446, %v1685
      %v1734 = vadd.f32 %v1447, %v1688
      %v1735 = vadd.f32 %v1448, %v1690
      %v1736 = vadd.f32 %v1449, %v1693
      %v1737 = vadd.f32 %v1450, %v1695
      %v1738 = vadd.f32 %v1451, %v1698
      %v1739 = vadd.f32 %v1452, %v1700
      %v1740 = vadd.f32 %v1453, %v1703
      %v1741 = vadd.f32 %v1454, %v1705
      %v1742 = vadd.f32 %v1455, %v1708
      %v1743 = vadd.f32 %v1456, %v1710
      %v1744 = vld [vmem:[%s1457] sm:$0xf]
      %v1745 = vld [vmem:[%s1457 + $0x4] sm:$0xf]
      %v1746 = vld [vmem:[%s1457 + $0x8] sm:$0x1]
      %v1747 = vld [vmem:[%s1457 + $0xc] sm:$0xf]
      %v1748 = vld [vmem:[%s1457 + $0x10] sm:$0xf]
      %v1749 = vld [vmem:[%s1457 + $0x14] sm:$0x1]
      %v1750 = vld [vmem:[%s1457 + $0x18] sm:$0xf]
      %v1751 = vld [vmem:[%s1457 + $0x1c] sm:$0xf]
      %v1752 = vld [vmem:[%s1457 + $0x20] sm:$0x1]
      %v1753 = vld [vmem:[%s1457 + $0x24] sm:$0xf]
      %v1754 = vld [vmem:[%s1457 + $0x28] sm:$0xf]
      %v1755 = vld [vmem:[%s1457 + $0x2c] sm:$0x1]
      %v1756 = vld [vmem:[%s1457 + $0x30] sm:$0xf]
      %v1757 = vld [vmem:[%s1457 + $0x34] sm:$0xf]
      %v1758 = vld [vmem:[%s1457 + $0x38] sm:$0x1]
      %v1759 = vld [vmem:[%s1457 + $0x3c] sm:$0xf]
      %v1760 = vld [vmem:[%s1457 + $0x40] sm:$0xf]
      %v1761 = vld [vmem:[%s1457 + $0x44] sm:$0x1]
      %v1762 = vld [vmem:[%s1457 + $0x48] sm:$0xf]
      %v1763 = vld [vmem:[%s1457 + $0x4c] sm:$0xf]
      %v1764 = vld [vmem:[%s1457 + $0x50] sm:$0x1]
      %v1765 = vld [vmem:[%s1457 + $0x54] sm:$0xf]
      %v1766 = vld [vmem:[%s1457 + $0x58] sm:$0xf]
      %v1767 = vld [vmem:[%s1457 + $0x5c] sm:$0x1]
      %v1768 = vld [vmem:[%s1457 + $0x60] sm:$0xf]
      %v1769 = vld [vmem:[%s1457 + $0x64] sm:$0xf]
      %v1770 = vld [vmem:[%s1457 + $0x68] sm:$0x1]
      %v1771 = vld [vmem:[%s1457 + $0x6c] sm:$0xf]
      %v1772 = vld [vmem:[%s1457 + $0x70] sm:$0xf]
      %v1773 = vld [vmem:[%s1457 + $0x74] sm:$0x1]
      %v1774 = vld [vmem:[%s1457 + $0x78] sm:$0xf]
      %v1775 = vld [vmem:[%s1457 + $0x7c] sm:$0xf]
      %v1776 = vld [vmem:[%s1457 + $0x80] sm:$0x1]
      %v1777 = vld [vmem:[%s1457 + $0x84] sm:$0xf]
      %v1778 = vld [vmem:[%s1457 + $0x88] sm:$0xf]
      %v1779 = vld [vmem:[%s1457 + $0x8c] sm:$0x1]
      %v1780 = vld [vmem:[%s1457 + $0x90] sm:$0xf]
      %v1781 = vld [vmem:[%s1457 + $0x94] sm:$0xf]
      %v1782 = vld [vmem:[%s1457 + $0x98] sm:$0x1]
      %v1783 = vld [vmem:[%s1457 + $0x9c] sm:$0xf]
      %v1784 = vld [vmem:[%s1457 + $0xa0] sm:$0xf]
      %v1785 = vld [vmem:[%s1457 + $0xa4] sm:$0x1]
      %v1786 = vld [vmem:[%s1457 + $0xa8] sm:$0xf]
      %v1787 = vld [vmem:[%s1457 + $0xac] sm:$0xf]
      %v1788 = vld [vmem:[%s1457 + $0xb0] sm:$0x1]
      %v1789 = vld [vmem:[%s1457 + $0xb4] sm:$0xf]
      %v1790 = vld [vmem:[%s1457 + $0xb8] sm:$0xf]
      %v1791 = vld [vmem:[%s1457 + $0xbc] sm:$0x1]
      %v1793 = vshrl.u32 %v1744, 16
      %v1795 = vrot.slane %v1793, 4
      %v1796 = vshll.u32 %v1744, 16
      %v1798 = vrot.slane %v1796, 5
      %v1799 = vor.u32 %v1795, %v1798
      %v1800 = vrot.slane %v1799, 4
      %v1802 = vshll.u32 %v1745, 16
      %v1804 = vrot.slane %v1802, 5
      %v1805 = vsel %vm275, %v1800, %v1804
      %v1806 = vshrl.u32 %v1745, 16
      %v1808 = vrot.slane %v1806, 4
      %v1809 = vor.u32 %v1808, %v1804
      %v1810 = vrot.slane %v1809, 4
      %v1812 = vshll.u32 %v1746, 16
      %v1814 = vrot.slane %v1812, 5
      %v1815 = vsel %vm275, %v1810, %v1814
      %v1817 = vshrl.u32 %v1747, 16
      %v1819 = vrot.slane %v1817, 4
      %v1820 = vshll.u32 %v1747, 16
      %v1822 = vrot.slane %v1820, 5
      %v1823 = vor.u32 %v1819, %v1822
      %v1824 = vrot.slane %v1823, 4
      %v1826 = vshll.u32 %v1748, 16
      %v1828 = vrot.slane %v1826, 5
      %v1829 = vsel %vm275, %v1824, %v1828
      %v1830 = vshrl.u32 %v1748, 16
      %v1832 = vrot.slane %v1830, 4
      %v1833 = vor.u32 %v1832, %v1828
      %v1834 = vrot.slane %v1833, 4
      %v1836 = vshll.u32 %v1749, 16
      %v1838 = vrot.slane %v1836, 5
      %v1839 = vsel %vm275, %v1834, %v1838
      %v1841 = vshrl.u32 %v1750, 16
      %v1843 = vrot.slane %v1841, 4
      %v1844 = vshll.u32 %v1750, 16
      %v1846 = vrot.slane %v1844, 5
      %v1847 = vor.u32 %v1843, %v1846
      %v1848 = vrot.slane %v1847, 4
      %v1850 = vshll.u32 %v1751, 16
      %v1852 = vrot.slane %v1850, 5
      %v1853 = vsel %vm275, %v1848, %v1852
      %v1854 = vshrl.u32 %v1751, 16
      %v1856 = vrot.slane %v1854, 4
      %v1857 = vor.u32 %v1856, %v1852
      %v1858 = vrot.slane %v1857, 4
      %v1860 = vshll.u32 %v1752, 16
      %v1862 = vrot.slane %v1860, 5
      %v1863 = vsel %vm275, %v1858, %v1862
      %v1865 = vshrl.u32 %v1753, 16
      %v1867 = vrot.slane %v1865, 4
      %v1868 = vshll.u32 %v1753, 16
      %v1870 = vrot.slane %v1868, 5
      %v1871 = vor.u32 %v1867, %v1870
      %v1872 = vrot.slane %v1871, 4
      %v1874 = vshll.u32 %v1754, 16
      %v1876 = vrot.slane %v1874, 5
      %v1877 = vsel %vm275, %v1872, %v1876
      %v1878 = vshrl.u32 %v1754, 16
      %v1880 = vrot.slane %v1878, 4
      %v1881 = vor.u32 %v1880, %v1876
      %v1882 = vrot.slane %v1881, 4
      %v1884 = vshll.u32 %v1755, 16
      %v1886 = vrot.slane %v1884, 5
      %v1887 = vsel %vm275, %v1882, %v1886
      %v1889 = vshrl.u32 %v1756, 16
      %v1891 = vrot.slane %v1889, 4
      %v1892 = vshll.u32 %v1756, 16
      %v1894 = vrot.slane %v1892, 5
      %v1895 = vor.u32 %v1891, %v1894
      %v1896 = vrot.slane %v1895, 4
      %v1898 = vshll.u32 %v1757, 16
      %v1900 = vrot.slane %v1898, 5
      %v1901 = vsel %vm275, %v1896, %v1900
      %v1902 = vshrl.u32 %v1757, 16
      %v1904 = vrot.slane %v1902, 4
      %v1905 = vor.u32 %v1904, %v1900
      %v1906 = vrot.slane %v1905, 4
      %v1908 = vshll.u32 %v1758, 16
      %v1910 = vrot.slane %v1908, 5
      %v1911 = vsel %vm275, %v1906, %v1910
      %v1913 = vshrl.u32 %v1759, 16
      %v1915 = vrot.slane %v1913, 4
      %v1916 = vshll.u32 %v1759, 16
      %v1918 = vrot.slane %v1916, 5
      %v1919 = vor.u32 %v1915, %v1918
      %v1920 = vrot.slane %v1919, 4
      %v1922 = vshll.u32 %v1760, 16
      %v1924 = vrot.slane %v1922, 5
      %v1925 = vsel %vm275, %v1920, %v1924
      %v1926 = vshrl.u32 %v1760, 16
      %v1928 = vrot.slane %v1926, 4
      %v1929 = vor.u32 %v1928, %v1924
      %v1930 = vrot.slane %v1929, 4
      %v1932 = vshll.u32 %v1761, 16
      %v1934 = vrot.slane %v1932, 5
      %v1935 = vsel %vm275, %v1930, %v1934
      %v1937 = vshrl.u32 %v1762, 16
      %v1939 = vrot.slane %v1937, 4
      %v1940 = vshll.u32 %v1762, 16
      %v1942 = vrot.slane %v1940, 5
      %v1943 = vor.u32 %v1939, %v1942
      %v1944 = vrot.slane %v1943, 4
      %v1946 = vshll.u32 %v1763, 16
      %v1948 = vrot.slane %v1946, 5
      %v1949 = vsel %vm275, %v1944, %v1948
      %v1950 = vshrl.u32 %v1763, 16
      %v1952 = vrot.slane %v1950, 4
      %v1953 = vor.u32 %v1952, %v1948
      %v1954 = vrot.slane %v1953, 4
      %v1956 = vshll.u32 %v1764, 16
      %v1958 = vrot.slane %v1956, 5
      %v1959 = vsel %vm275, %v1954, %v1958
      %v1961 = vshrl.u32 %v1765, 16
      %v1963 = vrot.slane %v1961, 4
      %v1964 = vshll.u32 %v1765, 16
      %v1966 = vrot.slane %v1964, 5
      %v1967 = vor.u32 %v1963, %v1966
      %v1968 = vrot.slane %v1967, 4
      %v1970 = vshll.u32 %v1766, 16
      %v1972 = vrot.slane %v1970, 5
      %v1973 = vsel %vm275, %v1968, %v1972
      %v1974 = vshrl.u32 %v1766, 16
      %v1976 = vrot.slane %v1974, 4
      %v1977 = vor.u32 %v1976, %v1972
      %v1978 = vrot.slane %v1977, 4
      %v1980 = vshll.u32 %v1767, 16
      %v1982 = vrot.slane %v1980, 5
      %v1983 = vsel %vm275, %v1978, %v1982
      %v1985 = vshrl.u32 %v1768, 16
      %v1987 = vrot.slane %v1985, 4
      %v1988 = vshll.u32 %v1768, 16
      %v1990 = vrot.slane %v1988, 5
      %v1991 = vor.u32 %v1987, %v1990
      %v1992 = vrot.slane %v1991, 4
      %v1994 = vshll.u32 %v1769, 16
      %v1996 = vrot.slane %v1994, 5
      %v1997 = vsel %vm275, %v1992, %v1996
      %v1998 = vshrl.u32 %v1769, 16
      %v2000 = vrot.slane %v1998, 4
      %v2001 = vor.u32 %v2000, %v1996
      %v2002 = vrot.slane %v2001, 4
      %v2004 = vshll.u32 %v1770, 16
      %v2006 = vrot.slane %v2004, 5
      %v2007 = vsel %vm275, %v2002, %v2006
      %v2009 = vshrl.u32 %v1771, 16
      %v2011 = vrot.slane %v2009, 4
      %v2012 = vshll.u32 %v1771, 16
      %v2014 = vrot.slane %v2012, 5
      %v2015 = vor.u32 %v2011, %v2014
      %v2016 = vrot.slane %v2015, 4
      %v2018 = vshll.u32 %v1772, 16
      %v2020 = vrot.slane %v2018, 5
      %v2021 = vsel %vm275, %v2016, %v2020
      %v2022 = vshrl.u32 %v1772, 16
      %v2024 = vrot.slane %v2022, 4
      %v2025 = vor.u32 %v2024, %v2020
      %v2026 = vrot.slane %v2025, 4
      %v2028 = vshll.u32 %v1773, 16
      %v2030 = vrot.slane %v2028, 5
      %v2031 = vsel %vm275, %v2026, %v2030
      %v2033 = vshrl.u32 %v1774, 16
      %v2035 = vrot.slane %v2033, 4
      %v2036 = vshll.u32 %v1774, 16
      %v2038 = vrot.slane %v2036, 5
      %v2039 = vor.u32 %v2035, %v2038
      %v2040 = vrot.slane %v2039, 4
      %v2042 = vshll.u32 %v1775, 16
      %v2044 = vrot.slane %v2042, 5
      %v2045 = vsel %vm275, %v2040, %v2044
      %v2046 = vshrl.u32 %v1775, 16
      %v2048 = vrot.slane %v2046, 4
      %v2049 = vor.u32 %v2048, %v2044
      %v2050 = vrot.slane %v2049, 4
      %v2052 = vshll.u32 %v1776, 16
      %v2054 = vrot.slane %v2052, 5
      %v2055 = vsel %vm275, %v2050, %v2054
      %v2057 = vshrl.u32 %v1777, 16
      %v2059 = vrot.slane %v2057, 4
      %v2060 = vshll.u32 %v1777, 16
      %v2062 = vrot.slane %v2060, 5
      %v2063 = vor.u32 %v2059, %v2062
      %v2064 = vrot.slane %v2063, 4
      %v2066 = vshll.u32 %v1778, 16
      %v2068 = vrot.slane %v2066, 5
      %v2069 = vsel %vm275, %v2064, %v2068
      %v2070 = vshrl.u32 %v1778, 16
      %v2072 = vrot.slane %v2070, 4
      %v2073 = vor.u32 %v2072, %v2068
      %v2074 = vrot.slane %v2073, 4
      %v2076 = vshll.u32 %v1779, 16
      %v2078 = vrot.slane %v2076, 5
      %v2079 = vsel %vm275, %v2074, %v2078
      %v2081 = vshrl.u32 %v1780, 16
      %v2083 = vrot.slane %v2081, 4
      %v2084 = vshll.u32 %v1780, 16
      %v2086 = vrot.slane %v2084, 5
      %v2087 = vor.u32 %v2083, %v2086
      %v2088 = vrot.slane %v2087, 4
      %v2090 = vshll.u32 %v1781, 16
      %v2092 = vrot.slane %v2090, 5
      %v2093 = vsel %vm275, %v2088, %v2092
      %v2094 = vshrl.u32 %v1781, 16
      %v2096 = vrot.slane %v2094, 4
      %v2097 = vor.u32 %v2096, %v2092
      %v2098 = vrot.slane %v2097, 4
      %v2100 = vshll.u32 %v1782, 16
      %v2102 = vrot.slane %v2100, 5
      %v2103 = vsel %vm275, %v2098, %v2102
      %v2105 = vshrl.u32 %v1783, 16
      %v2107 = vrot.slane %v2105, 4
      %v2108 = vshll.u32 %v1783, 16
      %v2110 = vrot.slane %v2108, 5
      %v2111 = vor.u32 %v2107, %v2110
      %v2112 = vrot.slane %v2111, 4
      %v2114 = vshll.u32 %v1784, 16
      %v2116 = vrot.slane %v2114, 5
      %v2117 = vsel %vm275, %v2112, %v2116
      %v2118 = vshrl.u32 %v1784, 16
      %v2120 = vrot.slane %v2118, 4
      %v2121 = vor.u32 %v2120, %v2116
      %v2122 = vrot.slane %v2121, 4
      %v2124 = vshll.u32 %v1785, 16
      %v2126 = vrot.slane %v2124, 5
      %v2127 = vsel %vm275, %v2122, %v2126
      %v2129 = vshrl.u32 %v1786, 16
      %v2131 = vrot.slane %v2129, 4
      %v2132 = vshll.u32 %v1786, 16
      %v2134 = vrot.slane %v2132, 5
      %v2135 = vor.u32 %v2131, %v2134
      %v2136 = vrot.slane %v2135, 4
      %v2138 = vshll.u32 %v1787, 16
      %v2140 = vrot.slane %v2138, 5
      %v2141 = vsel %vm275, %v2136, %v2140
      %v2142 = vshrl.u32 %v1787, 16
      %v2144 = vrot.slane %v2142, 4
      %v2145 = vor.u32 %v2144, %v2140
      %v2146 = vrot.slane %v2145, 4
      %v2148 = vshll.u32 %v1788, 16
      %v2150 = vrot.slane %v2148, 5
      %v2151 = vsel %vm275, %v2146, %v2150
      %v2153 = vshrl.u32 %v1789, 16
      %v2155 = vrot.slane %v2153, 4
      %v2156 = vshll.u32 %v1789, 16
      %v2158 = vrot.slane %v2156, 5
      %v2159 = vor.u32 %v2155, %v2158
      %v2160 = vrot.slane %v2159, 4
      %v2162 = vshll.u32 %v1790, 16
      %v2164 = vrot.slane %v2162, 5
      %v2165 = vsel %vm275, %v2160, %v2164
      %v2166 = vshrl.u32 %v1790, 16
      %v2168 = vrot.slane %v2166, 4
      %v2169 = vor.u32 %v2168, %v2164
      %v2170 = vrot.slane %v2169, 4
      %v2172 = vshll.u32 %v1791, 16
      %v2174 = vrot.slane %v2172, 5
      %v2175 = vsel %vm275, %v2170, %v2174
      %s2176 = scalar_lea.vmem %s210, 16
      %v2177 = vld [vmem:[%s2176] sm:$0xf]
      %v2178 = vunpack.c.l.b16 %v1805
      %v2179 = vunpack.c.l.b16 %v1815
      %v2180 = vunpack.c.l.b16 %v1829
      %v2181 = vunpack.c.l.b16 %v1839
      %v2182 = vunpack.c.l.b16 %v1853
      %v2183 = vunpack.c.l.b16 %v1863
      %v2184 = vunpack.c.l.b16 %v1877
      %v2185 = vunpack.c.l.b16 %v1887
      %v2186 = vunpack.c.l.b16 %v1901
      %v2187 = vunpack.c.l.b16 %v1911
      %v2188 = vunpack.c.l.b16 %v1925
      %v2189 = vunpack.c.l.b16 %v1935
      %v2190 = vunpack.c.l.b16 %v1949
      %v2191 = vunpack.c.l.b16 %v1959
      %v2192 = vunpack.c.l.b16 %v1973
      %v2193 = vunpack.c.l.b16 %v1983
      %v2194 = vunpack.c.l.b16 %v1997
      %v2195 = vunpack.c.l.b16 %v2007
      %v2196 = vunpack.c.l.b16 %v2021
      %v2197 = vunpack.c.l.b16 %v2031
      %v2198 = vunpack.c.l.b16 %v2045
      %v2199 = vunpack.c.l.b16 %v2055
      %v2200 = vunpack.c.l.b16 %v2069
      %v2201 = vunpack.c.l.b16 %v2079
      %v2202 = vunpack.c.l.b16 %v2093
      %v2203 = vunpack.c.l.b16 %v2103
      %v2204 = vunpack.c.l.b16 %v2117
      %v2205 = vunpack.c.l.b16 %v2127
      %v2206 = vunpack.c.l.b16 %v2141
      %v2207 = vunpack.c.l.b16 %v2151
      %v2208 = vunpack.c.l.b16 %v2165
      %v2209 = vunpack.c.l.b16 %v2175
      %v2210 = vpack.c.b16 %v2179, %v2178
      %v2211 = vpack.c.b16 %v2181, %v2180
      %v2212 = vpack.c.b16 %v2183, %v2182
      %v2213 = vpack.c.b16 %v2185, %v2184
      %v2214 = vpack.c.b16 %v2187, %v2186
      %v2215 = vpack.c.b16 %v2189, %v2188
      %v2216 = vpack.c.b16 %v2191, %v2190
      %v2217 = vpack.c.b16 %v2193, %v2192
      %v2218 = vpack.c.b16 %v2195, %v2194
      %v2219 = vpack.c.b16 %v2197, %v2196
      %v2220 = vpack.c.b16 %v2199, %v2198
      %v2221 = vpack.c.b16 %v2201, %v2200
      %v2222 = vpack.c.b16 %v2203, %v2202
      %v2223 = vpack.c.b16 %v2205, %v2204
      %v2224 = vpack.c.b16 %v2207, %v2206
      %v2225 = vpack.c.b16 %v2209, %v2208
      %v2227 = vsel %vm710, %v2210, 0
      %v2230 = vsel %vm710, %v2211, 0
      %v2233 = vsel %vm710, %v2212, 0
      %v2236 = vsel %vm710, %v2213, 0
      %v2239 = vsel %vm710, %v2214, 0
      %v2242 = vsel %vm710, %v2215, 0
      %v2245 = vsel %vm710, %v2216, 0
      %v2248 = vsel %vm710, %v2217, 0
      %v2251 = vsel %vm710, %v2218, 0
      %v2254 = vsel %vm710, %v2219, 0
      %v2257 = vsel %vm710, %v2220, 0
      %v2260 = vsel %vm710, %v2221, 0
      %v2263 = vsel %vm710, %v2222, 0
      %v2266 = vsel %vm710, %v2223, 0
      %v2269 = vsel %vm710, %v2224, 0
      %v2272 = vsel %vm710, %v2225, 0
      %v2275 = vsel %vm759, %v2177, 0
      %2277 = vmatpush.bf16.msra.mxu0 0
      %2278 = vmatpush.bf16.msra.mxu0 0
      %2279 = vmatpush.bf16.msra.mxu0 0
      %2280 = vmatpush.bf16.msra.mxu0 0
      %2281 = vmatpush.bf16.msra.mxu0 0
      %2282 = vmatpush.bf16.msra.mxu0 0
      %2283 = vmatpush.bf16.msra.mxu0 0
      %2284 = vmatpush.bf16.msra.mxu0 %v2275
      %2285 = vmatmul.bf16.gmra.mxu0 %v2227
      %v2286 = vpop.f32.mrf.mxu0
      %v2287 = vadd.f32 0.0, %v2286
      %v2288 = vpop.f32.mrf.mxu0
      %v2289 = vadd.f32 0.0, %v2288
      %2290 = vmatmul.bf16.gmra.mxu0 %v2230
      %v2291 = vpop.f32.mrf.mxu0
      %v2292 = vadd.f32 0.0, %v2291
      %v2293 = vpop.f32.mrf.mxu0
      %v2294 = vadd.f32 0.0, %v2293
      %2295 = vmatmul.bf16.gmra.mxu0 %v2233
      %v2296 = vpop.f32.mrf.mxu0
      %v2297 = vadd.f32 0.0, %v2296
      %v2298 = vpop.f32.mrf.mxu0
      %v2299 = vadd.f32 0.0, %v2298
      %2300 = vmatmul.bf16.gmra.mxu0 %v2236
      %v2301 = vpop.f32.mrf.mxu0
      %v2302 = vadd.f32 0.0, %v2301
      %v2303 = vpop.f32.mrf.mxu0
      %v2304 = vadd.f32 0.0, %v2303
      %2305 = vmatmul.bf16.gmra.mxu0 %v2239
      %v2306 = vpop.f32.mrf.mxu0
      %v2307 = vadd.f32 0.0, %v2306
      %v2308 = vpop.f32.mrf.mxu0
      %v2309 = vadd.f32 0.0, %v2308
      %2310 = vmatmul.bf16.gmra.mxu0 %v2242
      %v2311 = vpop.f32.mrf.mxu0
      %v2312 = vadd.f32 0.0, %v2311
      %v2313 = vpop.f32.mrf.mxu0
      %v2314 = vadd.f32 0.0, %v2313
      %2315 = vmatmul.bf16.gmra.mxu0 %v2245
      %v2316 = vpop.f32.mrf.mxu0
      %v2317 = vadd.f32 0.0, %v2316
      %v2318 = vpop.f32.mrf.mxu0
      %v2319 = vadd.f32 0.0, %v2318
      %2320 = vmatmul.bf16.gmra.mxu0 %v2248
      %v2321 = vpop.f32.mrf.mxu0
      %v2322 = vadd.f32 0.0, %v2321
      %v2323 = vpop.f32.mrf.mxu0
      %v2324 = vadd.f32 0.0, %v2323
      %2325 = vmatmul.bf16.gmra.mxu0 %v2251
      %v2326 = vpop.f32.mrf.mxu0
      %v2327 = vadd.f32 0.0, %v2326
      %v2328 = vpop.f32.mrf.mxu0
      %v2329 = vadd.f32 0.0, %v2328
      %2330 = vmatmul.bf16.gmra.mxu0 %v2254
      %v2331 = vpop.f32.mrf.mxu0
      %v2332 = vadd.f32 0.0, %v2331
      %v2333 = vpop.f32.mrf.mxu0
      %v2334 = vadd.f32 0.0, %v2333
      %2335 = vmatmul.bf16.gmra.mxu0 %v2257
      %v2336 = vpop.f32.mrf.mxu0
      %v2337 = vadd.f32 0.0, %v2336
      %v2338 = vpop.f32.mrf.mxu0
      %v2339 = vadd.f32 0.0, %v2338
      %2340 = vmatmul.bf16.gmra.mxu0 %v2260
      %v2341 = vpop.f32.mrf.mxu0
      %v2342 = vadd.f32 0.0, %v2341
      %v2343 = vpop.f32.mrf.mxu0
      %v2344 = vadd.f32 0.0, %v2343
      %2345 = vmatmul.bf16.gmra.mxu0 %v2263
      %v2346 = vpop.f32.mrf.mxu0
      %v2347 = vadd.f32 0.0, %v2346
      %v2348 = vpop.f32.mrf.mxu0
      %v2349 = vadd.f32 0.0, %v2348
      %2350 = vmatmul.bf16.gmra.mxu0 %v2266
      %v2351 = vpop.f32.mrf.mxu0
      %v2352 = vadd.f32 0.0, %v2351
      %v2353 = vpop.f32.mrf.mxu0
      %v2354 = vadd.f32 0.0, %v2353
      %2355 = vmatmul.bf16.gmra.mxu0 %v2269
      %v2356 = vpop.f32.mrf.mxu0
      %v2357 = vadd.f32 0.0, %v2356
      %v2358 = vpop.f32.mrf.mxu0
      %v2359 = vadd.f32 0.0, %v2358
      %2360 = vmatmul.bf16.gmra.mxu0 %v2272
      %v2361 = vpop.f32.mrf.mxu0
      %v2362 = vadd.f32 0.0, %v2361
      %v2363 = vpop.f32.mrf.mxu0
      %v2364 = vadd.f32 0.0, %v2363
      %2365 = vdwg.mxu0
      %v2366 = vadd.f32 %v1712, %v2287
      %v2367 = vadd.f32 %v1713, %v2289
      %v2368 = vadd.f32 %v1714, %v2292
      %v2369 = vadd.f32 %v1715, %v2294
      %v2370 = vadd.f32 %v1716, %v2297
      %v2371 = vadd.f32 %v1717, %v2299
      %v2372 = vadd.f32 %v1718, %v2302
      %v2373 = vadd.f32 %v1719, %v2304
      %v2374 = vadd.f32 %v1720, %v2307
      %v2375 = vadd.f32 %v1721, %v2309
      %v2376 = vadd.f32 %v1722, %v2312
      %v2377 = vadd.f32 %v1723, %v2314
      %v2378 = vadd.f32 %v1724, %v2317
      %v2379 = vadd.f32 %v1725, %v2319
      %v2380 = vadd.f32 %v1726, %v2322
      %v2381 = vadd.f32 %v1727, %v2324
      %v2382 = vadd.f32 %v1728, %v2327
      %v2383 = vadd.f32 %v1729, %v2329
      %v2384 = vadd.f32 %v1730, %v2332
      %v2385 = vadd.f32 %v1731, %v2334
      %v2386 = vadd.f32 %v1732, %v2337
      %v2387 = vadd.f32 %v1733, %v2339
      %v2388 = vadd.f32 %v1734, %v2342
      %v2389 = vadd.f32 %v1735, %v2344
      %v2390 = vadd.f32 %v1736, %v2347
      %v2391 = vadd.f32 %v1737, %v2349
      %v2392 = vadd.f32 %v1738, %v2352
      %v2393 = vadd.f32 %v1739, %v2354
      %v2394 = vadd.f32 %v1740, %v2357
      %v2395 = vadd.f32 %v1741, %v2359
      %v2396 = vadd.f32 %v1742, %v2362
      %v2397 = vadd.f32 %v1743, %v2364
      %v2398 = vld [vmem:[%s1457] sm:$0xe]
      %v2399 = vld [vmem:[%s1457 + $0xc] sm:$0xe]
      %v2400 = vld [vmem:[%s1457 + $0x18] sm:$0xe]
      %v2401 = vld [vmem:[%s1457 + $0x24] sm:$0xe]
      %v2402 = vld [vmem:[%s1457 + $0x30] sm:$0xe]
      %v2403 = vld [vmem:[%s1457 + $0x3c] sm:$0xe]
      %v2404 = vld [vmem:[%s1457 + $0x48] sm:$0xe]
      %v2405 = vld [vmem:[%s1457 + $0x54] sm:$0xe]
      %v2406 = vld [vmem:[%s1457 + $0x60] sm:$0xe]
      %v2407 = vld [vmem:[%s1457 + $0x6c] sm:$0xe]
      %v2408 = vld [vmem:[%s1457 + $0x78] sm:$0xe]
      %v2409 = vld [vmem:[%s1457 + $0x84] sm:$0xe]
      %v2410 = vld [vmem:[%s1457 + $0x90] sm:$0xe]
      %v2411 = vld [vmem:[%s1457 + $0x9c] sm:$0xe]
      %v2412 = vld [vmem:[%s1457 + $0xa8] sm:$0xe]
      %v2413 = vld [vmem:[%s1457 + $0xb4] sm:$0xe]
      %v2462 = vrot.slane %v2398, 5
      %v2463 = vrot.slane %v2462, 4
      %v2464 = vrot.slane %v1745, 5
      %v2465 = vsel %vm1122, %v2463, %v2464
      %v2466 = vrot.slane %v2464, 4
      %v2467 = vrot.slane %v1746, 5
      %v2468 = vsel %vm1122, %v2466, %v2467
      %v2469 = vrot.slane %v2399, 5
      %v2470 = vrot.slane %v2469, 4
      %v2471 = vrot.slane %v1748, 5
      %v2472 = vsel %vm1122, %v2470, %v2471
      %v2473 = vrot.slane %v2471, 4
      %v2474 = vrot.slane %v1749, 5
      %v2475 = vsel %vm1122, %v2473, %v2474
      %v2476 = vrot.slane %v2400, 5
      %v2477 = vrot.slane %v2476, 4
      %v2478 = vrot.slane %v1751, 5
      %v2479 = vsel %vm1122, %v2477, %v2478
      %v2480 = vrot.slane %v2478, 4
      %v2481 = vrot.slane %v1752, 5
      %v2482 = vsel %vm1122, %v2480, %v2481
      %v2483 = vrot.slane %v2401, 5
      %v2484 = vrot.slane %v2483, 4
      %v2485 = vrot.slane %v1754, 5
      %v2486 = vsel %vm1122, %v2484, %v2485
      %v2487 = vrot.slane %v2485, 4
      %v2488 = vrot.slane %v1755, 5
      %v2489 = vsel %vm1122, %v2487, %v2488
      %v2490 = vrot.slane %v2402, 5
      %v2491 = vrot.slane %v2490, 4
      %v2492 = vrot.slane %v1757, 5
      %v2493 = vsel %vm1122, %v2491, %v2492
      %v2494 = vrot.slane %v2492, 4
      %v2495 = vrot.slane %v1758, 5
      %v2496 = vsel %vm1122, %v2494, %v2495
      %v2497 = vrot.slane %v2403, 5
      %v2498 = vrot.slane %v2497, 4
      %v2499 = vrot.slane %v1760, 5
      %v2500 = vsel %vm1122, %v2498, %v2499
      %v2501 = vrot.slane %v2499, 4
      %v2502 = vrot.slane %v1761, 5
      %v2503 = vsel %vm1122, %v2501, %v2502
      %v2504 = vrot.slane %v2404, 5
      %v2505 = vrot.slane %v2504, 4
      %v2506 = vrot.slane %v1763, 5
      %v2507 = vsel %vm1122, %v2505, %v2506
      %v2508 = vrot.slane %v2506, 4
      %v2509 = vrot.slane %v1764, 5
      %v2510 = vsel %vm1122, %v2508, %v2509
      %v2511 = vrot.slane %v2405, 5
      %v2512 = vrot.slane %v2511, 4
      %v2513 = vrot.slane %v1766, 5
      %v2514 = vsel %vm1122, %v2512, %v2513
      %v2515 = vrot.slane %v2513, 4
      %v2516 = vrot.slane %v1767, 5
      %v2517 = vsel %vm1122, %v2515, %v2516
      %v2518 = vrot.slane %v2406, 5
      %v2519 = vrot.slane %v2518, 4
      %v2520 = vrot.slane %v1769, 5
      %v2521 = vsel %vm1122, %v2519, %v2520
      %v2522 = vrot.slane %v2520, 4
      %v2523 = vrot.slane %v1770, 5
      %v2524 = vsel %vm1122, %v2522, %v2523
      %v2525 = vrot.slane %v2407, 5
      %v2526 = vrot.slane %v2525, 4
      %v2527 = vrot.slane %v1772, 5
      %v2528 = vsel %vm1122, %v2526, %v2527
      %v2529 = vrot.slane %v2527, 4
      %v2530 = vrot.slane %v1773, 5
      %v2531 = vsel %vm1122, %v2529, %v2530
      %v2532 = vrot.slane %v2408, 5
      %v2533 = vrot.slane %v2532, 4
      %v2534 = vrot.slane %v1775, 5
      %v2535 = vsel %vm1122, %v2533, %v2534
      %v2536 = vrot.slane %v2534, 4
      %v2537 = vrot.slane %v1776, 5
      %v2538 = vsel %vm1122, %v2536, %v2537
      %v2539 = vrot.slane %v2409, 5
      %v2540 = vrot.slane %v2539, 4
      %v2541 = vrot.slane %v1778, 5
      %v2542 = vsel %vm1122, %v2540, %v2541
      %v2543 = vrot.slane %v2541, 4
      %v2544 = vrot.slane %v1779, 5
      %v2545 = vsel %vm1122, %v2543, %v2544
      %v2546 = vrot.slane %v2410, 5
      %v2547 = vrot.slane %v2546, 4
      %v2548 = vrot.slane %v1781, 5
      %v2549 = vsel %vm1122, %v2547, %v2548
      %v2550 = vrot.slane %v2548, 4
      %v2551 = vrot.slane %v1782, 5
      %v2552 = vsel %vm1122, %v2550, %v2551
      %v2553 = vrot.slane %v2411, 5
      %v2554 = vrot.slane %v2553, 4
      %v2555 = vrot.slane %v1784, 5
      %v2556 = vsel %vm1122, %v2554, %v2555
      %v2557 = vrot.slane %v2555, 4
      %v2558 = vrot.slane %v1785, 5
      %v2559 = vsel %vm1122, %v2557, %v2558
      %v2560 = vrot.slane %v2412, 5
      %v2561 = vrot.slane %v2560, 4
      %v2562 = vrot.slane %v1787, 5
      %v2563 = vsel %vm1122, %v2561, %v2562
      %v2564 = vrot.slane %v2562, 4
      %v2565 = vrot.slane %v1788, 5
      %v2566 = vsel %vm1122, %v2564, %v2565
      %v2567 = vrot.slane %v2413, 5
      %v2568 = vrot.slane %v2567, 4
      %v2569 = vrot.slane %v1790, 5
      %v2570 = vsel %vm1122, %v2568, %v2569
      %v2571 = vrot.slane %v2569, 4
      %v2572 = vrot.slane %v1791, 5
      %v2573 = vsel %vm1122, %v2571, %v2572
      %s2574 = scalar_lea.vmem %s210, 20
      %v2575 = vld [vmem:[%s2574] sm:$0xf]
      %v2576 = vunpack.c.l.b16 %v2465
      %v2577 = vunpack.c.l.b16 %v2468
      %v2578 = vunpack.c.l.b16 %v2472
      %v2579 = vunpack.c.l.b16 %v2475
      %v2580 = vunpack.c.l.b16 %v2479
      %v2581 = vunpack.c.l.b16 %v2482
      %v2582 = vunpack.c.l.b16 %v2486
      %v2583 = vunpack.c.l.b16 %v2489
      %v2584 = vunpack.c.l.b16 %v2493
      %v2585 = vunpack.c.l.b16 %v2496
      %v2586 = vunpack.c.l.b16 %v2500
      %v2587 = vunpack.c.l.b16 %v2503
      %v2588 = vunpack.c.l.b16 %v2507
      %v2589 = vunpack.c.l.b16 %v2510
      %v2590 = vunpack.c.l.b16 %v2514
      %v2591 = vunpack.c.l.b16 %v2517
      %v2592 = vunpack.c.l.b16 %v2521
      %v2593 = vunpack.c.l.b16 %v2524
      %v2594 = vunpack.c.l.b16 %v2528
      %v2595 = vunpack.c.l.b16 %v2531
      %v2596 = vunpack.c.l.b16 %v2535
      %v2597 = vunpack.c.l.b16 %v2538
      %v2598 = vunpack.c.l.b16 %v2542
      %v2599 = vunpack.c.l.b16 %v2545
      %v2600 = vunpack.c.l.b16 %v2549
      %v2601 = vunpack.c.l.b16 %v2552
      %v2602 = vunpack.c.l.b16 %v2556
      %v2603 = vunpack.c.l.b16 %v2559
      %v2604 = vunpack.c.l.b16 %v2563
      %v2605 = vunpack.c.l.b16 %v2566
      %v2606 = vunpack.c.l.b16 %v2570
      %v2607 = vunpack.c.l.b16 %v2573
      %v2608 = vpack.c.b16 %v2577, %v2576
      %v2609 = vpack.c.b16 %v2579, %v2578
      %v2610 = vpack.c.b16 %v2581, %v2580
      %v2611 = vpack.c.b16 %v2583, %v2582
      %v2612 = vpack.c.b16 %v2585, %v2584
      %v2613 = vpack.c.b16 %v2587, %v2586
      %v2614 = vpack.c.b16 %v2589, %v2588
      %v2615 = vpack.c.b16 %v2591, %v2590
      %v2616 = vpack.c.b16 %v2593, %v2592
      %v2617 = vpack.c.b16 %v2595, %v2594
      %v2618 = vpack.c.b16 %v2597, %v2596
      %v2619 = vpack.c.b16 %v2599, %v2598
      %v2620 = vpack.c.b16 %v2601, %v2600
      %v2621 = vpack.c.b16 %v2603, %v2602
      %v2622 = vpack.c.b16 %v2605, %v2604
      %v2623 = vpack.c.b16 %v2607, %v2606
      %v2625 = vsel %vm710, %v2608, 0
      %v2628 = vsel %vm710, %v2609, 0
      %v2631 = vsel %vm710, %v2610, 0
      %v2634 = vsel %vm710, %v2611, 0
      %v2637 = vsel %vm710, %v2612, 0
      %v2640 = vsel %vm710, %v2613, 0
      %v2643 = vsel %vm710, %v2614, 0
      %v2646 = vsel %vm710, %v2615, 0
      %v2649 = vsel %vm710, %v2616, 0
      %v2652 = vsel %vm710, %v2617, 0
      %v2655 = vsel %vm710, %v2618, 0
      %v2658 = vsel %vm710, %v2619, 0
      %v2661 = vsel %vm710, %v2620, 0
      %v2664 = vsel %vm710, %v2621, 0
      %v2667 = vsel %vm710, %v2622, 0
      %v2670 = vsel %vm710, %v2623, 0
      %v2673 = vsel %vm759, %v2575, 0
      %2675 = vmatpush.bf16.msra.mxu0 0
      %2676 = vmatpush.bf16.msra.mxu0 0
      %2677 = vmatpush.bf16.msra.mxu0 0
      %2678 = vmatpush.bf16.msra.mxu0 0
      %2679 = vmatpush.bf16.msra.mxu0 0
      %2680 = vmatpush.bf16.msra.mxu0 0
      %2681 = vmatpush.bf16.msra.mxu0 0
      %2682 = vmatpush.bf16.msra.mxu0 %v2673
      %2683 = vmatmul.bf16.gmra.mxu0 %v2625
      %v2684 = vpop.f32.mrf.mxu0
      %v2685 = vadd.f32 0.0, %v2684
      %v2686 = vpop.f32.mrf.mxu0
      %v2687 = vadd.f32 0.0, %v2686
      %2688 = vmatmul.bf16.gmra.mxu0 %v2628
      %v2689 = vpop.f32.mrf.mxu0
      %v2690 = vadd.f32 0.0, %v2689
      %v2691 = vpop.f32.mrf.mxu0
      %v2692 = vadd.f32 0.0, %v2691
      %2693 = vmatmul.bf16.gmra.mxu0 %v2631
      %v2694 = vpop.f32.mrf.mxu0
      %v2695 = vadd.f32 0.0, %v2694
      %v2696 = vpop.f32.mrf.mxu0
      %v2697 = vadd.f32 0.0, %v2696
      %2698 = vmatmul.bf16.gmra.mxu0 %v2634
      %v2699 = vpop.f32.mrf.mxu0
      %v2700 = vadd.f32 0.0, %v2699
      %v2701 = vpop.f32.mrf.mxu0
      %v2702 = vadd.f32 0.0, %v2701
      %2703 = vmatmul.bf16.gmra.mxu0 %v2637
      %v2704 = vpop.f32.mrf.mxu0
      %v2705 = vadd.f32 0.0, %v2704
      %v2706 = vpop.f32.mrf.mxu0
      %v2707 = vadd.f32 0.0, %v2706
      %2708 = vmatmul.bf16.gmra.mxu0 %v2640
      %v2709 = vpop.f32.mrf.mxu0
      %v2710 = vadd.f32 0.0, %v2709
      %v2711 = vpop.f32.mrf.mxu0
      %v2712 = vadd.f32 0.0, %v2711
      %2713 = vmatmul.bf16.gmra.mxu0 %v2643
      %v2714 = vpop.f32.mrf.mxu0
      %v2715 = vadd.f32 0.0, %v2714
      %v2716 = vpop.f32.mrf.mxu0
      %v2717 = vadd.f32 0.0, %v2716
      %2718 = vmatmul.bf16.gmra.mxu0 %v2646
      %v2719 = vpop.f32.mrf.mxu0
      %v2720 = vadd.f32 0.0, %v2719
      %v2721 = vpop.f32.mrf.mxu0
      %v2722 = vadd.f32 0.0, %v2721
      %2723 = vmatmul.bf16.gmra.mxu0 %v2649
      %v2724 = vpop.f32.mrf.mxu0
      %v2725 = vadd.f32 0.0, %v2724
      %v2726 = vpop.f32.mrf.mxu0
      %v2727 = vadd.f32 0.0, %v2726
      %2728 = vmatmul.bf16.gmra.mxu0 %v2652
      %v2729 = vpop.f32.mrf.mxu0
      %v2730 = vadd.f32 0.0, %v2729
      %v2731 = vpop.f32.mrf.mxu0
      %v2732 = vadd.f32 0.0, %v2731
      %2733 = vmatmul.bf16.gmra.mxu0 %v2655
      %v2734 = vpop.f32.mrf.mxu0
      %v2735 = vadd.f32 0.0, %v2734
      %v2736 = vpop.f32.mrf.mxu0
      %v2737 = vadd.f32 0.0, %v2736
      %2738 = vmatmul.bf16.gmra.mxu0 %v2658
      %v2739 = vpop.f32.mrf.mxu0
      %v2740 = vadd.f32 0.0, %v2739
      %v2741 = vpop.f32.mrf.mxu0
      %v2742 = vadd.f32 0.0, %v2741
      %2743 = vmatmul.bf16.gmra.mxu0 %v2661
      %v2744 = vpop.f32.mrf.mxu0
      %v2745 = vadd.f32 0.0, %v2744
      %v2746 = vpop.f32.mrf.mxu0
      %v2747 = vadd.f32 0.0, %v2746
      %2748 = vmatmul.bf16.gmra.mxu0 %v2664
      %v2749 = vpop.f32.mrf.mxu0
      %v2750 = vadd.f32 0.0, %v2749
      %v2751 = vpop.f32.mrf.mxu0
      %v2752 = vadd.f32 0.0, %v2751
      %2753 = vmatmul.bf16.gmra.mxu0 %v2667
      %v2754 = vpop.f32.mrf.mxu0
      %v2755 = vadd.f32 0.0, %v2754
      %v2756 = vpop.f32.mrf.mxu0
      %v2757 = vadd.f32 0.0, %v2756
      %2758 = vmatmul.bf16.gmra.mxu0 %v2670
      %v2759 = vpop.f32.mrf.mxu0
      %v2760 = vadd.f32 0.0, %v2759
      %v2761 = vpop.f32.mrf.mxu0
      %v2762 = vadd.f32 0.0, %v2761
      %2763 = vdwg.mxu0
      %v2764 = vadd.f32 %v2366, %v2685
      %v2765 = vadd.f32 %v2367, %v2687
      %v2766 = vadd.f32 %v2368, %v2690
      %v2767 = vadd.f32 %v2369, %v2692
      %v2768 = vadd.f32 %v2370, %v2695
      %v2769 = vadd.f32 %v2371, %v2697
      %v2770 = vadd.f32 %v2372, %v2700
      %v2771 = vadd.f32 %v2373, %v2702
      %v2772 = vadd.f32 %v2374, %v2705
      %v2773 = vadd.f32 %v2375, %v2707
      %v2774 = vadd.f32 %v2376, %v2710
      %v2775 = vadd.f32 %v2377, %v2712
      %v2776 = vadd.f32 %v2378, %v2715
      %v2777 = vadd.f32 %v2379, %v2717
      %v2778 = vadd.f32 %v2380, %v2720
      %v2779 = vadd.f32 %v2381, %v2722
      %v2780 = vadd.f32 %v2382, %v2725
      %v2781 = vadd.f32 %v2383, %v2727
      %v2782 = vadd.f32 %v2384, %v2730
      %v2783 = vadd.f32 %v2385, %v2732
      %v2784 = vadd.f32 %v2386, %v2735
      %v2785 = vadd.f32 %v2387, %v2737
      %v2786 = vadd.f32 %v2388, %v2740
      %v2787 = vadd.f32 %v2389, %v2742
      %v2788 = vadd.f32 %v2390, %v2745
      %v2789 = vadd.f32 %v2391, %v2747
      %v2790 = vadd.f32 %v2392, %v2750
      %v2791 = vadd.f32 %v2393, %v2752
      %v2792 = vadd.f32 %v2394, %v2755
      %v2793 = vadd.f32 %v2395, %v2757
      %v2794 = vadd.f32 %v2396, %v2760
      %v2795 = vadd.f32 %v2397, %v2762
      %s2796 = scalar_lea.vmem %s206, 24
      %v2797 = vld [vmem:[%s2796] sm:$0xf]
      %v2798 = vld [vmem:[%s2796 + $0x4] sm:$0xf]
      %v2799 = vld [vmem:[%s2796 + $0xc] sm:$0xf]
      %v2800 = vld [vmem:[%s2796 + $0x10] sm:$0xf]
      %v2801 = vld [vmem:[%s2796 + $0x18] sm:$0xf]
      %v2802 = vld [vmem:[%s2796 + $0x1c] sm:$0xf]
      %v2803 = vld [vmem:[%s2796 + $0x24] sm:$0xf]
      %v2804 = vld [vmem:[%s2796 + $0x28] sm:$0xf]
      %v2805 = vld [vmem:[%s2796 + $0x30] sm:$0xf]
      %v2806 = vld [vmem:[%s2796 + $0x34] sm:$0xf]
      %v2807 = vld [vmem:[%s2796 + $0x3c] sm:$0xf]
      %v2808 = vld [vmem:[%s2796 + $0x40] sm:$0xf]
      %v2809 = vld [vmem:[%s2796 + $0x48] sm:$0xf]
      %v2810 = vld [vmem:[%s2796 + $0x4c] sm:$0xf]
      %v2811 = vld [vmem:[%s2796 + $0x54] sm:$0xf]
      %v2812 = vld [vmem:[%s2796 + $0x58] sm:$0xf]
      %v2813 = vld [vmem:[%s2796 + $0x60] sm:$0xf]
      %v2814 = vld [vmem:[%s2796 + $0x64] sm:$0xf]
      %v2815 = vld [vmem:[%s2796 + $0x6c] sm:$0xf]
      %v2816 = vld [vmem:[%s2796 + $0x70] sm:$0xf]
      %v2817 = vld [vmem:[%s2796 + $0x78] sm:$0xf]
      %v2818 = vld [vmem:[%s2796 + $0x7c] sm:$0xf]
      %v2819 = vld [vmem:[%s2796 + $0x84] sm:$0xf]
      %v2820 = vld [vmem:[%s2796 + $0x88] sm:$0xf]
      %v2821 = vld [vmem:[%s2796 + $0x90] sm:$0xf]
      %v2822 = vld [vmem:[%s2796 + $0x94] sm:$0xf]
      %v2823 = vld [vmem:[%s2796 + $0x9c] sm:$0xf]
      %v2824 = vld [vmem:[%s2796 + $0xa0] sm:$0xf]
      %v2825 = vld [vmem:[%s2796 + $0xa8] sm:$0xf]
      %v2826 = vld [vmem:[%s2796 + $0xac] sm:$0xf]
      %v2827 = vld [vmem:[%s2796 + $0xb4] sm:$0xf]
      %v2828 = vld [vmem:[%s2796 + $0xb8] sm:$0xf]
      %s2829 = scalar_lea.vmem %s210, 24
      %v2830 = vld [vmem:[%s2829] sm:$0xf]
      %v2863 = vunpack.c.l.b16 %v2797
      %v2864 = vunpack.c.l.b16 %v2798
      %v2865 = vunpack.c.l.b16 %v2799
      %v2866 = vunpack.c.l.b16 %v2800
      %v2867 = vunpack.c.l.b16 %v2801
      %v2868 = vunpack.c.l.b16 %v2802
      %v2869 = vunpack.c.l.b16 %v2803
      %v2870 = vunpack.c.l.b16 %v2804
      %v2871 = vunpack.c.l.b16 %v2805
      %v2872 = vunpack.c.l.b16 %v2806
      %v2873 = vunpack.c.l.b16 %v2807
      %v2874 = vunpack.c.l.b16 %v2808
      %v2875 = vunpack.c.l.b16 %v2809
      %v2876 = vunpack.c.l.b16 %v2810
      %v2877 = vunpack.c.l.b16 %v2811
      %v2878 = vunpack.c.l.b16 %v2812
      %v2879 = vunpack.c.l.b16 %v2813
      %v2880 = vunpack.c.l.b16 %v2814
      %v2881 = vunpack.c.l.b16 %v2815
      %v2882 = vunpack.c.l.b16 %v2816
      %v2883 = vunpack.c.l.b16 %v2817
      %v2884 = vunpack.c.l.b16 %v2818
      %v2885 = vunpack.c.l.b16 %v2819
      %v2886 = vunpack.c.l.b16 %v2820
      %v2887 = vunpack.c.l.b16 %v2821
      %v2888 = vunpack.c.l.b16 %v2822
      %v2889 = vunpack.c.l.b16 %v2823
      %v2890 = vunpack.c.l.b16 %v2824
      %v2891 = vunpack.c.l.b16 %v2825
      %v2892 = vunpack.c.l.b16 %v2826
      %v2893 = vunpack.c.l.b16 %v2827
      %v2894 = vunpack.c.l.b16 %v2828
      %v2895 = vpack.c.b16 %v2864, %v2863
      %v2896 = vpack.c.b16 %v2866, %v2865
      %v2897 = vpack.c.b16 %v2868, %v2867
      %v2898 = vpack.c.b16 %v2870, %v2869
      %v2899 = vpack.c.b16 %v2872, %v2871
      %v2900 = vpack.c.b16 %v2874, %v2873
      %v2901 = vpack.c.b16 %v2876, %v2875
      %v2902 = vpack.c.b16 %v2878, %v2877
      %v2903 = vpack.c.b16 %v2880, %v2879
      %v2904 = vpack.c.b16 %v2882, %v2881
      %v2905 = vpack.c.b16 %v2884, %v2883
      %v2906 = vpack.c.b16 %v2886, %v2885
      %v2907 = vpack.c.b16 %v2888, %v2887
      %v2908 = vpack.c.b16 %v2890, %v2889
      %v2909 = vpack.c.b16 %v2892, %v2891
      %v2910 = vpack.c.b16 %v2894, %v2893
      %v2912 = vsel %vm710, %v2895, 0
      %v2915 = vsel %vm710, %v2896, 0
      %v2918 = vsel %vm710, %v2897, 0
      %v2921 = vsel %vm710, %v2898, 0
      %v2924 = vsel %vm710, %v2899, 0
      %v2927 = vsel %vm710, %v2900, 0
      %v2930 = vsel %vm710, %v2901, 0
      %v2933 = vsel %vm710, %v2902, 0
      %v2936 = vsel %vm710, %v2903, 0
      %v2939 = vsel %vm710, %v2904, 0
      %v2942 = vsel %vm710, %v2905, 0
      %v2945 = vsel %vm710, %v2906, 0
      %v2948 = vsel %vm710, %v2907, 0
      %v2951 = vsel %vm710, %v2908, 0
      %v2954 = vsel %vm710, %v2909, 0
      %v2957 = vsel %vm710, %v2910, 0
      %v2960 = vsel %vm759, %v2830, 0
      %2962 = vmatpush.bf16.msra.mxu0 0
      %2963 = vmatpush.bf16.msra.mxu0 0
      %2964 = vmatpush.bf16.msra.mxu0 0
      %2965 = vmatpush.bf16.msra.mxu0 0
      %2966 = vmatpush.bf16.msra.mxu0 0
      %2967 = vmatpush.bf16.msra.mxu0 0
      %2968 = vmatpush.bf16.msra.mxu0 0
      %2969 = vmatpush.bf16.msra.mxu0 %v2960
      %2970 = vmatmul.bf16.gmra.mxu0 %v2912
      %v2971 = vpop.f32.mrf.mxu0
      %v2972 = vadd.f32 0.0, %v2971
      %v2973 = vpop.f32.mrf.mxu0
      %v2974 = vadd.f32 0.0, %v2973
      %2975 = vmatmul.bf16.gmra.mxu0 %v2915
      %v2976 = vpop.f32.mrf.mxu0
      %v2977 = vadd.f32 0.0, %v2976
      %v2978 = vpop.f32.mrf.mxu0
      %v2979 = vadd.f32 0.0, %v2978
      %2980 = vmatmul.bf16.gmra.mxu0 %v2918
      %v2981 = vpop.f32.mrf.mxu0
      %v2982 = vadd.f32 0.0, %v2981
      %v2983 = vpop.f32.mrf.mxu0
      %v2984 = vadd.f32 0.0, %v2983
      %2985 = vmatmul.bf16.gmra.mxu0 %v2921
      %v2986 = vpop.f32.mrf.mxu0
      %v2987 = vadd.f32 0.0, %v2986
      %v2988 = vpop.f32.mrf.mxu0
      %v2989 = vadd.f32 0.0, %v2988
      %2990 = vmatmul.bf16.gmra.mxu0 %v2924
      %v2991 = vpop.f32.mrf.mxu0
      %v2992 = vadd.f32 0.0, %v2991
      %v2993 = vpop.f32.mrf.mxu0
      %v2994 = vadd.f32 0.0, %v2993
      %2995 = vmatmul.bf16.gmra.mxu0 %v2927
      %v2996 = vpop.f32.mrf.mxu0
      %v2997 = vadd.f32 0.0, %v2996
      %v2998 = vpop.f32.mrf.mxu0
      %v2999 = vadd.f32 0.0, %v2998
      %3000 = vmatmul.bf16.gmra.mxu0 %v2930
      %v3001 = vpop.f32.mrf.mxu0
      %v3002 = vadd.f32 0.0, %v3001
      %v3003 = vpop.f32.mrf.mxu0
      %v3004 = vadd.f32 0.0, %v3003
      %3005 = vmatmul.bf16.gmra.mxu0 %v2933
      %v3006 = vpop.f32.mrf.mxu0
      %v3007 = vadd.f32 0.0, %v3006
      %v3008 = vpop.f32.mrf.mxu0
      %v3009 = vadd.f32 0.0, %v3008
      %3010 = vmatmul.bf16.gmra.mxu0 %v2936
      %v3011 = vpop.f32.mrf.mxu0
      %v3012 = vadd.f32 0.0, %v3011
      %v3013 = vpop.f32.mrf.mxu0
      %v3014 = vadd.f32 0.0, %v3013
      %3015 = vmatmul.bf16.gmra.mxu0 %v2939
      %v3016 = vpop.f32.mrf.mxu0
      %v3017 = vadd.f32 0.0, %v3016
      %v3018 = vpop.f32.mrf.mxu0
      %v3019 = vadd.f32 0.0, %v3018
      %3020 = vmatmul.bf16.gmra.mxu0 %v2942
      %v3021 = vpop.f32.mrf.mxu0
      %v3022 = vadd.f32 0.0, %v3021
      %v3023 = vpop.f32.mrf.mxu0
      %v3024 = vadd.f32 0.0, %v3023
      %3025 = vmatmul.bf16.gmra.mxu0 %v2945
      %v3026 = vpop.f32.mrf.mxu0
      %v3027 = vadd.f32 0.0, %v3026
      %v3028 = vpop.f32.mrf.mxu0
      %v3029 = vadd.f32 0.0, %v3028
      %3030 = vmatmul.bf16.gmra.mxu0 %v2948
      %v3031 = vpop.f32.mrf.mxu0
      %v3032 = vadd.f32 0.0, %v3031
      %v3033 = vpop.f32.mrf.mxu0
      %v3034 = vadd.f32 0.0, %v3033
      %3035 = vmatmul.bf16.gmra.mxu0 %v2951
      %v3036 = vpop.f32.mrf.mxu0
      %v3037 = vadd.f32 0.0, %v3036
      %v3038 = vpop.f32.mrf.mxu0
      %v3039 = vadd.f32 0.0, %v3038
      %3040 = vmatmul.bf16.gmra.mxu0 %v2954
      %v3041 = vpop.f32.mrf.mxu0
      %v3042 = vadd.f32 0.0, %v3041
      %v3043 = vpop.f32.mrf.mxu0
      %v3044 = vadd.f32 0.0, %v3043
      %3045 = vmatmul.bf16.gmra.mxu0 %v2957
      %v3046 = vpop.f32.mrf.mxu0
      %v3047 = vadd.f32 0.0, %v3046
      %v3048 = vpop.f32.mrf.mxu0
      %v3049 = vadd.f32 0.0, %v3048
      %3050 = vdwg.mxu0
      %v3051 = vadd.f32 %v2764, %v2972
      %v3052 = vadd.f32 %v2765, %v2974
      %v3053 = vadd.f32 %v2766, %v2977
      %v3054 = vadd.f32 %v2767, %v2979
      %v3055 = vadd.f32 %v2768, %v2982
      %v3056 = vadd.f32 %v2769, %v2984
      %v3057 = vadd.f32 %v2770, %v2987
      %v3058 = vadd.f32 %v2771, %v2989
      %v3059 = vadd.f32 %v2772, %v2992
      %v3060 = vadd.f32 %v2773, %v2994
      %v3061 = vadd.f32 %v2774, %v2997
      %v3062 = vadd.f32 %v2775, %v2999
      %v3063 = vadd.f32 %v2776, %v3002
      %v3064 = vadd.f32 %v2777, %v3004
      %v3065 = vadd.f32 %v2778, %v3007
      %v3066 = vadd.f32 %v2779, %v3009
      %v3067 = vadd.f32 %v2780, %v3012
      %v3068 = vadd.f32 %v2781, %v3014
      %v3069 = vadd.f32 %v2782, %v3017
      %v3070 = vadd.f32 %v2783, %v3019
      %v3071 = vadd.f32 %v2784, %v3022
      %v3072 = vadd.f32 %v2785, %v3024
      %v3073 = vadd.f32 %v2786, %v3027
      %v3074 = vadd.f32 %v2787, %v3029
      %v3075 = vadd.f32 %v2788, %v3032
      %v3076 = vadd.f32 %v2789, %v3034
      %v3077 = vadd.f32 %v2790, %v3037
      %v3078 = vadd.f32 %v2791, %v3039
      %v3079 = vadd.f32 %v2792, %v3042
      %v3080 = vadd.f32 %v2793, %v3044
      %v3081 = vadd.f32 %v2794, %v3047
      %v3082 = vadd.f32 %v2795, %v3049
      %v3083 = vld [vmem:[%s2796] sm:$0xf]
      %v3084 = vld [vmem:[%s2796 + $0x4] sm:$0xf]
      %v3085 = vld [vmem:[%s2796 + $0x8] sm:$0x1]
      %v3086 = vld [vmem:[%s2796 + $0xc] sm:$0xf]
      %v3087 = vld [vmem:[%s2796 + $0x10] sm:$0xf]
      %v3088 = vld [vmem:[%s2796 + $0x14] sm:$0x1]
      %v3089 = vld [vmem:[%s2796 + $0x18] sm:$0xf]
      %v3090 = vld [vmem:[%s2796 + $0x1c] sm:$0xf]
      %v3091 = vld [vmem:[%s2796 + $0x20] sm:$0x1]
      %v3092 = vld [vmem:[%s2796 + $0x24] sm:$0xf]
      %v3093 = vld [vmem:[%s2796 + $0x28] sm:$0xf]
      %v3094 = vld [vmem:[%s2796 + $0x2c] sm:$0x1]
      %v3095 = vld [vmem:[%s2796 + $0x30] sm:$0xf]
      %v3096 = vld [vmem:[%s2796 + $0x34] sm:$0xf]
      %v3097 = vld [vmem:[%s2796 + $0x38] sm:$0x1]
      %v3098 = vld [vmem:[%s2796 + $0x3c] sm:$0xf]
      %v3099 = vld [vmem:[%s2796 + $0x40] sm:$0xf]
      %v3100 = vld [vmem:[%s2796 + $0x44] sm:$0x1]
      %v3101 = vld [vmem:[%s2796 + $0x48] sm:$0xf]
      %v3102 = vld [vmem:[%s2796 + $0x4c] sm:$0xf]
      %v3103 = vld [vmem:[%s2796 + $0x50] sm:$0x1]
      %v3104 = vld [vmem:[%s2796 + $0x54] sm:$0xf]
      %v3105 = vld [vmem:[%s2796 + $0x58] sm:$0xf]
      %v3106 = vld [vmem:[%s2796 + $0x5c] sm:$0x1]
      %v3107 = vld [vmem:[%s2796 + $0x60] sm:$0xf]
      %v3108 = vld [vmem:[%s2796 + $0x64] sm:$0xf]
      %v3109 = vld [vmem:[%s2796 + $0x68] sm:$0x1]
      %v3110 = vld [vmem:[%s2796 + $0x6c] sm:$0xf]
      %v3111 = vld [vmem:[%s2796 + $0x70] sm:$0xf]
      %v3112 = vld [vmem:[%s2796 + $0x74] sm:$0x1]
      %v3113 = vld [vmem:[%s2796 + $0x78] sm:$0xf]
      %v3114 = vld [vmem:[%s2796 + $0x7c] sm:$0xf]
      %v3115 = vld [vmem:[%s2796 + $0x80] sm:$0x1]
      %v3116 = vld [vmem:[%s2796 + $0x84] sm:$0xf]
      %v3117 = vld [vmem:[%s2796 + $0x88] sm:$0xf]
      %v3118 = vld [vmem:[%s2796 + $0x8c] sm:$0x1]
      %v3119 = vld [vmem:[%s2796 + $0x90] sm:$0xf]
      %v3120 = vld [vmem:[%s2796 + $0x94] sm:$0xf]
      %v3121 = vld [vmem:[%s2796 + $0x98] sm:$0x1]
      %v3122 = vld [vmem:[%s2796 + $0x9c] sm:$0xf]
      %v3123 = vld [vmem:[%s2796 + $0xa0] sm:$0xf]
      %v3124 = vld [vmem:[%s2796 + $0xa4] sm:$0x1]
      %v3125 = vld [vmem:[%s2796 + $0xa8] sm:$0xf]
      %v3126 = vld [vmem:[%s2796 + $0xac] sm:$0xf]
      %v3127 = vld [vmem:[%s2796 + $0xb0] sm:$0x1]
      %v3128 = vld [vmem:[%s2796 + $0xb4] sm:$0xf]
      %v3129 = vld [vmem:[%s2796 + $0xb8] sm:$0xf]
      %v3130 = vld [vmem:[%s2796 + $0xbc] sm:$0x1]
      %v3132 = vshrl.u32 %v3083, 16
      %v3134 = vrot.slane %v3132, 4
      %v3135 = vshll.u32 %v3083, 16
      %v3137 = vrot.slane %v3135, 5
      %v3138 = vor.u32 %v3134, %v3137
      %v3139 = vrot.slane %v3138, 4
      %v3141 = vshll.u32 %v3084, 16
      %v3143 = vrot.slane %v3141, 5
      %v3144 = vsel %vm275, %v3139, %v3143
      %v3145 = vshrl.u32 %v3084, 16
      %v3147 = vrot.slane %v3145, 4
      %v3148 = vor.u32 %v3147, %v3143
      %v3149 = vrot.slane %v3148, 4
      %v3151 = vshll.u32 %v3085, 16
      %v3153 = vrot.slane %v3151, 5
      %v3154 = vsel %vm275, %v3149, %v3153
      %v3156 = vshrl.u32 %v3086, 16
      %v3158 = vrot.slane %v3156, 4
      %v3159 = vshll.u32 %v3086, 16
      %v3161 = vrot.slane %v3159, 5
      %v3162 = vor.u32 %v3158, %v3161
      %v3163 = vrot.slane %v3162, 4
      %v3165 = vshll.u32 %v3087, 16
      %v3167 = vrot.slane %v3165, 5
      %v3168 = vsel %vm275, %v3163, %v3167
      %v3169 = vshrl.u32 %v3087, 16
      %v3171 = vrot.slane %v3169, 4
      %v3172 = vor.u32 %v3171, %v3167
      %v3173 = vrot.slane %v3172, 4
      %v3175 = vshll.u32 %v3088, 16
      %v3177 = vrot.slane %v3175, 5
      %v3178 = vsel %vm275, %v3173, %v3177
      %v3180 = vshrl.u32 %v3089, 16
      %v3182 = vrot.slane %v3180, 4
      %v3183 = vshll.u32 %v3089, 16
      %v3185 = vrot.slane %v3183, 5
      %v3186 = vor.u32 %v3182, %v3185
      %v3187 = vrot.slane %v3186, 4
      %v3189 = vshll.u32 %v3090, 16
      %v3191 = vrot.slane %v3189, 5
      %v3192 = vsel %vm275, %v3187, %v3191
      %v3193 = vshrl.u32 %v3090, 16
      %v3195 = vrot.slane %v3193, 4
      %v3196 = vor.u32 %v3195, %v3191
      %v3197 = vrot.slane %v3196, 4
      %v3199 = vshll.u32 %v3091, 16
      %v3201 = vrot.slane %v3199, 5
      %v3202 = vsel %vm275, %v3197, %v3201
      %v3204 = vshrl.u32 %v3092, 16
      %v3206 = vrot.slane %v3204, 4
      %v3207 = vshll.u32 %v3092, 16
      %v3209 = vrot.slane %v3207, 5
      %v3210 = vor.u32 %v3206, %v3209
      %v3211 = vrot.slane %v3210, 4
      %v3213 = vshll.u32 %v3093, 16
      %v3215 = vrot.slane %v3213, 5
      %v3216 = vsel %vm275, %v3211, %v3215
      %v3217 = vshrl.u32 %v3093, 16
      %v3219 = vrot.slane %v3217, 4
      %v3220 = vor.u32 %v3219, %v3215
      %v3221 = vrot.slane %v3220, 4
      %v3223 = vshll.u32 %v3094, 16
      %v3225 = vrot.slane %v3223, 5
      %v3226 = vsel %vm275, %v3221, %v3225
      %v3228 = vshrl.u32 %v3095, 16
      %v3230 = vrot.slane %v3228, 4
      %v3231 = vshll.u32 %v3095, 16
      %v3233 = vrot.slane %v3231, 5
      %v3234 = vor.u32 %v3230, %v3233
      %v3235 = vrot.slane %v3234, 4
      %v3237 = vshll.u32 %v3096, 16
      %v3239 = vrot.slane %v3237, 5
      %v3240 = vsel %vm275, %v3235, %v3239
      %v3241 = vshrl.u32 %v3096, 16
      %v3243 = vrot.slane %v3241, 4
      %v3244 = vor.u32 %v3243, %v3239
      %v3245 = vrot.slane %v3244, 4
      %v3247 = vshll.u32 %v3097, 16
      %v3249 = vrot.slane %v3247, 5
      %v3250 = vsel %vm275, %v3245, %v3249
      %v3252 = vshrl.u32 %v3098, 16
      %v3254 = vrot.slane %v3252, 4
      %v3255 = vshll.u32 %v3098, 16
      %v3257 = vrot.slane %v3255, 5
      %v3258 = vor.u32 %v3254, %v3257
      %v3259 = vrot.slane %v3258, 4
      %v3261 = vshll.u32 %v3099, 16
      %v3263 = vrot.slane %v3261, 5
      %v3264 = vsel %vm275, %v3259, %v3263
      %v3265 = vshrl.u32 %v3099, 16
      %v3267 = vrot.slane %v3265, 4
      %v3268 = vor.u32 %v3267, %v3263
      %v3269 = vrot.slane %v3268, 4
      %v3271 = vshll.u32 %v3100, 16
      %v3273 = vrot.slane %v3271, 5
      %v3274 = vsel %vm275, %v3269, %v3273
      %v3276 = vshrl.u32 %v3101, 16
      %v3278 = vrot.slane %v3276, 4
      %v3279 = vshll.u32 %v3101, 16
      %v3281 = vrot.slane %v3279, 5
      %v3282 = vor.u32 %v3278, %v3281
      %v3283 = vrot.slane %v3282, 4
      %v3285 = vshll.u32 %v3102, 16
      %v3287 = vrot.slane %v3285, 5
      %v3288 = vsel %vm275, %v3283, %v3287
      %v3289 = vshrl.u32 %v3102, 16
      %v3291 = vrot.slane %v3289, 4
      %v3292 = vor.u32 %v3291, %v3287
      %v3293 = vrot.slane %v3292, 4
      %v3295 = vshll.u32 %v3103, 16
      %v3297 = vrot.slane %v3295, 5
      %v3298 = vsel %vm275, %v3293, %v3297
      %v3300 = vshrl.u32 %v3104, 16
      %v3302 = vrot.slane %v3300, 4
      %v3303 = vshll.u32 %v3104, 16
      %v3305 = vrot.slane %v3303, 5
      %v3306 = vor.u32 %v3302, %v3305
      %v3307 = vrot.slane %v3306, 4
      %v3309 = vshll.u32 %v3105, 16
      %v3311 = vrot.slane %v3309, 5
      %v3312 = vsel %vm275, %v3307, %v3311
      %v3313 = vshrl.u32 %v3105, 16
      %v3315 = vrot.slane %v3313, 4
      %v3316 = vor.u32 %v3315, %v3311
      %v3317 = vrot.slane %v3316, 4
      %v3319 = vshll.u32 %v3106, 16
      %v3321 = vrot.slane %v3319, 5
      %v3322 = vsel %vm275, %v3317, %v3321
      %v3324 = vshrl.u32 %v3107, 16
      %v3326 = vrot.slane %v3324, 4
      %v3327 = vshll.u32 %v3107, 16
      %v3329 = vrot.slane %v3327, 5
      %v3330 = vor.u32 %v3326, %v3329
      %v3331 = vrot.slane %v3330, 4
      %v3333 = vshll.u32 %v3108, 16
      %v3335 = vrot.slane %v3333, 5
      %v3336 = vsel %vm275, %v3331, %v3335
      %v3337 = vshrl.u32 %v3108, 16
      %v3339 = vrot.slane %v3337, 4
      %v3340 = vor.u32 %v3339, %v3335
      %v3341 = vrot.slane %v3340, 4
      %v3343 = vshll.u32 %v3109, 16
      %v3345 = vrot.slane %v3343, 5
      %v3346 = vsel %vm275, %v3341, %v3345
      %v3348 = vshrl.u32 %v3110, 16
      %v3350 = vrot.slane %v3348, 4
      %v3351 = vshll.u32 %v3110, 16
      %v3353 = vrot.slane %v3351, 5
      %v3354 = vor.u32 %v3350, %v3353
      %v3355 = vrot.slane %v3354, 4
      %v3357 = vshll.u32 %v3111, 16
      %v3359 = vrot.slane %v3357, 5
      %v3360 = vsel %vm275, %v3355, %v3359
      %v3361 = vshrl.u32 %v3111, 16
      %v3363 = vrot.slane %v3361, 4
      %v3364 = vor.u32 %v3363, %v3359
      %v3365 = vrot.slane %v3364, 4
      %v3367 = vshll.u32 %v3112, 16
      %v3369 = vrot.slane %v3367, 5
      %v3370 = vsel %vm275, %v3365, %v3369
      %v3372 = vshrl.u32 %v3113, 16
      %v3374 = vrot.slane %v3372, 4
      %v3375 = vshll.u32 %v3113, 16
      %v3377 = vrot.slane %v3375, 5
      %v3378 = vor.u32 %v3374, %v3377
      %v3379 = vrot.slane %v3378, 4
      %v3381 = vshll.u32 %v3114, 16
      %v3383 = vrot.slane %v3381, 5
      %v3384 = vsel %vm275, %v3379, %v3383
      %v3385 = vshrl.u32 %v3114, 16
      %v3387 = vrot.slane %v3385, 4
      %v3388 = vor.u32 %v3387, %v3383
      %v3389 = vrot.slane %v3388, 4
      %v3391 = vshll.u32 %v3115, 16
      %v3393 = vrot.slane %v3391, 5
      %v3394 = vsel %vm275, %v3389, %v3393
      %v3396 = vshrl.u32 %v3116, 16
      %v3398 = vrot.slane %v3396, 4
      %v3399 = vshll.u32 %v3116, 16
      %v3401 = vrot.slane %v3399, 5
      %v3402 = vor.u32 %v3398, %v3401
      %v3403 = vrot.slane %v3402, 4
      %v3405 = vshll.u32 %v3117, 16
      %v3407 = vrot.slane %v3405, 5
      %v3408 = vsel %vm275, %v3403, %v3407
      %v3409 = vshrl.u32 %v3117, 16
      %v3411 = vrot.slane %v3409, 4
      %v3412 = vor.u32 %v3411, %v3407
      %v3413 = vrot.slane %v3412, 4
      %v3415 = vshll.u32 %v3118, 16
      %v3417 = vrot.slane %v3415, 5
      %v3418 = vsel %vm275, %v3413, %v3417
      %v3420 = vshrl.u32 %v3119, 16
      %v3422 = vrot.slane %v3420, 4
      %v3423 = vshll.u32 %v3119, 16
      %v3425 = vrot.slane %v3423, 5
      %v3426 = vor.u32 %v3422, %v3425
      %v3427 = vrot.slane %v3426, 4
      %v3429 = vshll.u32 %v3120, 16
      %v3431 = vrot.slane %v3429, 5
      %v3432 = vsel %vm275, %v3427, %v3431
      %v3433 = vshrl.u32 %v3120, 16
      %v3435 = vrot.slane %v3433, 4
      %v3436 = vor.u32 %v3435, %v3431
      %v3437 = vrot.slane %v3436, 4
      %v3439 = vshll.u32 %v3121, 16
      %v3441 = vrot.slane %v3439, 5
      %v3442 = vsel %vm275, %v3437, %v3441
      %v3444 = vshrl.u32 %v3122, 16
      %v3446 = vrot.slane %v3444, 4
      %v3447 = vshll.u32 %v3122, 16
      %v3449 = vrot.slane %v3447, 5
      %v3450 = vor.u32 %v3446, %v3449
      %v3451 = vrot.slane %v3450, 4
      %v3453 = vshll.u32 %v3123, 16
      %v3455 = vrot.slane %v3453, 5
      %v3456 = vsel %vm275, %v3451, %v3455
      %v3457 = vshrl.u32 %v3123, 16
      %v3459 = vrot.slane %v3457, 4
      %v3460 = vor.u32 %v3459, %v3455
      %v3461 = vrot.slane %v3460, 4
      %v3463 = vshll.u32 %v3124, 16
      %v3465 = vrot.slane %v3463, 5
      %v3466 = vsel %vm275, %v3461, %v3465
      %v3468 = vshrl.u32 %v3125, 16
      %v3470 = vrot.slane %v3468, 4
      %v3471 = vshll.u32 %v3125, 16
      %v3473 = vrot.slane %v3471, 5
      %v3474 = vor.u32 %v3470, %v3473
      %v3475 = vrot.slane %v3474, 4
      %v3477 = vshll.u32 %v3126, 16
      %v3479 = vrot.slane %v3477, 5
      %v3480 = vsel %vm275, %v3475, %v3479
      %v3481 = vshrl.u32 %v3126, 16
      %v3483 = vrot.slane %v3481, 4
      %v3484 = vor.u32 %v3483, %v3479
      %v3485 = vrot.slane %v3484, 4
      %v3487 = vshll.u32 %v3127, 16
      %v3489 = vrot.slane %v3487, 5
      %v3490 = vsel %vm275, %v3485, %v3489
      %v3492 = vshrl.u32 %v3128, 16
      %v3494 = vrot.slane %v3492, 4
      %v3495 = vshll.u32 %v3128, 16
      %v3497 = vrot.slane %v3495, 5
      %v3498 = vor.u32 %v3494, %v3497
      %v3499 = vrot.slane %v3498, 4
      %v3501 = vshll.u32 %v3129, 16
      %v3503 = vrot.slane %v3501, 5
      %v3504 = vsel %vm275, %v3499, %v3503
      %v3505 = vshrl.u32 %v3129, 16
      %v3507 = vrot.slane %v3505, 4
      %v3508 = vor.u32 %v3507, %v3503
      %v3509 = vrot.slane %v3508, 4
      %v3511 = vshll.u32 %v3130, 16
      %v3513 = vrot.slane %v3511, 5
      %v3514 = vsel %vm275, %v3509, %v3513
      %s3515 = scalar_lea.vmem %s210, 28
      %v3516 = vld [vmem:[%s3515] sm:$0xf]
      %v3517 = vunpack.c.l.b16 %v3144
      %v3518 = vunpack.c.l.b16 %v3154
      %v3519 = vunpack.c.l.b16 %v3168
      %v3520 = vunpack.c.l.b16 %v3178
      %v3521 = vunpack.c.l.b16 %v3192
      %v3522 = vunpack.c.l.b16 %v3202
      %v3523 = vunpack.c.l.b16 %v3216
      %v3524 = vunpack.c.l.b16 %v3226
      %v3525 = vunpack.c.l.b16 %v3240
      %v3526 = vunpack.c.l.b16 %v3250
      %v3527 = vunpack.c.l.b16 %v3264
      %v3528 = vunpack.c.l.b16 %v3274
      %v3529 = vunpack.c.l.b16 %v3288
      %v3530 = vunpack.c.l.b16 %v3298
      %v3531 = vunpack.c.l.b16 %v3312
      %v3532 = vunpack.c.l.b16 %v3322
      %v3533 = vunpack.c.l.b16 %v3336
      %v3534 = vunpack.c.l.b16 %v3346
      %v3535 = vunpack.c.l.b16 %v3360
      %v3536 = vunpack.c.l.b16 %v3370
      %v3537 = vunpack.c.l.b16 %v3384
      %v3538 = vunpack.c.l.b16 %v3394
      %v3539 = vunpack.c.l.b16 %v3408
      %v3540 = vunpack.c.l.b16 %v3418
      %v3541 = vunpack.c.l.b16 %v3432
      %v3542 = vunpack.c.l.b16 %v3442
      %v3543 = vunpack.c.l.b16 %v3456
      %v3544 = vunpack.c.l.b16 %v3466
      %v3545 = vunpack.c.l.b16 %v3480
      %v3546 = vunpack.c.l.b16 %v3490
      %v3547 = vunpack.c.l.b16 %v3504
      %v3548 = vunpack.c.l.b16 %v3514
      %v3549 = vpack.c.b16 %v3518, %v3517
      %v3550 = vpack.c.b16 %v3520, %v3519
      %v3551 = vpack.c.b16 %v3522, %v3521
      %v3552 = vpack.c.b16 %v3524, %v3523
      %v3553 = vpack.c.b16 %v3526, %v3525
      %v3554 = vpack.c.b16 %v3528, %v3527
      %v3555 = vpack.c.b16 %v3530, %v3529
      %v3556 = vpack.c.b16 %v3532, %v3531
      %v3557 = vpack.c.b16 %v3534, %v3533
      %v3558 = vpack.c.b16 %v3536, %v3535
      %v3559 = vpack.c.b16 %v3538, %v3537
      %v3560 = vpack.c.b16 %v3540, %v3539
      %v3561 = vpack.c.b16 %v3542, %v3541
      %v3562 = vpack.c.b16 %v3544, %v3543
      %v3563 = vpack.c.b16 %v3546, %v3545
      %v3564 = vpack.c.b16 %v3548, %v3547
      %v3566 = vsel %vm710, %v3549, 0
      %v3569 = vsel %vm710, %v3550, 0
      %v3572 = vsel %vm710, %v3551, 0
      %v3575 = vsel %vm710, %v3552, 0
      %v3578 = vsel %vm710, %v3553, 0
      %v3581 = vsel %vm710, %v3554, 0
      %v3584 = vsel %vm710, %v3555, 0
      %v3587 = vsel %vm710, %v3556, 0
      %v3590 = vsel %vm710, %v3557, 0
      %v3593 = vsel %vm710, %v3558, 0
      %v3596 = vsel %vm710, %v3559, 0
      %v3599 = vsel %vm710, %v3560, 0
      %v3602 = vsel %vm710, %v3561, 0
      %v3605 = vsel %vm710, %v3562, 0
      %v3608 = vsel %vm710, %v3563, 0
      %v3611 = vsel %vm710, %v3564, 0
      %v3614 = vsel %vm759, %v3516, 0
      %3616 = vmatpush.bf16.msra.mxu0 0
      %3617 = vmatpush.bf16.msra.mxu0 0
      %3618 = vmatpush.bf16.msra.mxu0 0
      %3619 = vmatpush.bf16.msra.mxu0 0
      %3620 = vmatpush.bf16.msra.mxu0 0
      %3621 = vmatpush.bf16.msra.mxu0 0
      %3622 = vmatpush.bf16.msra.mxu0 0
      %3623 = vmatpush.bf16.msra.mxu0 %v3614
      %3624 = vmatmul.bf16.gmra.mxu0 %v3566
      %v3625 = vpop.f32.mrf.mxu0
      %v3626 = vadd.f32 0.0, %v3625
      %v3627 = vpop.f32.mrf.mxu0
      %v3628 = vadd.f32 0.0, %v3627
      %3629 = vmatmul.bf16.gmra.mxu0 %v3569
      %v3630 = vpop.f32.mrf.mxu0
      %v3631 = vadd.f32 0.0, %v3630
      %v3632 = vpop.f32.mrf.mxu0
      %v3633 = vadd.f32 0.0, %v3632
      %3634 = vmatmul.bf16.gmra.mxu0 %v3572
      %v3635 = vpop.f32.mrf.mxu0
      %v3636 = vadd.f32 0.0, %v3635
      %v3637 = vpop.f32.mrf.mxu0
      %v3638 = vadd.f32 0.0, %v3637
      %3639 = vmatmul.bf16.gmra.mxu0 %v3575
      %v3640 = vpop.f32.mrf.mxu0
      %v3641 = vadd.f32 0.0, %v3640
      %v3642 = vpop.f32.mrf.mxu0
      %v3643 = vadd.f32 0.0, %v3642
      %3644 = vmatmul.bf16.gmra.mxu0 %v3578
      %v3645 = vpop.f32.mrf.mxu0
      %v3646 = vadd.f32 0.0, %v3645
      %v3647 = vpop.f32.mrf.mxu0
      %v3648 = vadd.f32 0.0, %v3647
      %3649 = vmatmul.bf16.gmra.mxu0 %v3581
      %v3650 = vpop.f32.mrf.mxu0
      %v3651 = vadd.f32 0.0, %v3650
      %v3652 = vpop.f32.mrf.mxu0
      %v3653 = vadd.f32 0.0, %v3652
      %3654 = vmatmul.bf16.gmra.mxu0 %v3584
      %v3655 = vpop.f32.mrf.mxu0
      %v3656 = vadd.f32 0.0, %v3655
      %v3657 = vpop.f32.mrf.mxu0
      %v3658 = vadd.f32 0.0, %v3657
      %3659 = vmatmul.bf16.gmra.mxu0 %v3587
      %v3660 = vpop.f32.mrf.mxu0
      %v3661 = vadd.f32 0.0, %v3660
      %v3662 = vpop.f32.mrf.mxu0
      %v3663 = vadd.f32 0.0, %v3662
      %3664 = vmatmul.bf16.gmra.mxu0 %v3590
      %v3665 = vpop.f32.mrf.mxu0
      %v3666 = vadd.f32 0.0, %v3665
      %v3667 = vpop.f32.mrf.mxu0
      %v3668 = vadd.f32 0.0, %v3667
      %3669 = vmatmul.bf16.gmra.mxu0 %v3593
      %v3670 = vpop.f32.mrf.mxu0
      %v3671 = vadd.f32 0.0, %v3670
      %v3672 = vpop.f32.mrf.mxu0
      %v3673 = vadd.f32 0.0, %v3672
      %3674 = vmatmul.bf16.gmra.mxu0 %v3596
      %v3675 = vpop.f32.mrf.mxu0
      %v3676 = vadd.f32 0.0, %v3675
      %v3677 = vpop.f32.mrf.mxu0
      %v3678 = vadd.f32 0.0, %v3677
      %3679 = vmatmul.bf16.gmra.mxu0 %v3599
      %v3680 = vpop.f32.mrf.mxu0
      %v3681 = vadd.f32 0.0, %v3680
      %v3682 = vpop.f32.mrf.mxu0
      %v3683 = vadd.f32 0.0, %v3682
      %3684 = vmatmul.bf16.gmra.mxu0 %v3602
      %v3685 = vpop.f32.mrf.mxu0
      %v3686 = vadd.f32 0.0, %v3685
      %v3687 = vpop.f32.mrf.mxu0
      %v3688 = vadd.f32 0.0, %v3687
      %3689 = vmatmul.bf16.gmra.mxu0 %v3605
      %v3690 = vpop.f32.mrf.mxu0
      %v3691 = vadd.f32 0.0, %v3690
      %v3692 = vpop.f32.mrf.mxu0
      %v3693 = vadd.f32 0.0, %v3692
      %3694 = vmatmul.bf16.gmra.mxu0 %v3608
      %v3695 = vpop.f32.mrf.mxu0
      %v3696 = vadd.f32 0.0, %v3695
      %v3697 = vpop.f32.mrf.mxu0
      %v3698 = vadd.f32 0.0, %v3697
      %3699 = vmatmul.bf16.gmra.mxu0 %v3611
      %v3700 = vpop.f32.mrf.mxu0
      %v3701 = vadd.f32 0.0, %v3700
      %v3702 = vpop.f32.mrf.mxu0
      %v3703 = vadd.f32 0.0, %v3702
      %3704 = vdwg.mxu0
      %v3705 = vadd.f32 %v3051, %v3626
      %v3706 = vadd.f32 %v3052, %v3628
      %v3707 = vadd.f32 %v3053, %v3631
      %v3708 = vadd.f32 %v3054, %v3633
      %v3709 = vadd.f32 %v3055, %v3636
      %v3710 = vadd.f32 %v3056, %v3638
      %v3711 = vadd.f32 %v3057, %v3641
      %v3712 = vadd.f32 %v3058, %v3643
      %v3713 = vadd.f32 %v3059, %v3646
      %v3714 = vadd.f32 %v3060, %v3648
      %v3715 = vadd.f32 %v3061, %v3651
      %v3716 = vadd.f32 %v3062, %v3653
      %v3717 = vadd.f32 %v3063, %v3656
      %v3718 = vadd.f32 %v3064, %v3658
      %v3719 = vadd.f32 %v3065, %v3661
      %v3720 = vadd.f32 %v3066, %v3663
      %v3721 = vadd.f32 %v3067, %v3666
      %v3722 = vadd.f32 %v3068, %v3668
      %v3723 = vadd.f32 %v3069, %v3671
      %v3724 = vadd.f32 %v3070, %v3673
      %v3725 = vadd.f32 %v3071, %v3676
      %v3726 = vadd.f32 %v3072, %v3678
      %v3727 = vadd.f32 %v3073, %v3681
      %v3728 = vadd.f32 %v3074, %v3683
      %v3729 = vadd.f32 %v3075, %v3686
      %v3730 = vadd.f32 %v3076, %v3688
      %v3731 = vadd.f32 %v3077, %v3691
      %v3732 = vadd.f32 %v3078, %v3693
      %v3733 = vadd.f32 %v3079, %v3696
      %v3734 = vadd.f32 %v3080, %v3698
      %v3735 = vadd.f32 %v3081, %v3701
      %v3736 = vadd.f32 %v3082, %v3703
      %v3737 = vld [vmem:[%s2796] sm:$0xe]
      %v3738 = vld [vmem:[%s2796 + $0xc] sm:$0xe]
      %v3739 = vld [vmem:[%s2796 + $0x18] sm:$0xe]
      %v3740 = vld [vmem:[%s2796 + $0x24] sm:$0xe]
      %v3741 = vld [vmem:[%s2796 + $0x30] sm:$0xe]
      %v3742 = vld [vmem:[%s2796 + $0x3c] sm:$0xe]
      %v3743 = vld [vmem:[%s2796 + $0x48] sm:$0xe]
      %v3744 = vld [vmem:[%s2796 + $0x54] sm:$0xe]
      %v3745 = vld [vmem:[%s2796 + $0x60] sm:$0xe]
      %v3746 = vld [vmem:[%s2796 + $0x6c] sm:$0xe]
      %v3747 = vld [vmem:[%s2796 + $0x78] sm:$0xe]
      %v3748 = vld [vmem:[%s2796 + $0x84] sm:$0xe]
      %v3749 = vld [vmem:[%s2796 + $0x90] sm:$0xe]
      %v3750 = vld [vmem:[%s2796 + $0x9c] sm:$0xe]
      %v3751 = vld [vmem:[%s2796 + $0xa8] sm:$0xe]
      %v3752 = vld [vmem:[%s2796 + $0xb4] sm:$0xe]
      %v3801 = vrot.slane %v3737, 5
      %v3802 = vrot.slane %v3801, 4
      %v3803 = vrot.slane %v3084, 5
      %v3804 = vsel %vm1122, %v3802, %v3803
      %v3805 = vrot.slane %v3803, 4
      %v3806 = vrot.slane %v3085, 5
      %v3807 = vsel %vm1122, %v3805, %v3806
      %v3808 = vrot.slane %v3738, 5
      %v3809 = vrot.slane %v3808, 4
      %v3810 = vrot.slane %v3087, 5
      %v3811 = vsel %vm1122, %v3809, %v3810
      %v3812 = vrot.slane %v3810, 4
      %v3813 = vrot.slane %v3088, 5
      %v3814 = vsel %vm1122, %v3812, %v3813
      %v3815 = vrot.slane %v3739, 5
      %v3816 = vrot.slane %v3815, 4
      %v3817 = vrot.slane %v3090, 5
      %v3818 = vsel %vm1122, %v3816, %v3817
      %v3819 = vrot.slane %v3817, 4
      %v3820 = vrot.slane %v3091, 5
      %v3821 = vsel %vm1122, %v3819, %v3820
      %v3822 = vrot.slane %v3740, 5
      %v3823 = vrot.slane %v3822, 4
      %v3824 = vrot.slane %v3093, 5
      %v3825 = vsel %vm1122, %v3823, %v3824
      %v3826 = vrot.slane %v3824, 4
      %v3827 = vrot.slane %v3094, 5
      %v3828 = vsel %vm1122, %v3826, %v3827
      %v3829 = vrot.slane %v3741, 5
      %v3830 = vrot.slane %v3829, 4
      %v3831 = vrot.slane %v3096, 5
      %v3832 = vsel %vm1122, %v3830, %v3831
      %v3833 = vrot.slane %v3831, 4
      %v3834 = vrot.slane %v3097, 5
      %v3835 = vsel %vm1122, %v3833, %v3834
      %v3836 = vrot.slane %v3742, 5
      %v3837 = vrot.slane %v3836, 4
      %v3838 = vrot.slane %v3099, 5
      %v3839 = vsel %vm1122, %v3837, %v3838
      %v3840 = vrot.slane %v3838, 4
      %v3841 = vrot.slane %v3100, 5
      %v3842 = vsel %vm1122, %v3840, %v3841
      %v3843 = vrot.slane %v3743, 5
      %v3844 = vrot.slane %v3843, 4
      %v3845 = vrot.slane %v3102, 5
      %v3846 = vsel %vm1122, %v3844, %v3845
      %v3847 = vrot.slane %v3845, 4
      %v3848 = vrot.slane %v3103, 5
      %v3849 = vsel %vm1122, %v3847, %v3848
      %v3850 = vrot.slane %v3744, 5
      %v3851 = vrot.slane %v3850, 4
      %v3852 = vrot.slane %v3105, 5
      %v3853 = vsel %vm1122, %v3851, %v3852
      %v3854 = vrot.slane %v3852, 4
      %v3855 = vrot.slane %v3106, 5
      %v3856 = vsel %vm1122, %v3854, %v3855
      %v3857 = vrot.slane %v3745, 5
      %v3858 = vrot.slane %v3857, 4
      %v3859 = vrot.slane %v3108, 5
      %v3860 = vsel %vm1122, %v3858, %v3859
      %v3861 = vrot.slane %v3859, 4
      %v3862 = vrot.slane %v3109, 5
      %v3863 = vsel %vm1122, %v3861, %v3862
      %v3864 = vrot.slane %v3746, 5
      %v3865 = vrot.slane %v3864, 4
      %v3866 = vrot.slane %v3111, 5
      %v3867 = vsel %vm1122, %v3865, %v3866
      %v3868 = vrot.slane %v3866, 4
      %v3869 = vrot.slane %v3112, 5
      %v3870 = vsel %vm1122, %v3868, %v3869
      %v3871 = vrot.slane %v3747, 5
      %v3872 = vrot.slane %v3871, 4
      %v3873 = vrot.slane %v3114, 5
      %v3874 = vsel %vm1122, %v3872, %v3873
      %v3875 = vrot.slane %v3873, 4
      %v3876 = vrot.slane %v3115, 5
      %v3877 = vsel %vm1122, %v3875, %v3876
      %v3878 = vrot.slane %v3748, 5
      %v3879 = vrot.slane %v3878, 4
      %v3880 = vrot.slane %v3117, 5
      %v3881 = vsel %vm1122, %v3879, %v3880
      %v3882 = vrot.slane %v3880, 4
      %v3883 = vrot.slane %v3118, 5
      %v3884 = vsel %vm1122, %v3882, %v3883
      %v3885 = vrot.slane %v3749, 5
      %v3886 = vrot.slane %v3885, 4
      %v3887 = vrot.slane %v3120, 5
      %v3888 = vsel %vm1122, %v3886, %v3887
      %v3889 = vrot.slane %v3887, 4
      %v3890 = vrot.slane %v3121, 5
      %v3891 = vsel %vm1122, %v3889, %v3890
      %v3892 = vrot.slane %v3750, 5
      %v3893 = vrot.slane %v3892, 4
      %v3894 = vrot.slane %v3123, 5
      %v3895 = vsel %vm1122, %v3893, %v3894
      %v3896 = vrot.slane %v3894, 4
      %v3897 = vrot.slane %v3124, 5
      %v3898 = vsel %vm1122, %v3896, %v3897
      %v3899 = vrot.slane %v3751, 5
      %v3900 = vrot.slane %v3899, 4
      %v3901 = vrot.slane %v3126, 5
      %v3902 = vsel %vm1122, %v3900, %v3901
      %v3903 = vrot.slane %v3901, 4
      %v3904 = vrot.slane %v3127, 5
      %v3905 = vsel %vm1122, %v3903, %v3904
      %v3906 = vrot.slane %v3752, 5
      %v3907 = vrot.slane %v3906, 4
      %v3908 = vrot.slane %v3129, 5
      %v3909 = vsel %vm1122, %v3907, %v3908
      %v3910 = vrot.slane %v3908, 4
      %v3911 = vrot.slane %v3130, 5
      %v3912 = vsel %vm1122, %v3910, %v3911
      %s3913 = scalar_lea.vmem %s210, 32
      %v3914 = vld [vmem:[%s3913] sm:$0xf]
      %v3915 = vunpack.c.l.b16 %v3804
      %v3916 = vunpack.c.l.b16 %v3807
      %v3917 = vunpack.c.l.b16 %v3811
      %v3918 = vunpack.c.l.b16 %v3814
      %v3919 = vunpack.c.l.b16 %v3818
      %v3920 = vunpack.c.l.b16 %v3821
      %v3921 = vunpack.c.l.b16 %v3825
      %v3922 = vunpack.c.l.b16 %v3828
      %v3923 = vunpack.c.l.b16 %v3832
      %v3924 = vunpack.c.l.b16 %v3835
      %v3925 = vunpack.c.l.b16 %v3839
      %v3926 = vunpack.c.l.b16 %v3842
      %v3927 = vunpack.c.l.b16 %v3846
      %v3928 = vunpack.c.l.b16 %v3849
      %v3929 = vunpack.c.l.b16 %v3853
      %v3930 = vunpack.c.l.b16 %v3856
      %v3931 = vunpack.c.l.b16 %v3860
      %v3932 = vunpack.c.l.b16 %v3863
      %v3933 = vunpack.c.l.b16 %v3867
      %v3934 = vunpack.c.l.b16 %v3870
      %v3935 = vunpack.c.l.b16 %v3874
      %v3936 = vunpack.c.l.b16 %v3877
      %v3937 = vunpack.c.l.b16 %v3881
      %v3938 = vunpack.c.l.b16 %v3884
      %v3939 = vunpack.c.l.b16 %v3888
      %v3940 = vunpack.c.l.b16 %v3891
      %v3941 = vunpack.c.l.b16 %v3895
      %v3942 = vunpack.c.l.b16 %v3898
      %v3943 = vunpack.c.l.b16 %v3902
      %v3944 = vunpack.c.l.b16 %v3905
      %v3945 = vunpack.c.l.b16 %v3909
      %v3946 = vunpack.c.l.b16 %v3912
      %v3947 = vpack.c.b16 %v3916, %v3915
      %v3948 = vpack.c.b16 %v3918, %v3917
      %v3949 = vpack.c.b16 %v3920, %v3919
      %v3950 = vpack.c.b16 %v3922, %v3921
      %v3951 = vpack.c.b16 %v3924, %v3923
      %v3952 = vpack.c.b16 %v3926, %v3925
      %v3953 = vpack.c.b16 %v3928, %v3927
      %v3954 = vpack.c.b16 %v3930, %v3929
      %v3955 = vpack.c.b16 %v3932, %v3931
      %v3956 = vpack.c.b16 %v3934, %v3933
      %v3957 = vpack.c.b16 %v3936, %v3935
      %v3958 = vpack.c.b16 %v3938, %v3937
      %v3959 = vpack.c.b16 %v3940, %v3939
      %v3960 = vpack.c.b16 %v3942, %v3941
      %v3961 = vpack.c.b16 %v3944, %v3943
      %v3962 = vpack.c.b16 %v3946, %v3945
      %v3964 = vsel %vm710, %v3947, 0
      %v3967 = vsel %vm710, %v3948, 0
      %v3970 = vsel %vm710, %v3949, 0
      %v3973 = vsel %vm710, %v3950, 0
      %v3976 = vsel %vm710, %v3951, 0
      %v3979 = vsel %vm710, %v3952, 0
      %v3982 = vsel %vm710, %v3953, 0
      %v3985 = vsel %vm710, %v3954, 0
      %v3988 = vsel %vm710, %v3955, 0
      %v3991 = vsel %vm710, %v3956, 0
      %v3994 = vsel %vm710, %v3957, 0
      %v3997 = vsel %vm710, %v3958, 0
      %v4000 = vsel %vm710, %v3959, 0
      %v4003 = vsel %vm710, %v3960, 0
      %v4006 = vsel %vm710, %v3961, 0
      %v4009 = vsel %vm710, %v3962, 0
      %v4012 = vsel %vm759, %v3914, 0
      %4014 = vmatpush.bf16.msra.mxu0 0
      %4015 = vmatpush.bf16.msra.mxu0 0
      %4016 = vmatpush.bf16.msra.mxu0 0
      %4017 = vmatpush.bf16.msra.mxu0 0
      %4018 = vmatpush.bf16.msra.mxu0 0
      %4019 = vmatpush.bf16.msra.mxu0 0
      %4020 = vmatpush.bf16.msra.mxu0 0
      %4021 = vmatpush.bf16.msra.mxu0 %v4012
      %4022 = vmatmul.bf16.gmra.mxu0 %v3964
      %v4023 = vpop.f32.mrf.mxu0
      %v4024 = vadd.f32 0.0, %v4023
      %v4025 = vpop.f32.mrf.mxu0
      %v4026 = vadd.f32 0.0, %v4025
      %4027 = vmatmul.bf16.gmra.mxu0 %v3967
      %v4028 = vpop.f32.mrf.mxu0
      %v4029 = vadd.f32 0.0, %v4028
      %v4030 = vpop.f32.mrf.mxu0
      %v4031 = vadd.f32 0.0, %v4030
      %4032 = vmatmul.bf16.gmra.mxu0 %v3970
      %v4033 = vpop.f32.mrf.mxu0
      %v4034 = vadd.f32 0.0, %v4033
      %v4035 = vpop.f32.mrf.mxu0
      %v4036 = vadd.f32 0.0, %v4035
      %4037 = vmatmul.bf16.gmra.mxu0 %v3973
      %v4038 = vpop.f32.mrf.mxu0
      %v4039 = vadd.f32 0.0, %v4038
      %v4040 = vpop.f32.mrf.mxu0
      %v4041 = vadd.f32 0.0, %v4040
      %4042 = vmatmul.bf16.gmra.mxu0 %v3976
      %v4043 = vpop.f32.mrf.mxu0
      %v4044 = vadd.f32 0.0, %v4043
      %v4045 = vpop.f32.mrf.mxu0
      %v4046 = vadd.f32 0.0, %v4045
      %4047 = vmatmul.bf16.gmra.mxu0 %v3979
      %v4048 = vpop.f32.mrf.mxu0
      %v4049 = vadd.f32 0.0, %v4048
      %v4050 = vpop.f32.mrf.mxu0
      %v4051 = vadd.f32 0.0, %v4050
      %4052 = vmatmul.bf16.gmra.mxu0 %v3982
      %v4053 = vpop.f32.mrf.mxu0
      %v4054 = vadd.f32 0.0, %v4053
      %v4055 = vpop.f32.mrf.mxu0
      %v4056 = vadd.f32 0.0, %v4055
      %4057 = vmatmul.bf16.gmra.mxu0 %v3985
      %v4058 = vpop.f32.mrf.mxu0
      %v4059 = vadd.f32 0.0, %v4058
      %v4060 = vpop.f32.mrf.mxu0
      %v4061 = vadd.f32 0.0, %v4060
      %4062 = vmatmul.bf16.gmra.mxu0 %v3988
      %v4063 = vpop.f32.mrf.mxu0
      %v4064 = vadd.f32 0.0, %v4063
      %v4065 = vpop.f32.mrf.mxu0
      %v4066 = vadd.f32 0.0, %v4065
      %4067 = vmatmul.bf16.gmra.mxu0 %v3991
      %v4068 = vpop.f32.mrf.mxu0
      %v4069 = vadd.f32 0.0, %v4068
      %v4070 = vpop.f32.mrf.mxu0
      %v4071 = vadd.f32 0.0, %v4070
      %4072 = vmatmul.bf16.gmra.mxu0 %v3994
      %v4073 = vpop.f32.mrf.mxu0
      %v4074 = vadd.f32 0.0, %v4073
      %v4075 = vpop.f32.mrf.mxu0
      %v4076 = vadd.f32 0.0, %v4075
      %4077 = vmatmul.bf16.gmra.mxu0 %v3997
      %v4078 = vpop.f32.mrf.mxu0
      %v4079 = vadd.f32 0.0, %v4078
      %v4080 = vpop.f32.mrf.mxu0
      %v4081 = vadd.f32 0.0, %v4080
      %4082 = vmatmul.bf16.gmra.mxu0 %v4000
      %v4083 = vpop.f32.mrf.mxu0
      %v4084 = vadd.f32 0.0, %v4083
      %v4085 = vpop.f32.mrf.mxu0
      %v4086 = vadd.f32 0.0, %v4085
      %4087 = vmatmul.bf16.gmra.mxu0 %v4003
      %v4088 = vpop.f32.mrf.mxu0
      %v4089 = vadd.f32 0.0, %v4088
      %v4090 = vpop.f32.mrf.mxu0
      %v4091 = vadd.f32 0.0, %v4090
      %4092 = vmatmul.bf16.gmra.mxu0 %v4006
      %v4093 = vpop.f32.mrf.mxu0
      %v4094 = vadd.f32 0.0, %v4093
      %v4095 = vpop.f32.mrf.mxu0
      %v4096 = vadd.f32 0.0, %v4095
      %4097 = vmatmul.bf16.gmra.mxu0 %v4009
      %v4098 = vpop.f32.mrf.mxu0
      %v4099 = vadd.f32 0.0, %v4098
      %v4100 = vpop.f32.mrf.mxu0
      %v4101 = vadd.f32 0.0, %v4100
      %4102 = vdwg.mxu0
      %v4103 = vadd.f32 %v3705, %v4024
      %v4104 = vadd.f32 %v3706, %v4026
      %v4105 = vadd.f32 %v3707, %v4029
      %v4106 = vadd.f32 %v3708, %v4031
      %v4107 = vadd.f32 %v3709, %v4034
      %v4108 = vadd.f32 %v3710, %v4036
      %v4109 = vadd.f32 %v3711, %v4039
      %v4110 = vadd.f32 %v3712, %v4041
      %v4111 = vadd.f32 %v3713, %v4044
      %v4112 = vadd.f32 %v3714, %v4046
      %v4113 = vadd.f32 %v3715, %v4049
      %v4114 = vadd.f32 %v3716, %v4051
      %v4115 = vadd.f32 %v3717, %v4054
      %v4116 = vadd.f32 %v3718, %v4056
      %v4117 = vadd.f32 %v3719, %v4059
      %v4118 = vadd.f32 %v3720, %v4061
      %v4119 = vadd.f32 %v3721, %v4064
      %v4120 = vadd.f32 %v3722, %v4066
      %v4121 = vadd.f32 %v3723, %v4069
      %v4122 = vadd.f32 %v3724, %v4071
      %v4123 = vadd.f32 %v3725, %v4074
      %v4124 = vadd.f32 %v3726, %v4076
      %v4125 = vadd.f32 %v3727, %v4079
      %v4126 = vadd.f32 %v3728, %v4081
      %v4127 = vadd.f32 %v3729, %v4084
      %v4128 = vadd.f32 %v3730, %v4086
      %v4129 = vadd.f32 %v3731, %v4089
      %v4130 = vadd.f32 %v3732, %v4091
      %v4131 = vadd.f32 %v3733, %v4094
      %v4132 = vadd.f32 %v3734, %v4096
      %v4133 = vadd.f32 %v3735, %v4099
      %v4134 = vadd.f32 %v3736, %v4101
      %v4135 = vld [vmem:[%s213] sm:$0x1]
      %v4137 = vperm.slane %v4135, 0
      %v4139 = vadd.f32 %v4103, %v4137
      %v4140 = vadd.f32 %v4104, %v4137
      %v4141 = vadd.f32 %v4105, %v4137
      %v4142 = vadd.f32 %v4106, %v4137
      %v4143 = vadd.f32 %v4107, %v4137
      %v4144 = vadd.f32 %v4108, %v4137
      %v4145 = vadd.f32 %v4109, %v4137
      %v4146 = vadd.f32 %v4110, %v4137
      %v4147 = vadd.f32 %v4111, %v4137
      %v4148 = vadd.f32 %v4112, %v4137
      %v4149 = vadd.f32 %v4113, %v4137
      %v4150 = vadd.f32 %v4114, %v4137
      %v4151 = vadd.f32 %v4115, %v4137
      %v4152 = vadd.f32 %v4116, %v4137
      %v4153 = vadd.f32 %v4117, %v4137
      %v4154 = vadd.f32 %v4118, %v4137
      %v4155 = vadd.f32 %v4119, %v4137
      %v4156 = vadd.f32 %v4120, %v4137
      %v4157 = vadd.f32 %v4121, %v4137
      %v4158 = vadd.f32 %v4122, %v4137
      %v4159 = vadd.f32 %v4123, %v4137
      %v4160 = vadd.f32 %v4124, %v4137
      %v4161 = vadd.f32 %v4125, %v4137
      %v4162 = vadd.f32 %v4126, %v4137
      %v4163 = vadd.f32 %v4127, %v4137
      %v4164 = vadd.f32 %v4128, %v4137
      %v4165 = vadd.f32 %v4129, %v4137
      %v4166 = vadd.f32 %v4130, %v4137
      %v4167 = vadd.f32 %v4131, %v4137
      %v4168 = vadd.f32 %v4132, %v4137
      %v4169 = vadd.f32 %v4133, %v4137
      %v4170 = vadd.f32 %v4134, %v4137
      %v4171 = vmax.f32 %v4139, 0.0
      %v4172 = vmax.f32 %v4140, 0.0
      %v4173 = vmax.f32 %v4141, 0.0
      %v4174 = vmax.f32 %v4142, 0.0
      %v4175 = vmax.f32 %v4143, 0.0
      %v4176 = vmax.f32 %v4144, 0.0
      %v4177 = vmax.f32 %v4145, 0.0
      %v4178 = vmax.f32 %v4146, 0.0
      %v4179 = vmax.f32 %v4147, 0.0
      %v4180 = vmax.f32 %v4148, 0.0
      %v4181 = vmax.f32 %v4149, 0.0
      %v4182 = vmax.f32 %v4150, 0.0
      %v4183 = vmax.f32 %v4151, 0.0
      %v4184 = vmax.f32 %v4152, 0.0
      %v4185 = vmax.f32 %v4153, 0.0
      %v4186 = vmax.f32 %v4154, 0.0
      %v4187 = vmax.f32 %v4155, 0.0
      %v4188 = vmax.f32 %v4156, 0.0
      %v4189 = vmax.f32 %v4157, 0.0
      %v4190 = vmax.f32 %v4158, 0.0
      %v4191 = vmax.f32 %v4159, 0.0
      %v4192 = vmax.f32 %v4160, 0.0
      %v4193 = vmax.f32 %v4161, 0.0
      %v4194 = vmax.f32 %v4162, 0.0
      %v4195 = vmax.f32 %v4163, 0.0
      %v4196 = vmax.f32 %v4164, 0.0
      %v4197 = vmax.f32 %v4165, 0.0
      %v4198 = vmax.f32 %v4166, 0.0
      %v4199 = vmax.f32 %v4167, 0.0
      %v4200 = vmax.f32 %v4168, 0.0
      %v4201 = vmax.f32 %v4169, 0.0
      %v4202 = vmax.f32 %v4170, 0.0
      %v4203 = vpack.c.bf16 %v4171, %v4171
      %v4204 = vpack.c.bf16 %v4172, %v4172
      %v4205 = vpack.c.bf16 %v4173, %v4173
      %v4206 = vpack.c.bf16 %v4174, %v4174
      %v4207 = vpack.c.bf16 %v4175, %v4175
      %v4208 = vpack.c.bf16 %v4176, %v4176
      %v4209 = vpack.c.bf16 %v4177, %v4177
      %v4210 = vpack.c.bf16 %v4178, %v4178
      %v4211 = vpack.c.bf16 %v4179, %v4179
      %v4212 = vpack.c.bf16 %v4180, %v4180
      %v4213 = vpack.c.bf16 %v4181, %v4181
      %v4214 = vpack.c.bf16 %v4182, %v4182
      %v4215 = vpack.c.bf16 %v4183, %v4183
      %v4216 = vpack.c.bf16 %v4184, %v4184
      %v4217 = vpack.c.bf16 %v4185, %v4185
      %v4218 = vpack.c.bf16 %v4186, %v4186
      %v4219 = vpack.c.bf16 %v4187, %v4187
      %v4220 = vpack.c.bf16 %v4188, %v4188
      %v4221 = vpack.c.bf16 %v4189, %v4189
      %v4222 = vpack.c.bf16 %v4190, %v4190
      %v4223 = vpack.c.bf16 %v4191, %v4191
      %v4224 = vpack.c.bf16 %v4192, %v4192
      %v4225 = vpack.c.bf16 %v4193, %v4193
      %v4226 = vpack.c.bf16 %v4194, %v4194
      %v4227 = vpack.c.bf16 %v4195, %v4195
      %v4228 = vpack.c.bf16 %v4196, %v4196
      %v4229 = vpack.c.bf16 %v4197, %v4197
      %v4230 = vpack.c.bf16 %v4198, %v4198
      %v4231 = vpack.c.bf16 %v4199, %v4199
      %v4232 = vpack.c.bf16 %v4200, %v4200
      %v4233 = vpack.c.bf16 %v4201, %v4201
      %v4234 = vpack.c.bf16 %v4202, %v4202
      %vm4235 = vcmask 60416
      %4236 = vst.msk [vmem:[%s221] sm:$0xf] %vm4235, %v4203
      %4237 = vst.msk [vmem:[%s221 + $0x4] sm:$0xf] %vm4235, %v4204
      %4238 = vst.msk [vmem:[%s221 + $0x8] sm:$0xf] %vm4235, %v4205
      %4239 = vst.msk [vmem:[%s221 + $0xc] sm:$0xf] %vm4235, %v4206
      %4240 = vst.msk [vmem:[%s221 + $0x10] sm:$0xf] %vm4235, %v4207
      %4241 = vst.msk [vmem:[%s221 + $0x14] sm:$0xf] %vm4235, %v4208
      %4242 = vst.msk [vmem:[%s221 + $0x18] sm:$0xf] %vm4235, %v4209
      %4243 = vst.msk [vmem:[%s221 + $0x1c] sm:$0xf] %vm4235, %v4210
      %4244 = vst.msk [vmem:[%s221 + $0x20] sm:$0xf] %vm4235, %v4211
      %4245 = vst.msk [vmem:[%s221 + $0x24] sm:$0xf] %vm4235, %v4212
      %4246 = vst.msk [vmem:[%s221 + $0x28] sm:$0xf] %vm4235, %v4213
      %4247 = vst.msk [vmem:[%s221 + $0x2c] sm:$0xf] %vm4235, %v4214
      %4248 = vst.msk [vmem:[%s221 + $0x30] sm:$0xf] %vm4235, %v4215
      %4249 = vst.msk [vmem:[%s221 + $0x34] sm:$0xf] %vm4235, %v4216
      %4250 = vst.msk [vmem:[%s221 + $0x38] sm:$0xf] %vm4235, %v4217
      %4251 = vst.msk [vmem:[%s221 + $0x3c] sm:$0xf] %vm4235, %v4218
      %4252 = vst.msk [vmem:[%s221 + $0x40] sm:$0xf] %vm4235, %v4219
      %4253 = vst.msk [vmem:[%s221 + $0x44] sm:$0xf] %vm4235, %v4220
      %4254 = vst.msk [vmem:[%s221 + $0x48] sm:$0xf] %vm4235, %v4221
      %4255 = vst.msk [vmem:[%s221 + $0x4c] sm:$0xf] %vm4235, %v4222
      %4256 = vst.msk [vmem:[%s221 + $0x50] sm:$0xf] %vm4235, %v4223
      %4257 = vst.msk [vmem:[%s221 + $0x54] sm:$0xf] %vm4235, %v4224
      %4258 = vst.msk [vmem:[%s221 + $0x58] sm:$0xf] %vm4235, %v4225
      %4259 = vst.msk [vmem:[%s221 + $0x5c] sm:$0xf] %vm4235, %v4226
      %4260 = vst.msk [vmem:[%s221 + $0x60] sm:$0xf] %vm4235, %v4227
      %4261 = vst.msk [vmem:[%s221 + $0x64] sm:$0xf] %vm4235, %v4228
      %4262 = vst.msk [vmem:[%s221 + $0x68] sm:$0xf] %vm4235, %v4229
      %4263 = vst.msk [vmem:[%s221 + $0x6c] sm:$0xf] %vm4235, %v4230
      %4264 = vst.msk [vmem:[%s221 + $0x70] sm:$0xf] %vm4235, %v4231
      %4265 = vst.msk [vmem:[%s221 + $0x74] sm:$0xf] %vm4235, %v4232
      %4266 = vst.msk [vmem:[%s221 + $0x78] sm:$0xf] %vm4235, %v4233
      %4267 = vst.msk [vmem:[%s221 + $0x7c] sm:$0xf] %vm4235, %v4234
      %s4268 = smul.u32 32, %s18
      %p4269 = scmp.lt.s32.totalorder %s4268, 63
      %s4270 = scalar_select %p4269, %s4268, 63
      %p4271 = scmp.lt.s32.totalorder %s19, 0
      %s4272 = scalar_select %p4271, %s19, 0
      %s4273 = sadd.s32 %s4272, %s4270
      %s4274 = smul.addr %s4273, 4
      %s4275 = scalar_lea.vmem %s3, %s4274
      // Predicated region
      $region33: #{_lambda_.4} parent=31 // pred_check
        %p4276 = pneg %p124
      $region34: #{_lambda_.4} parent=31 // pred_check_branch
        %4278 = sbr.rel (%p4276) target = $region36
      $region35: #{_lambda_.4} parent=31 // pred_region
        %s4279 = smul.u32 32, %s18
      $region36: #{_lambda_.4} parent=31 // pred_fallthru
        _
    $region32: #{_lambda_.4} parent=5 // pred_fallthru
      _
    %p4280 = scmp.le.s32.totalorder 2, %s9
    // Predicated region
    $region37: #{_lambda_.4} parent=5 // pred_check
      %p4281 = pneg %p4280
    $region38: #{_lambda_.4} parent=5 // pred_check_branch
      %4283 = sbr.rel (%p4281) target = $region40
    $region39: #{_lambda_.4} parent=5 // pred_region
      %s4284 = ssub.s32 %s9, 2
      // Predicated region
      $region41: #{_lambda_.4} parent=39 // pred_check
        %p4285 = pneg %p130
      $region42: #{_lambda_.4} parent=39 // pred_check_branch
        %4287 = sbr.rel (%p4285) target = $region44
      $region43: #{_lambda_.4} parent=39 // pred_region
        %s4288 = smul.u32 32, %s20
        %p4289 = scmp.lt.s32.totalorder %s4288, 63
        %s4290 = scalar_select %p4289, %s4288, 63
        %p4291 = scmp.lt.s32.totalorder %s21, 0
        %s4292 = scalar_select %p4291, %s21, 0
        %s4293 = sadd.s32 %s4292, %s4290
        %s4294 = smul.addr %s4293, 4
        %s4295 = scalar_lea.vmem %s3, %s4294
      $region44: #{_lambda_.4} parent=39 // pred_fallthru
        _
    $region40: #{_lambda_.4} parent=5 // pred_fallthru
      _
  $region6: #{_lambda_.4} parent=0 // loop_footer
    %s13 = sadd.s32 1, %s9
  $region7: #{_lambda_.4} parent=0 // loop_footer_branch
    %8 = sbr.rel target = $region3
  $region8: #{_lambda_.4} parent=0 // loop_exit
    _

</llo_original>
